<compile_context>
chip_gen: v7x
topology: tpu7x:2x2x1
jax: 0.10.0
libtpu: 0.0.40
codegen_flags: <defaults>
</compile_context>

<pallas_src>
import jax
import jax.numpy as jnp
from jax import lax
from jax.experimental import pallas as pl
from jax.experimental.pallas import tpu as pltpu


def _make_kernel(Cin, C1, C2, Cout, H, W):
    """Fused (conv3x3 + folded-BN bias + relu) x3 kernel for static shapes."""
    HW = H * W

    def shift_flat(a, delta):
        # result[:, i] = a[:, i + delta], zero fill out of range; delta static.
        if delta == 0:
            return a
        rows = a.shape[0]
        pad = jnp.zeros((rows, abs(delta)), a.dtype)
        if delta > 0:
            return jnp.concatenate([a[:, delta:], pad], axis=1)
        return jnp.concatenate([pad, a[:, :HW + delta]], axis=1)

    def kernel(x_ref, w1_ref, b1_ref, w2_ref, b2_ref, w3_ref, b3_ref, o_ref):
        # Within-row (dw) halo masks, built once from iota and hoisted out of
        # every loop.  The vertical (dh) halo is handled by the zero fill of
        # shift_flat automatically.
        w_idx = lax.broadcasted_iota(jnp.int32, (1, HW), 1) % W
        ok = {
            -1: (w_idx > 0).astype(jnp.float32),        # needs column w-1
            0: None,
            1: (w_idx < (W - 1)).astype(jnp.float32),   # needs column w+1
        }

        def conv_bn_relu(act, w_ref, b_ref, cin, cout):
            # act: (cin, HW) f32 value -> returns (cout, HW) f32 value.
            wmat = w_ref[...]            # (cout, cin*9)  BN-folded weights
            bias = b_ref[...]            # (cout, 1)      BN-folded bias
            acc = jnp.zeros((cout, HW), jnp.float32)
            for kh in range(3):
                for kw in range(3):
                    dh, dw = kh - 1, kw - 1
                    shifted = shift_flat(act, dh * W + dw)     # (cin, HW)
                    if ok[dw] is not None:
                        shifted = shifted * ok[dw]
                    for ci in range(cin):
                        idx = ci * 9 + kh * 3 + kw
                        wcol = wmat[:, idx:idx + 1]            # (cout, 1)
                        acc = acc + shifted[ci:ci + 1, :] * wcol
            return jnp.maximum(acc + bias, 0.0)

        act = x_ref[0].astype(jnp.float32)                     # (Cin, HW)
        act = conv_bn_relu(act, w1_ref, b1_ref, Cin, C1)
        act = conv_bn_relu(act, w2_ref, b2_ref, C1, C2)
        act = conv_bn_relu(act, w3_ref, b3_ref, C2, Cout)
        o_ref[0] = act.astype(o_ref.dtype)                     # one lane-dense store

    return kernel


def _fold_bn_into_conv(w, gamma, beta, mean, var, eps):
    """Fold eval-mode BatchNorm into the (bias-free) conv that precedes it."""
    scale = gamma / jnp.sqrt(var + eps)                        # (cout,)
    cout, cin = w.shape[0], w.shape[1]
    w_f = (w * scale[:, None, None, None]).astype(jnp.float32).reshape(cout, cin * 9)
    b_f = (beta - mean * scale).astype(jnp.float32).reshape(cout, 1)
    return w_f, b_f


def feature_extractor_forward(x, layer_params, eps=1e-5):
    """x: (B, Cin, H, W) float32.
    layer_params: 3 tuples of (w, gamma, beta, mean, var), torch layouts:
      w: (Cout, Cin, 3, 3); BN params: (Cout,).
    Returns (B, Cout_last, H, W)."""
    B, Cin, H, W = x.shape
    HW = H * W
    (w1, g1, be1, m1, v1), (w2, g2, be2, m2, v2), (w3, g3, be3, m3, v3) = layer_params
    C1, C2, Cout = w1.shape[0], w2.shape[0], w3.shape[0]

    w1f, b1f = _fold_bn_into_conv(w1, g1, be1, m1, v1, eps)
    w2f, b2f = _fold_bn_into_conv(w2, g2, be2, m2, v2, eps)
    w3f, b3f = _fold_bn_into_conv(w3, g3, be3, m3, v3, eps)

    x_flat = x.reshape(B, Cin, HW)    # lane-dense: H*W on the 128-lane axis

    kernel = _make_kernel(Cin, C1, C2, Cout, H, W)

    def full_spec(shape):
        return pl.BlockSpec(shape, lambda b: (0,) * len(shape))

    out = pl.pallas_call(
        kernel,
        out_shape=jax.ShapeDtypeStruct((B, Cout, HW), x.dtype),
        grid=(B,),
        in_specs=[
            pl.BlockSpec((1, Cin, HW), lambda b: (b, 0, 0)),
            full_spec(w1f.shape), full_spec(b1f.shape),
            full_spec(w2f.shape), full_spec(b2f.shape),
            full_spec(w3f.shape), full_spec(b3f.shape),
        ],
        out_specs=pl.BlockSpec((1, Cout, HW), lambda b: (b, 0, 0)),
        compiler_params=pltpu.CompilerParams(
            dimension_semantics=("parallel",)),
    )(x_flat, w1f, b1f, w2f, b2f, w3f, b3f)

    return out.reshape(B, Cout, H, W)


if __name__ == "__main__":
    # Small deterministic config consistent with the module defaults:
    # in_channels=1, out_channels=1 -> channel path 1 -> 4 -> 8 -> 1.
    B, in_channels, out_channels, H, W = 2, 1, 1, 16, 16
    C1, C2 = 4 * in_channels, 8 * in_channels
    eps = 1e-5  # BatchNorm2d default

    key = jax.random.PRNGKey(0)
    keys = jax.random.split(key, 4)

    x = jax.random.normal(keys[0], (B, in_channels, H, W), dtype=jnp.float32)

    def make_layer(k, cin, cout):
        kw_, kg, kb, km, kv = jax.random.split(k, 5)
        w = jax.random.normal(kw_, (cout, cin, 3, 3), dtype=jnp.float32) * 0.3
        gamma = 1.0 + 0.1 * jax.random.normal(kg, (cout,), dtype=jnp.float32)
        beta = 0.1 * jax.random.normal(kb, (cout,), dtype=jnp.float32)
        mean = 0.1 * jax.random.normal(km, (cout,), dtype=jnp.float32)
        var = jax.random.uniform(kv, (cout,), dtype=jnp.float32,
                                 minval=0.5, maxval=1.5)
        return (w, gamma, beta, mean, var)

    layers = [make_layer(keys[1], in_channels, C1),
              make_layer(keys[2], C1, C2),
              make_layer(keys[3], C2, out_channels)]

    out = feature_extractor_forward(x, layers, eps=eps)
    out = jax.block_until_ready(out)

    # Pure-JAX reference: (Conv2d 3x3 pad=1 no-bias -> BatchNorm(eval) -> ReLU) x3
    def ref_forward(xx, lyrs):
        h = xx
        for (w, gamma, beta, mean, var) in lyrs:
            h = lax.conv_general_dilated(
                h, w, window_strides=(1, 1), padding=((1, 1), (1, 1)),
                dimension_numbers=("NCHW", "OIHW", "NCHW"))
            scale = gamma / jnp.sqrt(var + eps)
            h = h * scale[None, :, None, None] \
                + (beta - mean * scale)[None, :, None, None]
            h = jnp.maximum(h, 0.0)
        return h

    ref = ref_forward(x, layers)
    assert out.shape == (B, out_channels, H, W)
    assert jnp.allclose(out, ref, atol=1e-4, rtol=1e-4), \
        float(jnp.max(jnp.abs(out - ref)))

    print("KERNEL_OK")
</pallas_src>

<mosaic_0001>
module attributes {stable_mosaic.version = 11 : i64} {
  func.func @kernel(%arg0: i32, %arg1: memref<1x1x256xf32, #tpu.memory_space<vmem>>, %arg2: memref<4x9xf32, #tpu.memory_space<vmem>>, %arg3: memref<4x1xf32, #tpu.memory_space<vmem>>, %arg4: memref<8x36xf32, #tpu.memory_space<vmem>>, %arg5: memref<8x1xf32, #tpu.memory_space<vmem>>, %arg6: memref<1x72xf32, #tpu.memory_space<vmem>>, %arg7: memref<1x1xf32, #tpu.memory_space<vmem>>, %arg8: memref<1x1x256xf32, #tpu.memory_space<vmem>>) attributes {dimension_semantics = [#tpu.dimension_semantics<parallel>], iteration_bounds = array<i64: 2>, scalar_prefetch = 0 : i64, scratch_operands = 0 : i64, tpu.core_type = #tpu.core_type<tc>, window_params = [{transform_indices = @transform_0, window_bounds = array<i64: 1, 1, 256>}, {pipeline_mode = #tpu.pipeline_mode<synchronous>, transform_indices = @transform_1, window_bounds = array<i64: 4, 9>}, {pipeline_mode = #tpu.pipeline_mode<synchronous>, transform_indices = @transform_2, window_bounds = array<i64: 4, 1>}, {pipeline_mode = #tpu.pipeline_mode<synchronous>, transform_indices = @transform_3, window_bounds = array<i64: 8, 36>}, {pipeline_mode = #tpu.pipeline_mode<synchronous>, transform_indices = @transform_4, window_bounds = array<i64: 8, 1>}, {pipeline_mode = #tpu.pipeline_mode<synchronous>, transform_indices = @transform_5, window_bounds = array<i64: 1, 72>}, {pipeline_mode = #tpu.pipeline_mode<synchronous>, transform_indices = @transform_6, window_bounds = array<i64: 1, 1>}, {transform_indices = @transform_7, window_bounds = array<i64: 1, 1, 256>}]} {
    %0 = tpu.iota {dimensions = array<i32: 1>} : vector<1x256xi32>
    %c16_i32 = arith.constant 16 : i32
    %c0_i32 = arith.constant 0 : i32
    %1 = arith.cmpi eq, %c16_i32, %c0_i32 : i32
    %c1_i32 = arith.constant 1 : i32
    %2 = arith.select %1, %c1_i32, %c16_i32 : i32
    %3 = vector.broadcast %2 : i32 to vector<1x256xi32>
    %4 = arith.remsi %0, %3 : vector<1x256xi32>
    %c0_i32_0 = arith.constant 0 : i32
    %5 = vector.broadcast %c0_i32_0 : i32 to vector<1x256xi32>
    %6 = arith.cmpi ne, %4, %5 : vector<1x256xi32>
    %c0_i32_1 = arith.constant 0 : i32
    %7 = vector.broadcast %c0_i32_1 : i32 to vector<1x256xi32>
    %8 = arith.cmpi slt, %4, %7 : vector<1x256xi32>
    %c0_i32_2 = arith.constant 0 : i32
    %9 = arith.cmpi slt, %2, %c0_i32_2 : i32
    %10 = vector.broadcast %9 : i1 to vector<1x256xi1>
    %11 = vector.broadcast %10 : vector<1x256xi1> to vector<1x256xi1>
    %12 = arith.xori %8, %11 : vector<1x256xi1>
    %13 = arith.andi %12, %6 : vector<1x256xi1>
    %14 = vector.broadcast %2 : i32 to vector<1x256xi32>
    %15 = arith.addi %4, %14 : vector<1x256xi32>
    %16 = arith.select %13, %15, %4 : vector<1x256xi1>, vector<1x256xi32>
    %c0_i32_3 = arith.constant 0 : i32
    %17 = vector.broadcast %c0_i32_3 : i32 to vector<1x256xi32>
    %18 = arith.cmpi sgt, %16, %17 : vector<1x256xi32>
    %19 = arith.extui %18 : vector<1x256xi1> to vector<1x256xi32>
    %20 = arith.sitofp %19 : vector<1x256xi32> to vector<1x256xf32>
    %c15_i32 = arith.constant 15 : i32
    %21 = vector.broadcast %c15_i32 : i32 to vector<1x256xi32>
    %22 = arith.cmpi slt, %16, %21 : vector<1x256xi32>
    %23 = arith.extui %22 : vector<1x256xi1> to vector<1x256xi32>
    %24 = arith.sitofp %23 : vector<1x256xi32> to vector<1x256xf32>
    %c0 = arith.constant 0 : index
    %c0_4 = arith.constant 0 : index
    %c0_5 = arith.constant 0 : index
    %25 = vector.load %arg1[%c0, %c0_4, %c0_5] : memref<1x1x256xf32, #tpu.memory_space<vmem>>, vector<1x1x256xf32>
    %26 = vector.shape_cast %25 : vector<1x1x256xf32> to vector<1x256xf32>
    %c0_6 = arith.constant 0 : index
    %c0_7 = arith.constant 0 : index
    %27 = vector.load %arg2[%c0_6, %c0_7] : memref<4x9xf32, #tpu.memory_space<vmem>>, vector<4x9xf32>
    %c0_8 = arith.constant 0 : index
    %c0_9 = arith.constant 0 : index
    %28 = vector.load %arg3[%c0_8, %c0_9] : memref<4x1xf32, #tpu.memory_space<vmem>>, vector<4x1xf32>
    %cst = arith.constant 0.000000e+00 : f32
    %29 = vector.broadcast %cst : f32 to vector<4x256xf32>
    %cst_10 = arith.constant 0.000000e+00 : f32
    %30 = vector.broadcast %cst_10 : f32 to vector<1x17xf32>
    %31 = vector.extract_strided_slice %26 {offsets = [0, 0], sizes = [1, 239], strides = [1, 1]} : vector<1x256xf32> to vector<1x239xf32>
    %32 = tpu.concatenate %30, %31 in 1 : vector<1x17xf32>, vector<1x239xf32> -> vector<1x256xf32>
    %33 = arith.mulf %32, %20 : vector<1x256xf32>
    %34 = vector.extract_strided_slice %27 {offsets = [0, 0], sizes = [4, 1], strides = [1, 1]} : vector<4x9xf32> to vector<4x1xf32>
    %35 = vector.broadcast %33 : vector<1x256xf32> to vector<4x256xf32>
    %36 = vector.broadcast %34 : vector<4x1xf32> to vector<4x256xf32>
    %37 = arith.mulf %35, %36 : vector<4x256xf32>
    %38 = arith.addf %29, %37 : vector<4x256xf32>
    %cst_11 = arith.constant 0.000000e+00 : f32
    %39 = vector.broadcast %cst_11 : f32 to vector<1x16xf32>
    %40 = vector.extract_strided_slice %26 {offsets = [0, 0], sizes = [1, 240], strides = [1, 1]} : vector<1x256xf32> to vector<1x240xf32>
    %41 = tpu.concatenate %39, %40 in 1 : vector<1x16xf32>, vector<1x240xf32> -> vector<1x256xf32>
    %42 = vector.extract_strided_slice %27 {offsets = [0, 1], sizes = [4, 1], strides = [1, 1]} : vector<4x9xf32> to vector<4x1xf32>
    %43 = vector.broadcast %41 : vector<1x256xf32> to vector<4x256xf32>
    %44 = vector.broadcast %42 : vector<4x1xf32> to vector<4x256xf32>
    %45 = arith.mulf %43, %44 : vector<4x256xf32>
    %46 = arith.addf %38, %45 : vector<4x256xf32>
    %cst_12 = arith.constant 0.000000e+00 : f32
    %47 = vector.broadcast %cst_12 : f32 to vector<1x15xf32>
    %48 = vector.extract_strided_slice %26 {offsets = [0, 0], sizes = [1, 241], strides = [1, 1]} : vector<1x256xf32> to vector<1x241xf32>
    %49 = tpu.concatenate %47, %48 in 1 : vector<1x15xf32>, vector<1x241xf32> -> vector<1x256xf32>
    %50 = arith.mulf %49, %24 : vector<1x256xf32>
    %51 = vector.extract_strided_slice %27 {offsets = [0, 2], sizes = [4, 1], strides = [1, 1]} : vector<4x9xf32> to vector<4x1xf32>
    %52 = vector.broadcast %50 : vector<1x256xf32> to vector<4x256xf32>
    %53 = vector.broadcast %51 : vector<4x1xf32> to vector<4x256xf32>
    %54 = arith.mulf %52, %53 : vector<4x256xf32>
    %55 = arith.addf %46, %54 : vector<4x256xf32>
    %cst_13 = arith.constant 0.000000e+00 : f32
    %56 = vector.broadcast %cst_13 : f32 to vector<1x1xf32>
    %57 = vector.extract_strided_slice %26 {offsets = [0, 0], sizes = [1, 255], strides = [1, 1]} : vector<1x256xf32> to vector<1x255xf32>
    %58 = tpu.concatenate %56, %57 in 1 : vector<1x1xf32>, vector<1x255xf32> -> vector<1x256xf32>
    %59 = arith.mulf %58, %20 : vector<1x256xf32>
    %60 = vector.extract_strided_slice %27 {offsets = [0, 3], sizes = [4, 1], strides = [1, 1]} : vector<4x9xf32> to vector<4x1xf32>
    %61 = vector.broadcast %59 : vector<1x256xf32> to vector<4x256xf32>
    %62 = vector.broadcast %60 : vector<4x1xf32> to vector<4x256xf32>
    %63 = arith.mulf %61, %62 : vector<4x256xf32>
    %64 = arith.addf %55, %63 : vector<4x256xf32>
    %65 = vector.extract_strided_slice %27 {offsets = [0, 4], sizes = [4, 1], strides = [1, 1]} : vector<4x9xf32> to vector<4x1xf32>
    %66 = vector.broadcast %26 : vector<1x256xf32> to vector<4x256xf32>
    %67 = vector.broadcast %65 : vector<4x1xf32> to vector<4x256xf32>
    %68 = arith.mulf %66, %67 : vector<4x256xf32>
    %69 = arith.addf %64, %68 : vector<4x256xf32>
    %cst_14 = arith.constant 0.000000e+00 : f32
    %70 = vector.broadcast %cst_14 : f32 to vector<1x1xf32>
    %71 = vector.extract_strided_slice %26 {offsets = [0, 1], sizes = [1, 255], strides = [1, 1]} : vector<1x256xf32> to vector<1x255xf32>
    %72 = tpu.concatenate %71, %70 in 1 : vector<1x255xf32>, vector<1x1xf32> -> vector<1x256xf32>
    %73 = arith.mulf %72, %24 : vector<1x256xf32>
    %74 = vector.extract_strided_slice %27 {offsets = [0, 5], sizes = [4, 1], strides = [1, 1]} : vector<4x9xf32> to vector<4x1xf32>
    %75 = vector.broadcast %73 : vector<1x256xf32> to vector<4x256xf32>
    %76 = vector.broadcast %74 : vector<4x1xf32> to vector<4x256xf32>
    %77 = arith.mulf %75, %76 : vector<4x256xf32>
    %78 = arith.addf %69, %77 : vector<4x256xf32>
    %cst_15 = arith.constant 0.000000e+00 : f32
    %79 = vector.broadcast %cst_15 : f32 to vector<1x15xf32>
    %80 = vector.extract_strided_slice %26 {offsets = [0, 15], sizes = [1, 241], strides = [1, 1]} : vector<1x256xf32> to vector<1x241xf32>
    %81 = tpu.concatenate %80, %79 in 1 : vector<1x241xf32>, vector<1x15xf32> -> vector<1x256xf32>
    %82 = arith.mulf %81, %20 : vector<1x256xf32>
    %83 = vector.extract_strided_slice %27 {offsets = [0, 6], sizes = [4, 1], strides = [1, 1]} : vector<4x9xf32> to vector<4x1xf32>
    %84 = vector.broadcast %82 : vector<1x256xf32> to vector<4x256xf32>
    %85 = vector.broadcast %83 : vector<4x1xf32> to vector<4x256xf32>
    %86 = arith.mulf %84, %85 : vector<4x256xf32>
    %87 = arith.addf %78, %86 : vector<4x256xf32>
    %cst_16 = arith.constant 0.000000e+00 : f32
    %88 = vector.broadcast %cst_16 : f32 to vector<1x16xf32>
    %89 = vector.extract_strided_slice %26 {offsets = [0, 16], sizes = [1, 240], strides = [1, 1]} : vector<1x256xf32> to vector<1x240xf32>
    %90 = tpu.concatenate %89, %88 in 1 : vector<1x240xf32>, vector<1x16xf32> -> vector<1x256xf32>
    %91 = vector.extract_strided_slice %27 {offsets = [0, 7], sizes = [4, 1], strides = [1, 1]} : vector<4x9xf32> to vector<4x1xf32>
    %92 = vector.broadcast %90 : vector<1x256xf32> to vector<4x256xf32>
    %93 = vector.broadcast %91 : vector<4x1xf32> to vector<4x256xf32>
    %94 = arith.mulf %92, %93 : vector<4x256xf32>
    %95 = arith.addf %87, %94 : vector<4x256xf32>
    %cst_17 = arith.constant 0.000000e+00 : f32
    %96 = vector.broadcast %cst_17 : f32 to vector<1x17xf32>
    %97 = vector.extract_strided_slice %26 {offsets = [0, 17], sizes = [1, 239], strides = [1, 1]} : vector<1x256xf32> to vector<1x239xf32>
    %98 = tpu.concatenate %97, %96 in 1 : vector<1x239xf32>, vector<1x17xf32> -> vector<1x256xf32>
    %99 = arith.mulf %98, %24 : vector<1x256xf32>
    %100 = vector.extract_strided_slice %27 {offsets = [0, 8], sizes = [4, 1], strides = [1, 1]} : vector<4x9xf32> to vector<4x1xf32>
    %101 = vector.broadcast %99 : vector<1x256xf32> to vector<4x256xf32>
    %102 = vector.broadcast %100 : vector<4x1xf32> to vector<4x256xf32>
    %103 = arith.mulf %101, %102 : vector<4x256xf32>
    %104 = arith.addf %95, %103 : vector<4x256xf32>
    %105 = vector.broadcast %28 : vector<4x1xf32> to vector<4x256xf32>
    %106 = arith.addf %104, %105 : vector<4x256xf32>
    %cst_18 = arith.constant 0.000000e+00 : f32
    %107 = vector.broadcast %cst_18 : f32 to vector<4x256xf32>
    %108 = arith.maximumf %106, %107 : vector<4x256xf32>
    %c0_19 = arith.constant 0 : index
    %c0_20 = arith.constant 0 : index
    %109 = vector.load %arg4[%c0_19, %c0_20] : memref<8x36xf32, #tpu.memory_space<vmem>>, vector<8x36xf32>
    %c0_21 = arith.constant 0 : index
    %c0_22 = arith.constant 0 : index
    %110 = vector.load %arg5[%c0_21, %c0_22] : memref<8x1xf32, #tpu.memory_space<vmem>>, vector<8x1xf32>
    %cst_23 = arith.constant 0.000000e+00 : f32
    %111 = vector.broadcast %cst_23 : f32 to vector<8x256xf32>
    %cst_24 = arith.constant 0.000000e+00 : f32
    %112 = vector.broadcast %cst_24 : f32 to vector<4x17xf32>
    %113 = vector.extract_strided_slice %108 {offsets = [0, 0], sizes = [4, 239], strides = [1, 1]} : vector<4x256xf32> to vector<4x239xf32>
    %114 = tpu.concatenate %112, %113 in 1 : vector<4x17xf32>, vector<4x239xf32> -> vector<4x256xf32>
    %115 = vector.broadcast %20 : vector<1x256xf32> to vector<4x256xf32>
    %116 = arith.mulf %114, %115 : vector<4x256xf32>
    %117 = vector.extract_strided_slice %109 {offsets = [0, 0], sizes = [8, 1], strides = [1, 1]} : vector<8x36xf32> to vector<8x1xf32>
    %118 = vector.extract_strided_slice %116 {offsets = [0, 0], sizes = [1, 256], strides = [1, 1]} : vector<4x256xf32> to vector<1x256xf32>
    %119 = vector.broadcast %118 : vector<1x256xf32> to vector<8x256xf32>
    %120 = vector.broadcast %117 : vector<8x1xf32> to vector<8x256xf32>
    %121 = arith.mulf %119, %120 : vector<8x256xf32>
    %122 = arith.addf %111, %121 : vector<8x256xf32>
    %123 = vector.extract_strided_slice %109 {offsets = [0, 9], sizes = [8, 1], strides = [1, 1]} : vector<8x36xf32> to vector<8x1xf32>
    %124 = vector.extract_strided_slice %116 {offsets = [1, 0], sizes = [1, 256], strides = [1, 1]} : vector<4x256xf32> to vector<1x256xf32>
    %125 = vector.broadcast %124 : vector<1x256xf32> to vector<8x256xf32>
    %126 = vector.broadcast %123 : vector<8x1xf32> to vector<8x256xf32>
    %127 = arith.mulf %125, %126 : vector<8x256xf32>
    %128 = arith.addf %122, %127 : vector<8x256xf32>
    %129 = vector.extract_strided_slice %109 {offsets = [0, 18], sizes = [8, 1], strides = [1, 1]} : vector<8x36xf32> to vector<8x1xf32>
    %130 = vector.extract_strided_slice %116 {offsets = [2, 0], sizes = [1, 256], strides = [1, 1]} : vector<4x256xf32> to vector<1x256xf32>
    %131 = vector.broadcast %130 : vector<1x256xf32> to vector<8x256xf32>
    %132 = vector.broadcast %129 : vector<8x1xf32> to vector<8x256xf32>
    %133 = arith.mulf %131, %132 : vector<8x256xf32>
    %134 = arith.addf %128, %133 : vector<8x256xf32>
    %135 = vector.extract_strided_slice %109 {offsets = [0, 27], sizes = [8, 1], strides = [1, 1]} : vector<8x36xf32> to vector<8x1xf32>
    %136 = vector.extract_strided_slice %116 {offsets = [3, 0], sizes = [1, 256], strides = [1, 1]} : vector<4x256xf32> to vector<1x256xf32>
    %137 = vector.broadcast %136 : vector<1x256xf32> to vector<8x256xf32>
    %138 = vector.broadcast %135 : vector<8x1xf32> to vector<8x256xf32>
    %139 = arith.mulf %137, %138 : vector<8x256xf32>
    %140 = arith.addf %134, %139 : vector<8x256xf32>
    %cst_25 = arith.constant 0.000000e+00 : f32
    %141 = vector.broadcast %cst_25 : f32 to vector<4x16xf32>
    %142 = vector.extract_strided_slice %108 {offsets = [0, 0], sizes = [4, 240], strides = [1, 1]} : vector<4x256xf32> to vector<4x240xf32>
    %143 = tpu.concatenate %141, %142 in 1 : vector<4x16xf32>, vector<4x240xf32> -> vector<4x256xf32>
    %144 = vector.extract_strided_slice %109 {offsets = [0, 1], sizes = [8, 1], strides = [1, 1]} : vector<8x36xf32> to vector<8x1xf32>
    %145 = vector.extract_strided_slice %143 {offsets = [0, 0], sizes = [1, 256], strides = [1, 1]} : vector<4x256xf32> to vector<1x256xf32>
    %146 = vector.broadcast %145 : vector<1x256xf32> to vector<8x256xf32>
    %147 = vector.broadcast %144 : vector<8x1xf32> to vector<8x256xf32>
    %148 = arith.mulf %146, %147 : vector<8x256xf32>
    %149 = arith.addf %140, %148 : vector<8x256xf32>
    %150 = vector.extract_strided_slice %109 {offsets = [0, 10], sizes = [8, 1], strides = [1, 1]} : vector<8x36xf32> to vector<8x1xf32>
    %151 = vector.extract_strided_slice %143 {offsets = [1, 0], sizes = [1, 256], strides = [1, 1]} : vector<4x256xf32> to vector<1x256xf32>
    %152 = vector.broadcast %151 : vector<1x256xf32> to vector<8x256xf32>
    %153 = vector.broadcast %150 : vector<8x1xf32> to vector<8x256xf32>
    %154 = arith.mulf %152, %153 : vector<8x256xf32>
    %155 = arith.addf %149, %154 : vector<8x256xf32>
    %156 = vector.extract_strided_slice %109 {offsets = [0, 19], sizes = [8, 1], strides = [1, 1]} : vector<8x36xf32> to vector<8x1xf32>
    %157 = vector.extract_strided_slice %143 {offsets = [2, 0], sizes = [1, 256], strides = [1, 1]} : vector<4x256xf32> to vector<1x256xf32>
    %158 = vector.broadcast %157 : vector<1x256xf32> to vector<8x256xf32>
    %159 = vector.broadcast %156 : vector<8x1xf32> to vector<8x256xf32>
    %160 = arith.mulf %158, %159 : vector<8x256xf32>
    %161 = arith.addf %155, %160 : vector<8x256xf32>
    %162 = vector.extract_strided_slice %109 {offsets = [0, 28], sizes = [8, 1], strides = [1, 1]} : vector<8x36xf32> to vector<8x1xf32>
    %163 = vector.extract_strided_slice %143 {offsets = [3, 0], sizes = [1, 256], strides = [1, 1]} : vector<4x256xf32> to vector<1x256xf32>
    %164 = vector.broadcast %163 : vector<1x256xf32> to vector<8x256xf32>
    %165 = vector.broadcast %162 : vector<8x1xf32> to vector<8x256xf32>
    %166 = arith.mulf %164, %165 : vector<8x256xf32>
    %167 = arith.addf %161, %166 : vector<8x256xf32>
    %cst_26 = arith.constant 0.000000e+00 : f32
    %168 = vector.broadcast %cst_26 : f32 to vector<4x15xf32>
    %169 = vector.extract_strided_slice %108 {offsets = [0, 0], sizes = [4, 241], strides = [1, 1]} : vector<4x256xf32> to vector<4x241xf32>
    %170 = tpu.concatenate %168, %169 in 1 : vector<4x15xf32>, vector<4x241xf32> -> vector<4x256xf32>
    %171 = vector.broadcast %24 : vector<1x256xf32> to vector<4x256xf32>
    %172 = arith.mulf %170, %171 : vector<4x256xf32>
    %173 = vector.extract_strided_slice %109 {offsets = [0, 2], sizes = [8, 1], strides = [1, 1]} : vector<8x36xf32> to vector<8x1xf32>
    %174 = vector.extract_strided_slice %172 {offsets = [0, 0], sizes = [1, 256], strides = [1, 1]} : vector<4x256xf32> to vector<1x256xf32>
    %175 = vector.broadcast %174 : vector<1x256xf32> to vector<8x256xf32>
    %176 = vector.broadcast %173 : vector<8x1xf32> to vector<8x256xf32>
    %177 = arith.mulf %175, %176 : vector<8x256xf32>
    %178 = arith.addf %167, %177 : vector<8x256xf32>
    %179 = vector.extract_strided_slice %109 {offsets = [0, 11], sizes = [8, 1], strides = [1, 1]} : vector<8x36xf32> to vector<8x1xf32>
    %180 = vector.extract_strided_slice %172 {offsets = [1, 0], sizes = [1, 256], strides = [1, 1]} : vector<4x256xf32> to vector<1x256xf32>
    %181 = vector.broadcast %180 : vector<1x256xf32> to vector<8x256xf32>
    %182 = vector.broadcast %179 : vector<8x1xf32> to vector<8x256xf32>
    %183 = arith.mulf %181, %182 : vector<8x256xf32>
    %184 = arith.addf %178, %183 : vector<8x256xf32>
    %185 = vector.extract_strided_slice %109 {offsets = [0, 20], sizes = [8, 1], strides = [1, 1]} : vector<8x36xf32> to vector<8x1xf32>
    %186 = vector.extract_strided_slice %172 {offsets = [2, 0], sizes = [1, 256], strides = [1, 1]} : vector<4x256xf32> to vector<1x256xf32>
    %187 = vector.broadcast %186 : vector<1x256xf32> to vector<8x256xf32>
    %188 = vector.broadcast %185 : vector<8x1xf32> to vector<8x256xf32>
    %189 = arith.mulf %187, %188 : vector<8x256xf32>
    %190 = arith.addf %184, %189 : vector<8x256xf32>
    %191 = vector.extract_strided_slice %109 {offsets = [0, 29], sizes = [8, 1], strides = [1, 1]} : vector<8x36xf32> to vector<8x1xf32>
    %192 = vector.extract_strided_slice %172 {offsets = [3, 0], sizes = [1, 256], strides = [1, 1]} : vector<4x256xf32> to vector<1x256xf32>
    %193 = vector.broadcast %192 : vector<1x256xf32> to vector<8x256xf32>
    %194 = vector.broadcast %191 : vector<8x1xf32> to vector<8x256xf32>
    %195 = arith.mulf %193, %194 : vector<8x256xf32>
    %196 = arith.addf %190, %195 : vector<8x256xf32>
    %cst_27 = arith.constant 0.000000e+00 : f32
    %197 = vector.broadcast %cst_27 : f32 to vector<4x1xf32>
    %198 = vector.extract_strided_slice %108 {offsets = [0, 0], sizes = [4, 255], strides = [1, 1]} : vector<4x256xf32> to vector<4x255xf32>
    %199 = tpu.concatenate %197, %198 in 1 : vector<4x1xf32>, vector<4x255xf32> -> vector<4x256xf32>
    %200 = vector.broadcast %20 : vector<1x256xf32> to vector<4x256xf32>
    %201 = arith.mulf %199, %200 : vector<4x256xf32>
    %202 = vector.extract_strided_slice %109 {offsets = [0, 3], sizes = [8, 1], strides = [1, 1]} : vector<8x36xf32> to vector<8x1xf32>
    %203 = vector.extract_strided_slice %201 {offsets = [0, 0], sizes = [1, 256], strides = [1, 1]} : vector<4x256xf32> to vector<1x256xf32>
    %204 = vector.broadcast %203 : vector<1x256xf32> to vector<8x256xf32>
    %205 = vector.broadcast %202 : vector<8x1xf32> to vector<8x256xf32>
    %206 = arith.mulf %204, %205 : vector<8x256xf32>
    %207 = arith.addf %196, %206 : vector<8x256xf32>
    %208 = vector.extract_strided_slice %109 {offsets = [0, 12], sizes = [8, 1], strides = [1, 1]} : vector<8x36xf32> to vector<8x1xf32>
    %209 = vector.extract_strided_slice %201 {offsets = [1, 0], sizes = [1, 256], strides = [1, 1]} : vector<4x256xf32> to vector<1x256xf32>
    %210 = vector.broadcast %209 : vector<1x256xf32> to vector<8x256xf32>
    %211 = vector.broadcast %208 : vector<8x1xf32> to vector<8x256xf32>
    %212 = arith.mulf %210, %211 : vector<8x256xf32>
    %213 = arith.addf %207, %212 : vector<8x256xf32>
    %214 = vector.extract_strided_slice %109 {offsets = [0, 21], sizes = [8, 1], strides = [1, 1]} : vector<8x36xf32> to vector<8x1xf32>
    %215 = vector.extract_strided_slice %201 {offsets = [2, 0], sizes = [1, 256], strides = [1, 1]} : vector<4x256xf32> to vector<1x256xf32>
    %216 = vector.broadcast %215 : vector<1x256xf32> to vector<8x256xf32>
    %217 = vector.broadcast %214 : vector<8x1xf32> to vector<8x256xf32>
    %218 = arith.mulf %216, %217 : vector<8x256xf32>
    %219 = arith.addf %213, %218 : vector<8x256xf32>
    %220 = vector.extract_strided_slice %109 {offsets = [0, 30], sizes = [8, 1], strides = [1, 1]} : vector<8x36xf32> to vector<8x1xf32>
    %221 = vector.extract_strided_slice %201 {offsets = [3, 0], sizes = [1, 256], strides = [1, 1]} : vector<4x256xf32> to vector<1x256xf32>
    %222 = vector.broadcast %221 : vector<1x256xf32> to vector<8x256xf32>
    %223 = vector.broadcast %220 : vector<8x1xf32> to vector<8x256xf32>
    %224 = arith.mulf %222, %223 : vector<8x256xf32>
    %225 = arith.addf %219, %224 : vector<8x256xf32>
    %226 = vector.extract_strided_slice %109 {offsets = [0, 4], sizes = [8, 1], strides = [1, 1]} : vector<8x36xf32> to vector<8x1xf32>
    %227 = vector.extract_strided_slice %108 {offsets = [0, 0], sizes = [1, 256], strides = [1, 1]} : vector<4x256xf32> to vector<1x256xf32>
    %228 = vector.broadcast %227 : vector<1x256xf32> to vector<8x256xf32>
    %229 = vector.broadcast %226 : vector<8x1xf32> to vector<8x256xf32>
    %230 = arith.mulf %228, %229 : vector<8x256xf32>
    %231 = arith.addf %225, %230 : vector<8x256xf32>
    %232 = vector.extract_strided_slice %109 {offsets = [0, 13], sizes = [8, 1], strides = [1, 1]} : vector<8x36xf32> to vector<8x1xf32>
    %233 = vector.extract_strided_slice %108 {offsets = [1, 0], sizes = [1, 256], strides = [1, 1]} : vector<4x256xf32> to vector<1x256xf32>
    %234 = vector.broadcast %233 : vector<1x256xf32> to vector<8x256xf32>
    %235 = vector.broadcast %232 : vector<8x1xf32> to vector<8x256xf32>
    %236 = arith.mulf %234, %235 : vector<8x256xf32>
    %237 = arith.addf %231, %236 : vector<8x256xf32>
    %238 = vector.extract_strided_slice %109 {offsets = [0, 22], sizes = [8, 1], strides = [1, 1]} : vector<8x36xf32> to vector<8x1xf32>
    %239 = vector.extract_strided_slice %108 {offsets = [2, 0], sizes = [1, 256], strides = [1, 1]} : vector<4x256xf32> to vector<1x256xf32>
    %240 = vector.broadcast %239 : vector<1x256xf32> to vector<8x256xf32>
    %241 = vector.broadcast %238 : vector<8x1xf32> to vector<8x256xf32>
    %242 = arith.mulf %240, %241 : vector<8x256xf32>
    %243 = arith.addf %237, %242 : vector<8x256xf32>
    %244 = vector.extract_strided_slice %109 {offsets = [0, 31], sizes = [8, 1], strides = [1, 1]} : vector<8x36xf32> to vector<8x1xf32>
    %245 = vector.extract_strided_slice %108 {offsets = [3, 0], sizes = [1, 256], strides = [1, 1]} : vector<4x256xf32> to vector<1x256xf32>
    %246 = vector.broadcast %245 : vector<1x256xf32> to vector<8x256xf32>
    %247 = vector.broadcast %244 : vector<8x1xf32> to vector<8x256xf32>
    %248 = arith.mulf %246, %247 : vector<8x256xf32>
    %249 = arith.addf %243, %248 : vector<8x256xf32>
    %cst_28 = arith.constant 0.000000e+00 : f32
    %250 = vector.broadcast %cst_28 : f32 to vector<4x1xf32>
    %251 = vector.extract_strided_slice %108 {offsets = [0, 1], sizes = [4, 255], strides = [1, 1]} : vector<4x256xf32> to vector<4x255xf32>
    %252 = tpu.concatenate %251, %250 in 1 : vector<4x255xf32>, vector<4x1xf32> -> vector<4x256xf32>
    %253 = vector.broadcast %24 : vector<1x256xf32> to vector<4x256xf32>
    %254 = arith.mulf %252, %253 : vector<4x256xf32>
    %255 = vector.extract_strided_slice %109 {offsets = [0, 5], sizes = [8, 1], strides = [1, 1]} : vector<8x36xf32> to vector<8x1xf32>
    %256 = vector.extract_strided_slice %254 {offsets = [0, 0], sizes = [1, 256], strides = [1, 1]} : vector<4x256xf32> to vector<1x256xf32>
    %257 = vector.broadcast %256 : vector<1x256xf32> to vector<8x256xf32>
    %258 = vector.broadcast %255 : vector<8x1xf32> to vector<8x256xf32>
    %259 = arith.mulf %257, %258 : vector<8x256xf32>
    %260 = arith.addf %249, %259 : vector<8x256xf32>
    %261 = vector.extract_strided_slice %109 {offsets = [0, 14], sizes = [8, 1], strides = [1, 1]} : vector<8x36xf32> to vector<8x1xf32>
    %262 = vector.extract_strided_slice %254 {offsets = [1, 0], sizes = [1, 256], strides = [1, 1]} : vector<4x256xf32> to vector<1x256xf32>
    %263 = vector.broadcast %262 : vector<1x256xf32> to vector<8x256xf32>
    %264 = vector.broadcast %261 : vector<8x1xf32> to vector<8x256xf32>
    %265 = arith.mulf %263, %264 : vector<8x256xf32>
    %266 = arith.addf %260, %265 : vector<8x256xf32>
    %267 = vector.extract_strided_slice %109 {offsets = [0, 23], sizes = [8, 1], strides = [1, 1]} : vector<8x36xf32> to vector<8x1xf32>
    %268 = vector.extract_strided_slice %254 {offsets = [2, 0], sizes = [1, 256], strides = [1, 1]} : vector<4x256xf32> to vector<1x256xf32>
    %269 = vector.broadcast %268 : vector<1x256xf32> to vector<8x256xf32>
    %270 = vector.broadcast %267 : vector<8x1xf32> to vector<8x256xf32>
    %271 = arith.mulf %269, %270 : vector<8x256xf32>
    %272 = arith.addf %266, %271 : vector<8x256xf32>
    %273 = vector.extract_strided_slice %109 {offsets = [0, 32], sizes = [8, 1], strides = [1, 1]} : vector<8x36xf32> to vector<8x1xf32>
    %274 = vector.extract_strided_slice %254 {offsets = [3, 0], sizes = [1, 256], strides = [1, 1]} : vector<4x256xf32> to vector<1x256xf32>
    %275 = vector.broadcast %274 : vector<1x256xf32> to vector<8x256xf32>
    %276 = vector.broadcast %273 : vector<8x1xf32> to vector<8x256xf32>
    %277 = arith.mulf %275, %276 : vector<8x256xf32>
    %278 = arith.addf %272, %277 : vector<8x256xf32>
    %cst_29 = arith.constant 0.000000e+00 : f32
    %279 = vector.broadcast %cst_29 : f32 to vector<4x15xf32>
    %280 = vector.extract_strided_slice %108 {offsets = [0, 15], sizes = [4, 241], strides = [1, 1]} : vector<4x256xf32> to vector<4x241xf32>
    %281 = tpu.concatenate %280, %279 in 1 : vector<4x241xf32>, vector<4x15xf32> -> vector<4x256xf32>
    %282 = vector.broadcast %20 : vector<1x256xf32> to vector<4x256xf32>
    %283 = arith.mulf %281, %282 : vector<4x256xf32>
    %284 = vector.extract_strided_slice %109 {offsets = [0, 6], sizes = [8, 1], strides = [1, 1]} : vector<8x36xf32> to vector<8x1xf32>
    %285 = vector.extract_strided_slice %283 {offsets = [0, 0], sizes = [1, 256], strides = [1, 1]} : vector<4x256xf32> to vector<1x256xf32>
    %286 = vector.broadcast %285 : vector<1x256xf32> to vector<8x256xf32>
    %287 = vector.broadcast %284 : vector<8x1xf32> to vector<8x256xf32>
    %288 = arith.mulf %286, %287 : vector<8x256xf32>
    %289 = arith.addf %278, %288 : vector<8x256xf32>
    %290 = vector.extract_strided_slice %109 {offsets = [0, 15], sizes = [8, 1], strides = [1, 1]} : vector<8x36xf32> to vector<8x1xf32>
    %291 = vector.extract_strided_slice %283 {offsets = [1, 0], sizes = [1, 256], strides = [1, 1]} : vector<4x256xf32> to vector<1x256xf32>
    %292 = vector.broadcast %291 : vector<1x256xf32> to vector<8x256xf32>
    %293 = vector.broadcast %290 : vector<8x1xf32> to vector<8x256xf32>
    %294 = arith.mulf %292, %293 : vector<8x256xf32>
    %295 = arith.addf %289, %294 : vector<8x256xf32>
    %296 = vector.extract_strided_slice %109 {offsets = [0, 24], sizes = [8, 1], strides = [1, 1]} : vector<8x36xf32> to vector<8x1xf32>
    %297 = vector.extract_strided_slice %283 {offsets = [2, 0], sizes = [1, 256], strides = [1, 1]} : vector<4x256xf32> to vector<1x256xf32>
    %298 = vector.broadcast %297 : vector<1x256xf32> to vector<8x256xf32>
    %299 = vector.broadcast %296 : vector<8x1xf32> to vector<8x256xf32>
    %300 = arith.mulf %298, %299 : vector<8x256xf32>
    %301 = arith.addf %295, %300 : vector<8x256xf32>
    %302 = vector.extract_strided_slice %109 {offsets = [0, 33], sizes = [8, 1], strides = [1, 1]} : vector<8x36xf32> to vector<8x1xf32>
    %303 = vector.extract_strided_slice %283 {offsets = [3, 0], sizes = [1, 256], strides = [1, 1]} : vector<4x256xf32> to vector<1x256xf32>
    %304 = vector.broadcast %303 : vector<1x256xf32> to vector<8x256xf32>
    %305 = vector.broadcast %302 : vector<8x1xf32> to vector<8x256xf32>
    %306 = arith.mulf %304, %305 : vector<8x256xf32>
    %307 = arith.addf %301, %306 : vector<8x256xf32>
    %cst_30 = arith.constant 0.000000e+00 : f32
    %308 = vector.broadcast %cst_30 : f32 to vector<4x16xf32>
    %309 = vector.extract_strided_slice %108 {offsets = [0, 16], sizes = [4, 240], strides = [1, 1]} : vector<4x256xf32> to vector<4x240xf32>
    %310 = tpu.concatenate %309, %308 in 1 : vector<4x240xf32>, vector<4x16xf32> -> vector<4x256xf32>
    %311 = vector.extract_strided_slice %109 {offsets = [0, 7], sizes = [8, 1], strides = [1, 1]} : vector<8x36xf32> to vector<8x1xf32>
    %312 = vector.extract_strided_slice %310 {offsets = [0, 0], sizes = [1, 256], strides = [1, 1]} : vector<4x256xf32> to vector<1x256xf32>
    %313 = vector.broadcast %312 : vector<1x256xf32> to vector<8x256xf32>
    %314 = vector.broadcast %311 : vector<8x1xf32> to vector<8x256xf32>
    %315 = arith.mulf %313, %314 : vector<8x256xf32>
    %316 = arith.addf %307, %315 : vector<8x256xf32>
    %317 = vector.extract_strided_slice %109 {offsets = [0, 16], sizes = [8, 1], strides = [1, 1]} : vector<8x36xf32> to vector<8x1xf32>
    %318 = vector.extract_strided_slice %310 {offsets = [1, 0], sizes = [1, 256], strides = [1, 1]} : vector<4x256xf32> to vector<1x256xf32>
    %319 = vector.broadcast %318 : vector<1x256xf32> to vector<8x256xf32>
    %320 = vector.broadcast %317 : vector<8x1xf32> to vector<8x256xf32>
    %321 = arith.mulf %319, %320 : vector<8x256xf32>
    %322 = arith.addf %316, %321 : vector<8x256xf32>
    %323 = vector.extract_strided_slice %109 {offsets = [0, 25], sizes = [8, 1], strides = [1, 1]} : vector<8x36xf32> to vector<8x1xf32>
    %324 = vector.extract_strided_slice %310 {offsets = [2, 0], sizes = [1, 256], strides = [1, 1]} : vector<4x256xf32> to vector<1x256xf32>
    %325 = vector.broadcast %324 : vector<1x256xf32> to vector<8x256xf32>
    %326 = vector.broadcast %323 : vector<8x1xf32> to vector<8x256xf32>
    %327 = arith.mulf %325, %326 : vector<8x256xf32>
    %328 = arith.addf %322, %327 : vector<8x256xf32>
    %329 = vector.extract_strided_slice %109 {offsets = [0, 34], sizes = [8, 1], strides = [1, 1]} : vector<8x36xf32> to vector<8x1xf32>
    %330 = vector.extract_strided_slice %310 {offsets = [3, 0], sizes = [1, 256], strides = [1, 1]} : vector<4x256xf32> to vector<1x256xf32>
    %331 = vector.broadcast %330 : vector<1x256xf32> to vector<8x256xf32>
    %332 = vector.broadcast %329 : vector<8x1xf32> to vector<8x256xf32>
    %333 = arith.mulf %331, %332 : vector<8x256xf32>
    %334 = arith.addf %328, %333 : vector<8x256xf32>
    %cst_31 = arith.constant 0.000000e+00 : f32
    %335 = vector.broadcast %cst_31 : f32 to vector<4x17xf32>
    %336 = vector.extract_strided_slice %108 {offsets = [0, 17], sizes = [4, 239], strides = [1, 1]} : vector<4x256xf32> to vector<4x239xf32>
    %337 = tpu.concatenate %336, %335 in 1 : vector<4x239xf32>, vector<4x17xf32> -> vector<4x256xf32>
    %338 = vector.broadcast %24 : vector<1x256xf32> to vector<4x256xf32>
    %339 = arith.mulf %337, %338 : vector<4x256xf32>
    %340 = vector.extract_strided_slice %109 {offsets = [0, 8], sizes = [8, 1], strides = [1, 1]} : vector<8x36xf32> to vector<8x1xf32>
    %341 = vector.extract_strided_slice %339 {offsets = [0, 0], sizes = [1, 256], strides = [1, 1]} : vector<4x256xf32> to vector<1x256xf32>
    %342 = vector.broadcast %341 : vector<1x256xf32> to vector<8x256xf32>
    %343 = vector.broadcast %340 : vector<8x1xf32> to vector<8x256xf32>
    %344 = arith.mulf %342, %343 : vector<8x256xf32>
    %345 = arith.addf %334, %344 : vector<8x256xf32>
    %346 = vector.extract_strided_slice %109 {offsets = [0, 17], sizes = [8, 1], strides = [1, 1]} : vector<8x36xf32> to vector<8x1xf32>
    %347 = vector.extract_strided_slice %339 {offsets = [1, 0], sizes = [1, 256], strides = [1, 1]} : vector<4x256xf32> to vector<1x256xf32>
    %348 = vector.broadcast %347 : vector<1x256xf32> to vector<8x256xf32>
    %349 = vector.broadcast %346 : vector<8x1xf32> to vector<8x256xf32>
    %350 = arith.mulf %348, %349 : vector<8x256xf32>
    %351 = arith.addf %345, %350 : vector<8x256xf32>
    %352 = vector.extract_strided_slice %109 {offsets = [0, 26], sizes = [8, 1], strides = [1, 1]} : vector<8x36xf32> to vector<8x1xf32>
    %353 = vector.extract_strided_slice %339 {offsets = [2, 0], sizes = [1, 256], strides = [1, 1]} : vector<4x256xf32> to vector<1x256xf32>
    %354 = vector.broadcast %353 : vector<1x256xf32> to vector<8x256xf32>
    %355 = vector.broadcast %352 : vector<8x1xf32> to vector<8x256xf32>
    %356 = arith.mulf %354, %355 : vector<8x256xf32>
    %357 = arith.addf %351, %356 : vector<8x256xf32>
    %358 = vector.extract_strided_slice %109 {offsets = [0, 35], sizes = [8, 1], strides = [1, 1]} : vector<8x36xf32> to vector<8x1xf32>
    %359 = vector.extract_strided_slice %339 {offsets = [3, 0], sizes = [1, 256], strides = [1, 1]} : vector<4x256xf32> to vector<1x256xf32>
    %360 = vector.broadcast %359 : vector<1x256xf32> to vector<8x256xf32>
    %361 = vector.broadcast %358 : vector<8x1xf32> to vector<8x256xf32>
    %362 = arith.mulf %360, %361 : vector<8x256xf32>
    %363 = arith.addf %357, %362 : vector<8x256xf32>
    %364 = vector.broadcast %110 : vector<8x1xf32> to vector<8x256xf32>
    %365 = arith.addf %363, %364 : vector<8x256xf32>
    %cst_32 = arith.constant 0.000000e+00 : f32
    %366 = vector.broadcast %cst_32 : f32 to vector<8x256xf32>
    %367 = arith.maximumf %365, %366 : vector<8x256xf32>
    %c0_33 = arith.constant 0 : index
    %c0_34 = arith.constant 0 : index
    %368 = vector.load %arg6[%c0_33, %c0_34] : memref<1x72xf32, #tpu.memory_space<vmem>>, vector<1x72xf32>
    %c0_35 = arith.constant 0 : index
    %c0_36 = arith.constant 0 : index
    %369 = vector.load %arg7[%c0_35, %c0_36] : memref<1x1xf32, #tpu.memory_space<vmem>>, vector<1x1xf32>
    %cst_37 = arith.constant 0.000000e+00 : f32
    %370 = vector.broadcast %cst_37 : f32 to vector<1x256xf32>
    %cst_38 = arith.constant 0.000000e+00 : f32
    %371 = vector.broadcast %cst_38 : f32 to vector<8x17xf32>
    %372 = vector.extract_strided_slice %367 {offsets = [0, 0], sizes = [8, 239], strides = [1, 1]} : vector<8x256xf32> to vector<8x239xf32>
    %373 = tpu.concatenate %371, %372 in 1 : vector<8x17xf32>, vector<8x239xf32> -> vector<8x256xf32>
    %374 = vector.broadcast %20 : vector<1x256xf32> to vector<8x256xf32>
    %375 = arith.mulf %373, %374 : vector<8x256xf32>
    %376 = vector.extract_strided_slice %368 {offsets = [0, 0], sizes = [1, 1], strides = [1, 1]} : vector<1x72xf32> to vector<1x1xf32>
    %377 = vector.extract_strided_slice %375 {offsets = [0, 0], sizes = [1, 256], strides = [1, 1]} : vector<8x256xf32> to vector<1x256xf32>
    %378 = vector.broadcast %376 : vector<1x1xf32> to vector<1x256xf32>
    %379 = arith.mulf %377, %378 : vector<1x256xf32>
    %380 = arith.addf %370, %379 : vector<1x256xf32>
    %381 = vector.extract_strided_slice %368 {offsets = [0, 9], sizes = [1, 1], strides = [1, 1]} : vector<1x72xf32> to vector<1x1xf32>
    %382 = vector.extract_strided_slice %375 {offsets = [1, 0], sizes = [1, 256], strides = [1, 1]} : vector<8x256xf32> to vector<1x256xf32>
    %383 = vector.broadcast %381 : vector<1x1xf32> to vector<1x256xf32>
    %384 = arith.mulf %382, %383 : vector<1x256xf32>
    %385 = arith.addf %380, %384 : vector<1x256xf32>
    %386 = vector.extract_strided_slice %368 {offsets = [0, 18], sizes = [1, 1], strides = [1, 1]} : vector<1x72xf32> to vector<1x1xf32>
    %387 = vector.extract_strided_slice %375 {offsets = [2, 0], sizes = [1, 256], strides = [1, 1]} : vector<8x256xf32> to vector<1x256xf32>
    %388 = vector.broadcast %386 : vector<1x1xf32> to vector<1x256xf32>
    %389 = arith.mulf %387, %388 : vector<1x256xf32>
    %390 = arith.addf %385, %389 : vector<1x256xf32>
    %391 = vector.extract_strided_slice %368 {offsets = [0, 27], sizes = [1, 1], strides = [1, 1]} : vector<1x72xf32> to vector<1x1xf32>
    %392 = vector.extract_strided_slice %375 {offsets = [3, 0], sizes = [1, 256], strides = [1, 1]} : vector<8x256xf32> to vector<1x256xf32>
    %393 = vector.broadcast %391 : vector<1x1xf32> to vector<1x256xf32>
    %394 = arith.mulf %392, %393 : vector<1x256xf32>
    %395 = arith.addf %390, %394 : vector<1x256xf32>
    %396 = vector.extract_strided_slice %368 {offsets = [0, 36], sizes = [1, 1], strides = [1, 1]} : vector<1x72xf32> to vector<1x1xf32>
    %397 = vector.extract_strided_slice %375 {offsets = [4, 0], sizes = [1, 256], strides = [1, 1]} : vector<8x256xf32> to vector<1x256xf32>
    %398 = vector.broadcast %396 : vector<1x1xf32> to vector<1x256xf32>
    %399 = arith.mulf %397, %398 : vector<1x256xf32>
    %400 = arith.addf %395, %399 : vector<1x256xf32>
    %401 = vector.extract_strided_slice %368 {offsets = [0, 45], sizes = [1, 1], strides = [1, 1]} : vector<1x72xf32> to vector<1x1xf32>
    %402 = vector.extract_strided_slice %375 {offsets = [5, 0], sizes = [1, 256], strides = [1, 1]} : vector<8x256xf32> to vector<1x256xf32>
    %403 = vector.broadcast %401 : vector<1x1xf32> to vector<1x256xf32>
    %404 = arith.mulf %402, %403 : vector<1x256xf32>
    %405 = arith.addf %400, %404 : vector<1x256xf32>
    %406 = vector.extract_strided_slice %368 {offsets = [0, 54], sizes = [1, 1], strides = [1, 1]} : vector<1x72xf32> to vector<1x1xf32>
    %407 = vector.extract_strided_slice %375 {offsets = [6, 0], sizes = [1, 256], strides = [1, 1]} : vector<8x256xf32> to vector<1x256xf32>
    %408 = vector.broadcast %406 : vector<1x1xf32> to vector<1x256xf32>
    %409 = arith.mulf %407, %408 : vector<1x256xf32>
    %410 = arith.addf %405, %409 : vector<1x256xf32>
    %411 = vector.extract_strided_slice %368 {offsets = [0, 63], sizes = [1, 1], strides = [1, 1]} : vector<1x72xf32> to vector<1x1xf32>
    %412 = vector.extract_strided_slice %375 {offsets = [7, 0], sizes = [1, 256], strides = [1, 1]} : vector<8x256xf32> to vector<1x256xf32>
    %413 = vector.broadcast %411 : vector<1x1xf32> to vector<1x256xf32>
    %414 = arith.mulf %412, %413 : vector<1x256xf32>
    %415 = arith.addf %410, %414 : vector<1x256xf32>
    %cst_39 = arith.constant 0.000000e+00 : f32
    %416 = vector.broadcast %cst_39 : f32 to vector<8x16xf32>
    %417 = vector.extract_strided_slice %367 {offsets = [0, 0], sizes = [8, 240], strides = [1, 1]} : vector<8x256xf32> to vector<8x240xf32>
    %418 = tpu.concatenate %416, %417 in 1 : vector<8x16xf32>, vector<8x240xf32> -> vector<8x256xf32>
    %419 = vector.extract_strided_slice %368 {offsets = [0, 1], sizes = [1, 1], strides = [1, 1]} : vector<1x72xf32> to vector<1x1xf32>
    %420 = vector.extract_strided_slice %418 {offsets = [0, 0], sizes = [1, 256], strides = [1, 1]} : vector<8x256xf32> to vector<1x256xf32>
    %421 = vector.broadcast %419 : vector<1x1xf32> to vector<1x256xf32>
    %422 = arith.mulf %420, %421 : vector<1x256xf32>
    %423 = arith.addf %415, %422 : vector<1x256xf32>
    %424 = vector.extract_strided_slice %368 {offsets = [0, 10], sizes = [1, 1], strides = [1, 1]} : vector<1x72xf32> to vector<1x1xf32>
    %425 = vector.extract_strided_slice %418 {offsets = [1, 0], sizes = [1, 256], strides = [1, 1]} : vector<8x256xf32> to vector<1x256xf32>
    %426 = vector.broadcast %424 : vector<1x1xf32> to vector<1x256xf32>
    %427 = arith.mulf %425, %426 : vector<1x256xf32>
    %428 = arith.addf %423, %427 : vector<1x256xf32>
    %429 = vector.extract_strided_slice %368 {offsets = [0, 19], sizes = [1, 1], strides = [1, 1]} : vector<1x72xf32> to vector<1x1xf32>
    %430 = vector.extract_strided_slice %418 {offsets = [2, 0], sizes = [1, 256], strides = [1, 1]} : vector<8x256xf32> to vector<1x256xf32>
    %431 = vector.broadcast %429 : vector<1x1xf32> to vector<1x256xf32>
    %432 = arith.mulf %430, %431 : vector<1x256xf32>
    %433 = arith.addf %428, %432 : vector<1x256xf32>
    %434 = vector.extract_strided_slice %368 {offsets = [0, 28], sizes = [1, 1], strides = [1, 1]} : vector<1x72xf32> to vector<1x1xf32>
    %435 = vector.extract_strided_slice %418 {offsets = [3, 0], sizes = [1, 256], strides = [1, 1]} : vector<8x256xf32> to vector<1x256xf32>
    %436 = vector.broadcast %434 : vector<1x1xf32> to vector<1x256xf32>
    %437 = arith.mulf %435, %436 : vector<1x256xf32>
    %438 = arith.addf %433, %437 : vector<1x256xf32>
    %439 = vector.extract_strided_slice %368 {offsets = [0, 37], sizes = [1, 1], strides = [1, 1]} : vector<1x72xf32> to vector<1x1xf32>
    %440 = vector.extract_strided_slice %418 {offsets = [4, 0], sizes = [1, 256], strides = [1, 1]} : vector<8x256xf32> to vector<1x256xf32>
    %441 = vector.broadcast %439 : vector<1x1xf32> to vector<1x256xf32>
    %442 = arith.mulf %440, %441 : vector<1x256xf32>
    %443 = arith.addf %438, %442 : vector<1x256xf32>
    %444 = vector.extract_strided_slice %368 {offsets = [0, 46], sizes = [1, 1], strides = [1, 1]} : vector<1x72xf32> to vector<1x1xf32>
    %445 = vector.extract_strided_slice %418 {offsets = [5, 0], sizes = [1, 256], strides = [1, 1]} : vector<8x256xf32> to vector<1x256xf32>
    %446 = vector.broadcast %444 : vector<1x1xf32> to vector<1x256xf32>
    %447 = arith.mulf %445, %446 : vector<1x256xf32>
    %448 = arith.addf %443, %447 : vector<1x256xf32>
    %449 = vector.extract_strided_slice %368 {offsets = [0, 55], sizes = [1, 1], strides = [1, 1]} : vector<1x72xf32> to vector<1x1xf32>
    %450 = vector.extract_strided_slice %418 {offsets = [6, 0], sizes = [1, 256], strides = [1, 1]} : vector<8x256xf32> to vector<1x256xf32>
    %451 = vector.broadcast %449 : vector<1x1xf32> to vector<1x256xf32>
    %452 = arith.mulf %450, %451 : vector<1x256xf32>
    %453 = arith.addf %448, %452 : vector<1x256xf32>
    %454 = vector.extract_strided_slice %368 {offsets = [0, 64], sizes = [1, 1], strides = [1, 1]} : vector<1x72xf32> to vector<1x1xf32>
    %455 = vector.extract_strided_slice %418 {offsets = [7, 0], sizes = [1, 256], strides = [1, 1]} : vector<8x256xf32> to vector<1x256xf32>
    %456 = vector.broadcast %454 : vector<1x1xf32> to vector<1x256xf32>
    %457 = arith.mulf %455, %456 : vector<1x256xf32>
    %458 = arith.addf %453, %457 : vector<1x256xf32>
    %cst_40 = arith.constant 0.000000e+00 : f32
    %459 = vector.broadcast %cst_40 : f32 to vector<8x15xf32>
    %460 = vector.extract_strided_slice %367 {offsets = [0, 0], sizes = [8, 241], strides = [1, 1]} : vector<8x256xf32> to vector<8x241xf32>
    %461 = tpu.concatenate %459, %460 in 1 : vector<8x15xf32>, vector<8x241xf32> -> vector<8x256xf32>
    %462 = vector.broadcast %24 : vector<1x256xf32> to vector<8x256xf32>
    %463 = arith.mulf %461, %462 : vector<8x256xf32>
    %464 = vector.extract_strided_slice %368 {offsets = [0, 2], sizes = [1, 1], strides = [1, 1]} : vector<1x72xf32> to vector<1x1xf32>
    %465 = vector.extract_strided_slice %463 {offsets = [0, 0], sizes = [1, 256], strides = [1, 1]} : vector<8x256xf32> to vector<1x256xf32>
    %466 = vector.broadcast %464 : vector<1x1xf32> to vector<1x256xf32>
    %467 = arith.mulf %465, %466 : vector<1x256xf32>
    %468 = arith.addf %458, %467 : vector<1x256xf32>
    %469 = vector.extract_strided_slice %368 {offsets = [0, 11], sizes = [1, 1], strides = [1, 1]} : vector<1x72xf32> to vector<1x1xf32>
    %470 = vector.extract_strided_slice %463 {offsets = [1, 0], sizes = [1, 256], strides = [1, 1]} : vector<8x256xf32> to vector<1x256xf32>
    %471 = vector.broadcast %469 : vector<1x1xf32> to vector<1x256xf32>
    %472 = arith.mulf %470, %471 : vector<1x256xf32>
    %473 = arith.addf %468, %472 : vector<1x256xf32>
    %474 = vector.extract_strided_slice %368 {offsets = [0, 20], sizes = [1, 1], strides = [1, 1]} : vector<1x72xf32> to vector<1x1xf32>
    %475 = vector.extract_strided_slice %463 {offsets = [2, 0], sizes = [1, 256], strides = [1, 1]} : vector<8x256xf32> to vector<1x256xf32>
    %476 = vector.broadcast %474 : vector<1x1xf32> to vector<1x256xf32>
    %477 = arith.mulf %475, %476 : vector<1x256xf32>
    %478 = arith.addf %473, %477 : vector<1x256xf32>
    %479 = vector.extract_strided_slice %368 {offsets = [0, 29], sizes = [1, 1], strides = [1, 1]} : vector<1x72xf32> to vector<1x1xf32>
    %480 = vector.extract_strided_slice %463 {offsets = [3, 0], sizes = [1, 256], strides = [1, 1]} : vector<8x256xf32> to vector<1x256xf32>
    %481 = vector.broadcast %479 : vector<1x1xf32> to vector<1x256xf32>
    %482 = arith.mulf %480, %481 : vector<1x256xf32>
    %483 = arith.addf %478, %482 : vector<1x256xf32>
    %484 = vector.extract_strided_slice %368 {offsets = [0, 38], sizes = [1, 1], strides = [1, 1]} : vector<1x72xf32> to vector<1x1xf32>
    %485 = vector.extract_strided_slice %463 {offsets = [4, 0], sizes = [1, 256], strides = [1, 1]} : vector<8x256xf32> to vector<1x256xf32>
    %486 = vector.broadcast %484 : vector<1x1xf32> to vector<1x256xf32>
    %487 = arith.mulf %485, %486 : vector<1x256xf32>
    %488 = arith.addf %483, %487 : vector<1x256xf32>
    %489 = vector.extract_strided_slice %368 {offsets = [0, 47], sizes = [1, 1], strides = [1, 1]} : vector<1x72xf32> to vector<1x1xf32>
    %490 = vector.extract_strided_slice %463 {offsets = [5, 0], sizes = [1, 256], strides = [1, 1]} : vector<8x256xf32> to vector<1x256xf32>
    %491 = vector.broadcast %489 : vector<1x1xf32> to vector<1x256xf32>
    %492 = arith.mulf %490, %491 : vector<1x256xf32>
    %493 = arith.addf %488, %492 : vector<1x256xf32>
    %494 = vector.extract_strided_slice %368 {offsets = [0, 56], sizes = [1, 1], strides = [1, 1]} : vector<1x72xf32> to vector<1x1xf32>
    %495 = vector.extract_strided_slice %463 {offsets = [6, 0], sizes = [1, 256], strides = [1, 1]} : vector<8x256xf32> to vector<1x256xf32>
    %496 = vector.broadcast %494 : vector<1x1xf32> to vector<1x256xf32>
    %497 = arith.mulf %495, %496 : vector<1x256xf32>
    %498 = arith.addf %493, %497 : vector<1x256xf32>
    %499 = vector.extract_strided_slice %368 {offsets = [0, 65], sizes = [1, 1], strides = [1, 1]} : vector<1x72xf32> to vector<1x1xf32>
    %500 = vector.extract_strided_slice %463 {offsets = [7, 0], sizes = [1, 256], strides = [1, 1]} : vector<8x256xf32> to vector<1x256xf32>
    %501 = vector.broadcast %499 : vector<1x1xf32> to vector<1x256xf32>
    %502 = arith.mulf %500, %501 : vector<1x256xf32>
    %503 = arith.addf %498, %502 : vector<1x256xf32>
    %cst_41 = arith.constant 0.000000e+00 : f32
    %504 = vector.broadcast %cst_41 : f32 to vector<8x1xf32>
    %505 = vector.extract_strided_slice %367 {offsets = [0, 0], sizes = [8, 255], strides = [1, 1]} : vector<8x256xf32> to vector<8x255xf32>
    %506 = tpu.concatenate %504, %505 in 1 : vector<8x1xf32>, vector<8x255xf32> -> vector<8x256xf32>
    %507 = vector.broadcast %20 : vector<1x256xf32> to vector<8x256xf32>
    %508 = arith.mulf %506, %507 : vector<8x256xf32>
    %509 = vector.extract_strided_slice %368 {offsets = [0, 3], sizes = [1, 1], strides = [1, 1]} : vector<1x72xf32> to vector<1x1xf32>
    %510 = vector.extract_strided_slice %508 {offsets = [0, 0], sizes = [1, 256], strides = [1, 1]} : vector<8x256xf32> to vector<1x256xf32>
    %511 = vector.broadcast %509 : vector<1x1xf32> to vector<1x256xf32>
    %512 = arith.mulf %510, %511 : vector<1x256xf32>
    %513 = arith.addf %503, %512 : vector<1x256xf32>
    %514 = vector.extract_strided_slice %368 {offsets = [0, 12], sizes = [1, 1], strides = [1, 1]} : vector<1x72xf32> to vector<1x1xf32>
    %515 = vector.extract_strided_slice %508 {offsets = [1, 0], sizes = [1, 256], strides = [1, 1]} : vector<8x256xf32> to vector<1x256xf32>
    %516 = vector.broadcast %514 : vector<1x1xf32> to vector<1x256xf32>
    %517 = arith.mulf %515, %516 : vector<1x256xf32>
    %518 = arith.addf %513, %517 : vector<1x256xf32>
    %519 = vector.extract_strided_slice %368 {offsets = [0, 21], sizes = [1, 1], strides = [1, 1]} : vector<1x72xf32> to vector<1x1xf32>
    %520 = vector.extract_strided_slice %508 {offsets = [2, 0], sizes = [1, 256], strides = [1, 1]} : vector<8x256xf32> to vector<1x256xf32>
    %521 = vector.broadcast %519 : vector<1x1xf32> to vector<1x256xf32>
    %522 = arith.mulf %520, %521 : vector<1x256xf32>
    %523 = arith.addf %518, %522 : vector<1x256xf32>
    %524 = vector.extract_strided_slice %368 {offsets = [0, 30], sizes = [1, 1], strides = [1, 1]} : vector<1x72xf32> to vector<1x1xf32>
    %525 = vector.extract_strided_slice %508 {offsets = [3, 0], sizes = [1, 256], strides = [1, 1]} : vector<8x256xf32> to vector<1x256xf32>
    %526 = vector.broadcast %524 : vector<1x1xf32> to vector<1x256xf32>
    %527 = arith.mulf %525, %526 : vector<1x256xf32>
    %528 = arith.addf %523, %527 : vector<1x256xf32>
    %529 = vector.extract_strided_slice %368 {offsets = [0, 39], sizes = [1, 1], strides = [1, 1]} : vector<1x72xf32> to vector<1x1xf32>
    %530 = vector.extract_strided_slice %508 {offsets = [4, 0], sizes = [1, 256], strides = [1, 1]} : vector<8x256xf32> to vector<1x256xf32>
    %531 = vector.broadcast %529 : vector<1x1xf32> to vector<1x256xf32>
    %532 = arith.mulf %530, %531 : vector<1x256xf32>
    %533 = arith.addf %528, %532 : vector<1x256xf32>
    %534 = vector.extract_strided_slice %368 {offsets = [0, 48], sizes = [1, 1], strides = [1, 1]} : vector<1x72xf32> to vector<1x1xf32>
    %535 = vector.extract_strided_slice %508 {offsets = [5, 0], sizes = [1, 256], strides = [1, 1]} : vector<8x256xf32> to vector<1x256xf32>
    %536 = vector.broadcast %534 : vector<1x1xf32> to vector<1x256xf32>
    %537 = arith.mulf %535, %536 : vector<1x256xf32>
    %538 = arith.addf %533, %537 : vector<1x256xf32>
    %539 = vector.extract_strided_slice %368 {offsets = [0, 57], sizes = [1, 1], strides = [1, 1]} : vector<1x72xf32> to vector<1x1xf32>
    %540 = vector.extract_strided_slice %508 {offsets = [6, 0], sizes = [1, 256], strides = [1, 1]} : vector<8x256xf32> to vector<1x256xf32>
    %541 = vector.broadcast %539 : vector<1x1xf32> to vector<1x256xf32>
    %542 = arith.mulf %540, %541 : vector<1x256xf32>
    %543 = arith.addf %538, %542 : vector<1x256xf32>
    %544 = vector.extract_strided_slice %368 {offsets = [0, 66], sizes = [1, 1], strides = [1, 1]} : vector<1x72xf32> to vector<1x1xf32>
    %545 = vector.extract_strided_slice %508 {offsets = [7, 0], sizes = [1, 256], strides = [1, 1]} : vector<8x256xf32> to vector<1x256xf32>
    %546 = vector.broadcast %544 : vector<1x1xf32> to vector<1x256xf32>
    %547 = arith.mulf %545, %546 : vector<1x256xf32>
    %548 = arith.addf %543, %547 : vector<1x256xf32>
    %549 = vector.extract_strided_slice %368 {offsets = [0, 4], sizes = [1, 1], strides = [1, 1]} : vector<1x72xf32> to vector<1x1xf32>
    %550 = vector.extract_strided_slice %367 {offsets = [0, 0], sizes = [1, 256], strides = [1, 1]} : vector<8x256xf32> to vector<1x256xf32>
    %551 = vector.broadcast %549 : vector<1x1xf32> to vector<1x256xf32>
    %552 = arith.mulf %550, %551 : vector<1x256xf32>
    %553 = arith.addf %548, %552 : vector<1x256xf32>
    %554 = vector.extract_strided_slice %368 {offsets = [0, 13], sizes = [1, 1], strides = [1, 1]} : vector<1x72xf32> to vector<1x1xf32>
    %555 = vector.extract_strided_slice %367 {offsets = [1, 0], sizes = [1, 256], strides = [1, 1]} : vector<8x256xf32> to vector<1x256xf32>
    %556 = vector.broadcast %554 : vector<1x1xf32> to vector<1x256xf32>
    %557 = arith.mulf %555, %556 : vector<1x256xf32>
    %558 = arith.addf %553, %557 : vector<1x256xf32>
    %559 = vector.extract_strided_slice %368 {offsets = [0, 22], sizes = [1, 1], strides = [1, 1]} : vector<1x72xf32> to vector<1x1xf32>
    %560 = vector.extract_strided_slice %367 {offsets = [2, 0], sizes = [1, 256], strides = [1, 1]} : vector<8x256xf32> to vector<1x256xf32>
    %561 = vector.broadcast %559 : vector<1x1xf32> to vector<1x256xf32>
    %562 = arith.mulf %560, %561 : vector<1x256xf32>
    %563 = arith.addf %558, %562 : vector<1x256xf32>
    %564 = vector.extract_strided_slice %368 {offsets = [0, 31], sizes = [1, 1], strides = [1, 1]} : vector<1x72xf32> to vector<1x1xf32>
    %565 = vector.extract_strided_slice %367 {offsets = [3, 0], sizes = [1, 256], strides = [1, 1]} : vector<8x256xf32> to vector<1x256xf32>
    %566 = vector.broadcast %564 : vector<1x1xf32> to vector<1x256xf32>
    %567 = arith.mulf %565, %566 : vector<1x256xf32>
    %568 = arith.addf %563, %567 : vector<1x256xf32>
    %569 = vector.extract_strided_slice %368 {offsets = [0, 40], sizes = [1, 1], strides = [1, 1]} : vector<1x72xf32> to vector<1x1xf32>
    %570 = vector.extract_strided_slice %367 {offsets = [4, 0], sizes = [1, 256], strides = [1, 1]} : vector<8x256xf32> to vector<1x256xf32>
    %571 = vector.broadcast %569 : vector<1x1xf32> to vector<1x256xf32>
    %572 = arith.mulf %570, %571 : vector<1x256xf32>
    %573 = arith.addf %568, %572 : vector<1x256xf32>
    %574 = vector.extract_strided_slice %368 {offsets = [0, 49], sizes = [1, 1], strides = [1, 1]} : vector<1x72xf32> to vector<1x1xf32>
    %575 = vector.extract_strided_slice %367 {offsets = [5, 0], sizes = [1, 256], strides = [1, 1]} : vector<8x256xf32> to vector<1x256xf32>
    %576 = vector.broadcast %574 : vector<1x1xf32> to vector<1x256xf32>
    %577 = arith.mulf %575, %576 : vector<1x256xf32>
    %578 = arith.addf %573, %577 : vector<1x256xf32>
    %579 = vector.extract_strided_slice %368 {offsets = [0, 58], sizes = [1, 1], strides = [1, 1]} : vector<1x72xf32> to vector<1x1xf32>
    %580 = vector.extract_strided_slice %367 {offsets = [6, 0], sizes = [1, 256], strides = [1, 1]} : vector<8x256xf32> to vector<1x256xf32>
    %581 = vector.broadcast %579 : vector<1x1xf32> to vector<1x256xf32>
    %582 = arith.mulf %580, %581 : vector<1x256xf32>
    %583 = arith.addf %578, %582 : vector<1x256xf32>
    %584 = vector.extract_strided_slice %368 {offsets = [0, 67], sizes = [1, 1], strides = [1, 1]} : vector<1x72xf32> to vector<1x1xf32>
    %585 = vector.extract_strided_slice %367 {offsets = [7, 0], sizes = [1, 256], strides = [1, 1]} : vector<8x256xf32> to vector<1x256xf32>
    %586 = vector.broadcast %584 : vector<1x1xf32> to vector<1x256xf32>
    %587 = arith.mulf %585, %586 : vector<1x256xf32>
    %588 = arith.addf %583, %587 : vector<1x256xf32>
    %cst_42 = arith.constant 0.000000e+00 : f32
    %589 = vector.broadcast %cst_42 : f32 to vector<8x1xf32>
    %590 = vector.extract_strided_slice %367 {offsets = [0, 1], sizes = [8, 255], strides = [1, 1]} : vector<8x256xf32> to vector<8x255xf32>
    %591 = tpu.concatenate %590, %589 in 1 : vector<8x255xf32>, vector<8x1xf32> -> vector<8x256xf32>
    %592 = vector.broadcast %24 : vector<1x256xf32> to vector<8x256xf32>
    %593 = arith.mulf %591, %592 : vector<8x256xf32>
    %594 = vector.extract_strided_slice %368 {offsets = [0, 5], sizes = [1, 1], strides = [1, 1]} : vector<1x72xf32> to vector<1x1xf32>
    %595 = vector.extract_strided_slice %593 {offsets = [0, 0], sizes = [1, 256], strides = [1, 1]} : vector<8x256xf32> to vector<1x256xf32>
    %596 = vector.broadcast %594 : vector<1x1xf32> to vector<1x256xf32>
    %597 = arith.mulf %595, %596 : vector<1x256xf32>
    %598 = arith.addf %588, %597 : vector<1x256xf32>
    %599 = vector.extract_strided_slice %368 {offsets = [0, 14], sizes = [1, 1], strides = [1, 1]} : vector<1x72xf32> to vector<1x1xf32>
    %600 = vector.extract_strided_slice %593 {offsets = [1, 0], sizes = [1, 256], strides = [1, 1]} : vector<8x256xf32> to vector<1x256xf32>
    %601 = vector.broadcast %599 : vector<1x1xf32> to vector<1x256xf32>
    %602 = arith.mulf %600, %601 : vector<1x256xf32>
    %603 = arith.addf %598, %602 : vector<1x256xf32>
    %604 = vector.extract_strided_slice %368 {offsets = [0, 23], sizes = [1, 1], strides = [1, 1]} : vector<1x72xf32> to vector<1x1xf32>
    %605 = vector.extract_strided_slice %593 {offsets = [2, 0], sizes = [1, 256], strides = [1, 1]} : vector<8x256xf32> to vector<1x256xf32>
    %606 = vector.broadcast %604 : vector<1x1xf32> to vector<1x256xf32>
    %607 = arith.mulf %605, %606 : vector<1x256xf32>
    %608 = arith.addf %603, %607 : vector<1x256xf32>
    %609 = vector.extract_strided_slice %368 {offsets = [0, 32], sizes = [1, 1], strides = [1, 1]} : vector<1x72xf32> to vector<1x1xf32>
    %610 = vector.extract_strided_slice %593 {offsets = [3, 0], sizes = [1, 256], strides = [1, 1]} : vector<8x256xf32> to vector<1x256xf32>
    %611 = vector.broadcast %609 : vector<1x1xf32> to vector<1x256xf32>
    %612 = arith.mulf %610, %611 : vector<1x256xf32>
    %613 = arith.addf %608, %612 : vector<1x256xf32>
    %614 = vector.extract_strided_slice %368 {offsets = [0, 41], sizes = [1, 1], strides = [1, 1]} : vector<1x72xf32> to vector<1x1xf32>
    %615 = vector.extract_strided_slice %593 {offsets = [4, 0], sizes = [1, 256], strides = [1, 1]} : vector<8x256xf32> to vector<1x256xf32>
    %616 = vector.broadcast %614 : vector<1x1xf32> to vector<1x256xf32>
    %617 = arith.mulf %615, %616 : vector<1x256xf32>
    %618 = arith.addf %613, %617 : vector<1x256xf32>
    %619 = vector.extract_strided_slice %368 {offsets = [0, 50], sizes = [1, 1], strides = [1, 1]} : vector<1x72xf32> to vector<1x1xf32>
    %620 = vector.extract_strided_slice %593 {offsets = [5, 0], sizes = [1, 256], strides = [1, 1]} : vector<8x256xf32> to vector<1x256xf32>
    %621 = vector.broadcast %619 : vector<1x1xf32> to vector<1x256xf32>
    %622 = arith.mulf %620, %621 : vector<1x256xf32>
    %623 = arith.addf %618, %622 : vector<1x256xf32>
    %624 = vector.extract_strided_slice %368 {offsets = [0, 59], sizes = [1, 1], strides = [1, 1]} : vector<1x72xf32> to vector<1x1xf32>
    %625 = vector.extract_strided_slice %593 {offsets = [6, 0], sizes = [1, 256], strides = [1, 1]} : vector<8x256xf32> to vector<1x256xf32>
    %626 = vector.broadcast %624 : vector<1x1xf32> to vector<1x256xf32>
    %627 = arith.mulf %625, %626 : vector<1x256xf32>
    %628 = arith.addf %623, %627 : vector<1x256xf32>
    %629 = vector.extract_strided_slice %368 {offsets = [0, 68], sizes = [1, 1], strides = [1, 1]} : vector<1x72xf32> to vector<1x1xf32>
    %630 = vector.extract_strided_slice %593 {offsets = [7, 0], sizes = [1, 256], strides = [1, 1]} : vector<8x256xf32> to vector<1x256xf32>
    %631 = vector.broadcast %629 : vector<1x1xf32> to vector<1x256xf32>
    %632 = arith.mulf %630, %631 : vector<1x256xf32>
    %633 = arith.addf %628, %632 : vector<1x256xf32>
    %cst_43 = arith.constant 0.000000e+00 : f32
    %634 = vector.broadcast %cst_43 : f32 to vector<8x15xf32>
    %635 = vector.extract_strided_slice %367 {offsets = [0, 15], sizes = [8, 241], strides = [1, 1]} : vector<8x256xf32> to vector<8x241xf32>
    %636 = tpu.concatenate %635, %634 in 1 : vector<8x241xf32>, vector<8x15xf32> -> vector<8x256xf32>
    %637 = vector.broadcast %20 : vector<1x256xf32> to vector<8x256xf32>
    %638 = arith.mulf %636, %637 : vector<8x256xf32>
    %639 = vector.extract_strided_slice %368 {offsets = [0, 6], sizes = [1, 1], strides = [1, 1]} : vector<1x72xf32> to vector<1x1xf32>
    %640 = vector.extract_strided_slice %638 {offsets = [0, 0], sizes = [1, 256], strides = [1, 1]} : vector<8x256xf32> to vector<1x256xf32>
    %641 = vector.broadcast %639 : vector<1x1xf32> to vector<1x256xf32>
    %642 = arith.mulf %640, %641 : vector<1x256xf32>
    %643 = arith.addf %633, %642 : vector<1x256xf32>
    %644 = vector.extract_strided_slice %368 {offsets = [0, 15], sizes = [1, 1], strides = [1, 1]} : vector<1x72xf32> to vector<1x1xf32>
    %645 = vector.extract_strided_slice %638 {offsets = [1, 0], sizes = [1, 256], strides = [1, 1]} : vector<8x256xf32> to vector<1x256xf32>
    %646 = vector.broadcast %644 : vector<1x1xf32> to vector<1x256xf32>
    %647 = arith.mulf %645, %646 : vector<1x256xf32>
    %648 = arith.addf %643, %647 : vector<1x256xf32>
    %649 = vector.extract_strided_slice %368 {offsets = [0, 24], sizes = [1, 1], strides = [1, 1]} : vector<1x72xf32> to vector<1x1xf32>
    %650 = vector.extract_strided_slice %638 {offsets = [2, 0], sizes = [1, 256], strides = [1, 1]} : vector<8x256xf32> to vector<1x256xf32>
    %651 = vector.broadcast %649 : vector<1x1xf32> to vector<1x256xf32>
    %652 = arith.mulf %650, %651 : vector<1x256xf32>
    %653 = arith.addf %648, %652 : vector<1x256xf32>
    %654 = vector.extract_strided_slice %368 {offsets = [0, 33], sizes = [1, 1], strides = [1, 1]} : vector<1x72xf32> to vector<1x1xf32>
    %655 = vector.extract_strided_slice %638 {offsets = [3, 0], sizes = [1, 256], strides = [1, 1]} : vector<8x256xf32> to vector<1x256xf32>
    %656 = vector.broadcast %654 : vector<1x1xf32> to vector<1x256xf32>
    %657 = arith.mulf %655, %656 : vector<1x256xf32>
    %658 = arith.addf %653, %657 : vector<1x256xf32>
    %659 = vector.extract_strided_slice %368 {offsets = [0, 42], sizes = [1, 1], strides = [1, 1]} : vector<1x72xf32> to vector<1x1xf32>
    %660 = vector.extract_strided_slice %638 {offsets = [4, 0], sizes = [1, 256], strides = [1, 1]} : vector<8x256xf32> to vector<1x256xf32>
    %661 = vector.broadcast %659 : vector<1x1xf32> to vector<1x256xf32>
    %662 = arith.mulf %660, %661 : vector<1x256xf32>
    %663 = arith.addf %658, %662 : vector<1x256xf32>
    %664 = vector.extract_strided_slice %368 {offsets = [0, 51], sizes = [1, 1], strides = [1, 1]} : vector<1x72xf32> to vector<1x1xf32>
    %665 = vector.extract_strided_slice %638 {offsets = [5, 0], sizes = [1, 256], strides = [1, 1]} : vector<8x256xf32> to vector<1x256xf32>
    %666 = vector.broadcast %664 : vector<1x1xf32> to vector<1x256xf32>
    %667 = arith.mulf %665, %666 : vector<1x256xf32>
    %668 = arith.addf %663, %667 : vector<1x256xf32>
    %669 = vector.extract_strided_slice %368 {offsets = [0, 60], sizes = [1, 1], strides = [1, 1]} : vector<1x72xf32> to vector<1x1xf32>
    %670 = vector.extract_strided_slice %638 {offsets = [6, 0], sizes = [1, 256], strides = [1, 1]} : vector<8x256xf32> to vector<1x256xf32>
    %671 = vector.broadcast %669 : vector<1x1xf32> to vector<1x256xf32>
    %672 = arith.mulf %670, %671 : vector<1x256xf32>
    %673 = arith.addf %668, %672 : vector<1x256xf32>
    %674 = vector.extract_strided_slice %368 {offsets = [0, 69], sizes = [1, 1], strides = [1, 1]} : vector<1x72xf32> to vector<1x1xf32>
    %675 = vector.extract_strided_slice %638 {offsets = [7, 0], sizes = [1, 256], strides = [1, 1]} : vector<8x256xf32> to vector<1x256xf32>
    %676 = vector.broadcast %674 : vector<1x1xf32> to vector<1x256xf32>
    %677 = arith.mulf %675, %676 : vector<1x256xf32>
    %678 = arith.addf %673, %677 : vector<1x256xf32>
    %cst_44 = arith.constant 0.000000e+00 : f32
    %679 = vector.broadcast %cst_44 : f32 to vector<8x16xf32>
    %680 = vector.extract_strided_slice %367 {offsets = [0, 16], sizes = [8, 240], strides = [1, 1]} : vector<8x256xf32> to vector<8x240xf32>
    %681 = tpu.concatenate %680, %679 in 1 : vector<8x240xf32>, vector<8x16xf32> -> vector<8x256xf32>
    %682 = vector.extract_strided_slice %368 {offsets = [0, 7], sizes = [1, 1], strides = [1, 1]} : vector<1x72xf32> to vector<1x1xf32>
    %683 = vector.extract_strided_slice %681 {offsets = [0, 0], sizes = [1, 256], strides = [1, 1]} : vector<8x256xf32> to vector<1x256xf32>
    %684 = vector.broadcast %682 : vector<1x1xf32> to vector<1x256xf32>
    %685 = arith.mulf %683, %684 : vector<1x256xf32>
    %686 = arith.addf %678, %685 : vector<1x256xf32>
    %687 = vector.extract_strided_slice %368 {offsets = [0, 16], sizes = [1, 1], strides = [1, 1]} : vector<1x72xf32> to vector<1x1xf32>
    %688 = vector.extract_strided_slice %681 {offsets = [1, 0], sizes = [1, 256], strides = [1, 1]} : vector<8x256xf32> to vector<1x256xf32>
    %689 = vector.broadcast %687 : vector<1x1xf32> to vector<1x256xf32>
    %690 = arith.mulf %688, %689 : vector<1x256xf32>
    %691 = arith.addf %686, %690 : vector<1x256xf32>
    %692 = vector.extract_strided_slice %368 {offsets = [0, 25], sizes = [1, 1], strides = [1, 1]} : vector<1x72xf32> to vector<1x1xf32>
    %693 = vector.extract_strided_slice %681 {offsets = [2, 0], sizes = [1, 256], strides = [1, 1]} : vector<8x256xf32> to vector<1x256xf32>
    %694 = vector.broadcast %692 : vector<1x1xf32> to vector<1x256xf32>
    %695 = arith.mulf %693, %694 : vector<1x256xf32>
    %696 = arith.addf %691, %695 : vector<1x256xf32>
    %697 = vector.extract_strided_slice %368 {offsets = [0, 34], sizes = [1, 1], strides = [1, 1]} : vector<1x72xf32> to vector<1x1xf32>
    %698 = vector.extract_strided_slice %681 {offsets = [3, 0], sizes = [1, 256], strides = [1, 1]} : vector<8x256xf32> to vector<1x256xf32>
    %699 = vector.broadcast %697 : vector<1x1xf32> to vector<1x256xf32>
    %700 = arith.mulf %698, %699 : vector<1x256xf32>
    %701 = arith.addf %696, %700 : vector<1x256xf32>
    %702 = vector.extract_strided_slice %368 {offsets = [0, 43], sizes = [1, 1], strides = [1, 1]} : vector<1x72xf32> to vector<1x1xf32>
    %703 = vector.extract_strided_slice %681 {offsets = [4, 0], sizes = [1, 256], strides = [1, 1]} : vector<8x256xf32> to vector<1x256xf32>
    %704 = vector.broadcast %702 : vector<1x1xf32> to vector<1x256xf32>
    %705 = arith.mulf %703, %704 : vector<1x256xf32>
    %706 = arith.addf %701, %705 : vector<1x256xf32>
    %707 = vector.extract_strided_slice %368 {offsets = [0, 52], sizes = [1, 1], strides = [1, 1]} : vector<1x72xf32> to vector<1x1xf32>
    %708 = vector.extract_strided_slice %681 {offsets = [5, 0], sizes = [1, 256], strides = [1, 1]} : vector<8x256xf32> to vector<1x256xf32>
    %709 = vector.broadcast %707 : vector<1x1xf32> to vector<1x256xf32>
    %710 = arith.mulf %708, %709 : vector<1x256xf32>
    %711 = arith.addf %706, %710 : vector<1x256xf32>
    %712 = vector.extract_strided_slice %368 {offsets = [0, 61], sizes = [1, 1], strides = [1, 1]} : vector<1x72xf32> to vector<1x1xf32>
    %713 = vector.extract_strided_slice %681 {offsets = [6, 0], sizes = [1, 256], strides = [1, 1]} : vector<8x256xf32> to vector<1x256xf32>
    %714 = vector.broadcast %712 : vector<1x1xf32> to vector<1x256xf32>
    %715 = arith.mulf %713, %714 : vector<1x256xf32>
    %716 = arith.addf %711, %715 : vector<1x256xf32>
    %717 = vector.extract_strided_slice %368 {offsets = [0, 70], sizes = [1, 1], strides = [1, 1]} : vector<1x72xf32> to vector<1x1xf32>
    %718 = vector.extract_strided_slice %681 {offsets = [7, 0], sizes = [1, 256], strides = [1, 1]} : vector<8x256xf32> to vector<1x256xf32>
    %719 = vector.broadcast %717 : vector<1x1xf32> to vector<1x256xf32>
    %720 = arith.mulf %718, %719 : vector<1x256xf32>
    %721 = arith.addf %716, %720 : vector<1x256xf32>
    %cst_45 = arith.constant 0.000000e+00 : f32
    %722 = vector.broadcast %cst_45 : f32 to vector<8x17xf32>
    %723 = vector.extract_strided_slice %367 {offsets = [0, 17], sizes = [8, 239], strides = [1, 1]} : vector<8x256xf32> to vector<8x239xf32>
    %724 = tpu.concatenate %723, %722 in 1 : vector<8x239xf32>, vector<8x17xf32> -> vector<8x256xf32>
    %725 = vector.broadcast %24 : vector<1x256xf32> to vector<8x256xf32>
    %726 = arith.mulf %724, %725 : vector<8x256xf32>
    %727 = vector.extract_strided_slice %368 {offsets = [0, 8], sizes = [1, 1], strides = [1, 1]} : vector<1x72xf32> to vector<1x1xf32>
    %728 = vector.extract_strided_slice %726 {offsets = [0, 0], sizes = [1, 256], strides = [1, 1]} : vector<8x256xf32> to vector<1x256xf32>
    %729 = vector.broadcast %727 : vector<1x1xf32> to vector<1x256xf32>
    %730 = arith.mulf %728, %729 : vector<1x256xf32>
    %731 = arith.addf %721, %730 : vector<1x256xf32>
    %732 = vector.extract_strided_slice %368 {offsets = [0, 17], sizes = [1, 1], strides = [1, 1]} : vector<1x72xf32> to vector<1x1xf32>
    %733 = vector.extract_strided_slice %726 {offsets = [1, 0], sizes = [1, 256], strides = [1, 1]} : vector<8x256xf32> to vector<1x256xf32>
    %734 = vector.broadcast %732 : vector<1x1xf32> to vector<1x256xf32>
    %735 = arith.mulf %733, %734 : vector<1x256xf32>
    %736 = arith.addf %731, %735 : vector<1x256xf32>
    %737 = vector.extract_strided_slice %368 {offsets = [0, 26], sizes = [1, 1], strides = [1, 1]} : vector<1x72xf32> to vector<1x1xf32>
    %738 = vector.extract_strided_slice %726 {offsets = [2, 0], sizes = [1, 256], strides = [1, 1]} : vector<8x256xf32> to vector<1x256xf32>
    %739 = vector.broadcast %737 : vector<1x1xf32> to vector<1x256xf32>
    %740 = arith.mulf %738, %739 : vector<1x256xf32>
    %741 = arith.addf %736, %740 : vector<1x256xf32>
    %742 = vector.extract_strided_slice %368 {offsets = [0, 35], sizes = [1, 1], strides = [1, 1]} : vector<1x72xf32> to vector<1x1xf32>
    %743 = vector.extract_strided_slice %726 {offsets = [3, 0], sizes = [1, 256], strides = [1, 1]} : vector<8x256xf32> to vector<1x256xf32>
    %744 = vector.broadcast %742 : vector<1x1xf32> to vector<1x256xf32>
    %745 = arith.mulf %743, %744 : vector<1x256xf32>
    %746 = arith.addf %741, %745 : vector<1x256xf32>
    %747 = vector.extract_strided_slice %368 {offsets = [0, 44], sizes = [1, 1], strides = [1, 1]} : vector<1x72xf32> to vector<1x1xf32>
    %748 = vector.extract_strided_slice %726 {offsets = [4, 0], sizes = [1, 256], strides = [1, 1]} : vector<8x256xf32> to vector<1x256xf32>
    %749 = vector.broadcast %747 : vector<1x1xf32> to vector<1x256xf32>
    %750 = arith.mulf %748, %749 : vector<1x256xf32>
    %751 = arith.addf %746, %750 : vector<1x256xf32>
    %752 = vector.extract_strided_slice %368 {offsets = [0, 53], sizes = [1, 1], strides = [1, 1]} : vector<1x72xf32> to vector<1x1xf32>
    %753 = vector.extract_strided_slice %726 {offsets = [5, 0], sizes = [1, 256], strides = [1, 1]} : vector<8x256xf32> to vector<1x256xf32>
    %754 = vector.broadcast %752 : vector<1x1xf32> to vector<1x256xf32>
    %755 = arith.mulf %753, %754 : vector<1x256xf32>
    %756 = arith.addf %751, %755 : vector<1x256xf32>
    %757 = vector.extract_strided_slice %368 {offsets = [0, 62], sizes = [1, 1], strides = [1, 1]} : vector<1x72xf32> to vector<1x1xf32>
    %758 = vector.extract_strided_slice %726 {offsets = [6, 0], sizes = [1, 256], strides = [1, 1]} : vector<8x256xf32> to vector<1x256xf32>
    %759 = vector.broadcast %757 : vector<1x1xf32> to vector<1x256xf32>
    %760 = arith.mulf %758, %759 : vector<1x256xf32>
    %761 = arith.addf %756, %760 : vector<1x256xf32>
    %762 = vector.extract_strided_slice %368 {offsets = [0, 71], sizes = [1, 1], strides = [1, 1]} : vector<1x72xf32> to vector<1x1xf32>
    %763 = vector.extract_strided_slice %726 {offsets = [7, 0], sizes = [1, 256], strides = [1, 1]} : vector<8x256xf32> to vector<1x256xf32>
    %764 = vector.broadcast %762 : vector<1x1xf32> to vector<1x256xf32>
    %765 = arith.mulf %763, %764 : vector<1x256xf32>
    %766 = arith.addf %761, %765 : vector<1x256xf32>
    %767 = vector.broadcast %369 : vector<1x1xf32> to vector<1x256xf32>
    %768 = arith.addf %766, %767 : vector<1x256xf32>
    %cst_46 = arith.constant 0.000000e+00 : f32
    %769 = vector.broadcast %cst_46 : f32 to vector<1x256xf32>
    %770 = arith.maximumf %768, %769 : vector<1x256xf32>
    %c0_47 = arith.constant 0 : index
    %c0_48 = arith.constant 0 : index
    %c0_49 = arith.constant 0 : index
    %771 = vector.load %arg8[%c0_47, %c0_48, %c0_49] : memref<1x1x256xf32, #tpu.memory_space<vmem>>, vector<1x1x256xf32>
    %772 = vector.shape_cast %771 : vector<1x1x256xf32> to vector<1x256xf32>
    %773 = vector.shape_cast %770 : vector<1x256xf32> to vector<1x1x256xf32>
    tpu.vector_store %arg8[%c0_47, %c0_48, %c0_49], %773 {strides = array<i32>} : memref<1x1x256xf32, #tpu.memory_space<vmem>>, vector<1x1x256xf32>,
    return
  }
  func.func @transform_0(%arg0: i32) -> (i32, i32, i32) {
    %c0_i32 = arith.constant 0 : i32
    %c0_i32_0 = arith.constant 0 : i32
    %c0_i32_1 = arith.constant 0 : i32
    return %arg0, %c0_i32, %c0_i32_0 : i32, i32, i32
  }
  func.func @transform_1(%arg0: i32) -> (i32, i32) {
    %c0_i32 = arith.constant 0 : i32
    %c0_i32_0 = arith.constant 0 : i32
    %c0_i32_1 = arith.constant 0 : i32
    return %c0_i32, %c0_i32_0 : i32, i32
  }
  func.func @transform_2(%arg0: i32) -> (i32, i32) {
    %c0_i32 = arith.constant 0 : i32
    %c0_i32_0 = arith.constant 0 : i32
    %c0_i32_1 = arith.constant 0 : i32
    return %c0_i32, %c0_i32_0 : i32, i32
  }
  func.func @transform_3(%arg0: i32) -> (i32, i32) {
    %c0_i32 = arith.constant 0 : i32
    %c0_i32_0 = arith.constant 0 : i32
    %c0_i32_1 = arith.constant 0 : i32
    return %c0_i32, %c0_i32_0 : i32, i32
  }
  func.func @transform_4(%arg0: i32) -> (i32, i32) {
    %c0_i32 = arith.constant 0 : i32
    %c0_i32_0 = arith.constant 0 : i32
    %c0_i32_1 = arith.constant 0 : i32
    return %c0_i32, %c0_i32_0 : i32, i32
  }
  func.func @transform_5(%arg0: i32) -> (i32, i32) {
    %c0_i32 = arith.constant 0 : i32
    %c0_i32_0 = arith.constant 0 : i32
    %c0_i32_1 = arith.constant 0 : i32
    return %c0_i32, %c0_i32_0 : i32, i32
  }
  func.func @transform_6(%arg0: i32) -> (i32, i32) {
    %c0_i32 = arith.constant 0 : i32
    %c0_i32_0 = arith.constant 0 : i32
    %c0_i32_1 = arith.constant 0 : i32
    return %c0_i32, %c0_i32_0 : i32, i32
  }
  func.func @transform_7(%arg0: i32) -> (i32, i32, i32) {
    %c0_i32 = arith.constant 0 : i32
    %c0_i32_0 = arith.constant 0 : i32
    %c0_i32_1 = arith.constant 0 : i32
    return %arg0, %c0_i32, %c0_i32_0 : i32, i32, i32
  }
}

</mosaic_0001>

<llo_original>
// kernel: tpu_custom_call.1
$region0: #{tpu_custom_call.1}
  #allocation0 [shape = 'u32[]', space=smem, size = 0x4, offset = 0x4, fixed_abs, tag = 'smem constant byte address 0x4 - core index']
  #allocation1 [shape = 'u32[144,128]{1,0:T(1,128)}', space=vmem, size = 0x12000, scoped, tag = 'internal scratch']
  #allocation2 [shape = 'f32[1,1]{1,0:T(1,128)S(1)}', space=vmem, size = 0x200, scoped, tag = 'scoped memory for tpu_custom_call.1']
  %s0 = inlined_call_operand.vmem [shape: f32[2,1,256], index: 0, kind: input, shape index: {}]
  %s1 = inlined_call_operand.vmem [shape: f32[4,9], index: 1, kind: input, shape index: {}]
  %s2 = inlined_call_operand.vmem [shape: f32[4,1], index: 2, kind: input, shape index: {}]
  %s3 = inlined_call_operand.vmem [shape: f32[8,36], index: 3, kind: input, shape index: {}]
  %s4 = inlined_call_operand.vmem [shape: f32[8,1], index: 4, kind: input, shape index: {}]
  %s5 = inlined_call_operand.vmem [shape: f32[1,72], index: 5, kind: input, shape index: {}]
  %s6 = inlined_call_operand.<no memory space> [shape: f32[1,1], index: 6, kind: input, shape index: {}]
  %s7 = inlined_call_operand.hbm [shape: f32[2,1,256], index: 7, kind: output, shape index: {}]
  %s8 = sld [smem:[#allocation0]]
  $region61: #{tpu_custom_call.1} parent=0
    _
  %s10 = ssub.s32 1, %s8
  %s11 = scalar_select 0, %s10, %s8
  %v12 = vstv %s6
  %13 = vst [vmem:[#allocation2] sm:$0x1] %v12
  $region1: #{tpu_custom_call.1} parent=0
    #allocation3 [shape = 'u8[2048]{0}', space=vmem, size = 0x800, scoped, tag = 'output window, operand 0']
    #allocation4 [shape = 's32[2]{0}', space=sflag, size = 0x8, scoped, tag = 'scoped memory for tpu_custom_call.1']
    %14 = vsyncpa [#allocation4], 0
    %s15 = scalar_lea.sflag [#allocation4], 1
    %16 = vsyncpa %s15, 0
    loop: start=0, step=1, limit=4
    $region2: #{tpu_custom_call.1} parent=1 // loop_pre_header
      _
    $region3: #{tpu_custom_call.1} parent=1 // loop_header
      %s18 = sphi 0, %s22
      %p19 = scmp.ge.s32.totalorder %s18, 4
      %s28 = sphi 0, %s30
      %s31 = sphi 0, %s28
      %s32 = sphi 0, %s31
      %s48 = sphi 0, %s32
      %s52 = sphi 0, %s52
      %s54 = sphi 0, %s52
      %s55 = sphi 0, %s54
      %s69 = sphi 0, %s55
      %s73 = sphi 0, %s73
      %s75 = sphi 0, %s73
      %s76 = sphi 0, %s75
      %s90 = sphi 0, %s76
      %s94 = sphi 0, %s94
      %s96 = sphi 0, %s94
      %s97 = sphi 0, %s96
      %s111 = sphi 0, %s97
      %s115 = sphi 0, %s115
      %s117 = sphi 0, %s115
      %s118 = sphi 0, %s117
      %s132 = sphi 0, %s118
      %s136 = sphi 0, %s136
      %s138 = sphi 0, %s136
      %s139 = sphi 0, %s138
      %s153 = sphi 0, %s139
      %s157 = sphi 0, %s157
      %s159 = sphi 0, %s157
      %s160 = sphi 0, %s159
      %s174 = sphi 0, %s160
      %s180 = sphi 0, %s182
      %s183 = sphi 0, %s180
      %s184 = sphi 0, %s183
      %s200 = sphi 0, %s184
    $region4: #{tpu_custom_call.1} parent=1 // loop_header_branch
      %21 = sbr.rel (%p19) target = $region8
    $region5: #{tpu_custom_call.1} parent=1 // loop_body
      %s23 = ssub.s32 %s18, 1
      %s24 = ssub.s32 %s18, 2
      %s25 = sadd.s32 %s18, 1
      %s26 = ssub.s32 %s18, %s25
      %p27 = scmp.eq.s32.totalorder %s26, 0
      %s29 = sadd.s32 %s28, 1
      %s30 = scalar_select %p27, %s28, %s29
      %p33 = pneg %p27
      %p34 = scmp.eq.s32.totalorder %s18, 1
      %p35 = por %p33, %p34
      %p36 = scmp.ne.s32.totalorder %s28, %s31
      %p37 = scmp.eq.s32.totalorder %s18, 0
      %p38 = por %p36, %p37
      %p39 = scmp.ne.s32.totalorder %s28, %s31
      %p40 = scmp.eq.s32.totalorder %s23, 1
      %p41 = por %p39, %p40
      %p42 = scmp.ne.s32.totalorder %s31, %s32
      %p43 = scmp.eq.s32.totalorder %s23, 0
      %p44 = por %p42, %p43
      %p45 = scmp.ne.s32.totalorder %s31, %s32
      %p46 = scmp.eq.s32.totalorder %s24, 1
      %p47 = por %p45, %p46
      %p49 = scmp.ne.s32.totalorder %s32, %s48
      %p50 = scmp.eq.s32.totalorder %s24, 0
      %p51 = por %p49, %p50
      %s53 = sadd.s32 %s52, 1
      %p56 = scmp.eq.s32.totalorder %s18, 1
      %p57 = scmp.ne.s32.totalorder %s52, %s54
      %p58 = scmp.eq.s32.totalorder %s18, 0
      %p59 = por %p57, %p58
      %p60 = scmp.ne.s32.totalorder %s52, %s54
      %p61 = scmp.eq.s32.totalorder %s23, 1
      %p62 = por %p60, %p61
      %p63 = scmp.ne.s32.totalorder %s54, %s55
      %p64 = scmp.eq.s32.totalorder %s23, 0
      %p65 = por %p63, %p64
      %p66 = scmp.ne.s32.totalorder %s54, %s55
      %p67 = scmp.eq.s32.totalorder %s24, 1
      %p68 = por %p66, %p67
      %p70 = scmp.ne.s32.totalorder %s55, %s69
      %p71 = scmp.eq.s32.totalorder %s24, 0
      %p72 = por %p70, %p71
      %s74 = sadd.s32 %s73, 1
      %p77 = scmp.eq.s32.totalorder %s18, 1
      %p78 = scmp.ne.s32.totalorder %s73, %s75
      %p79 = scmp.eq.s32.totalorder %s18, 0
      %p80 = por %p78, %p79
      %p81 = scmp.ne.s32.totalorder %s73, %s75
      %p82 = scmp.eq.s32.totalorder %s23, 1
      %p83 = por %p81, %p82
      %p84 = scmp.ne.s32.totalorder %s75, %s76
      %p85 = scmp.eq.s32.totalorder %s23, 0
      %p86 = por %p84, %p85
      %p87 = scmp.ne.s32.totalorder %s75, %s76
      %p88 = scmp.eq.s32.totalorder %s24, 1
      %p89 = por %p87, %p88
      %p91 = scmp.ne.s32.totalorder %s76, %s90
      %p92 = scmp.eq.s32.totalorder %s24, 0
      %p93 = por %p91, %p92
      %s95 = sadd.s32 %s94, 1
      %p98 = scmp.eq.s32.totalorder %s18, 1
      %p99 = scmp.ne.s32.totalorder %s94, %s96
      %p100 = scmp.eq.s32.totalorder %s18, 0
      %p101 = por %p99, %p100
      %p102 = scmp.ne.s32.totalorder %s94, %s96
      %p103 = scmp.eq.s32.totalorder %s23, 1
      %p104 = por %p102, %p103
      %p105 = scmp.ne.s32.totalorder %s96, %s97
      %p106 = scmp.eq.s32.totalorder %s23, 0
      %p107 = por %p105, %p106
      %p108 = scmp.ne.s32.totalorder %s96, %s97
      %p109 = scmp.eq.s32.totalorder %s24, 1
      %p110 = por %p108, %p109
      %p112 = scmp.ne.s32.totalorder %s97, %s111
      %p113 = scmp.eq.s32.totalorder %s24, 0
      %p114 = por %p112, %p113
      %s116 = sadd.s32 %s115, 1
      %p119 = scmp.eq.s32.totalorder %s18, 1
      %p120 = scmp.ne.s32.totalorder %s115, %s117
      %p121 = scmp.eq.s32.totalorder %s18, 0
      %p122 = por %p120, %p121
      %p123 = scmp.ne.s32.totalorder %s115, %s117
      %p124 = scmp.eq.s32.totalorder %s23, 1
      %p125 = por %p123, %p124
      %p126 = scmp.ne.s32.totalorder %s117, %s118
      %p127 = scmp.eq.s32.totalorder %s23, 0
      %p128 = por %p126, %p127
      %p129 = scmp.ne.s32.totalorder %s117, %s118
      %p130 = scmp.eq.s32.totalorder %s24, 1
      %p131 = por %p129, %p130
      %p133 = scmp.ne.s32.totalorder %s118, %s132
      %p134 = scmp.eq.s32.totalorder %s24, 0
      %p135 = por %p133, %p134
      %s137 = sadd.s32 %s136, 1
      %p140 = scmp.eq.s32.totalorder %s18, 1
      %p141 = scmp.ne.s32.totalorder %s136, %s138
      %p142 = scmp.eq.s32.totalorder %s18, 0
      %p143 = por %p141, %p142
      %p144 = scmp.ne.s32.totalorder %s136, %s138
      %p145 = scmp.eq.s32.totalorder %s23, 1
      %p146 = por %p144, %p145
      %p147 = scmp.ne.s32.totalorder %s138, %s139
      %p148 = scmp.eq.s32.totalorder %s23, 0
      %p149 = por %p147, %p148
      %p150 = scmp.ne.s32.totalorder %s138, %s139
      %p151 = scmp.eq.s32.totalorder %s24, 1
      %p152 = por %p150, %p151
      %p154 = scmp.ne.s32.totalorder %s139, %s153
      %p155 = scmp.eq.s32.totalorder %s24, 0
      %p156 = por %p154, %p155
      %s158 = sadd.s32 %s157, 1
      %p161 = scmp.eq.s32.totalorder %s18, 1
      %p162 = scmp.ne.s32.totalorder %s157, %s159
      %p163 = scmp.eq.s32.totalorder %s18, 0
      %p164 = por %p162, %p163
      %p165 = scmp.ne.s32.totalorder %s157, %s159
      %p166 = scmp.eq.s32.totalorder %s23, 1
      %p167 = por %p165, %p166
      %p168 = scmp.ne.s32.totalorder %s159, %s160
      %p169 = scmp.eq.s32.totalorder %s23, 0
      %p170 = por %p168, %p169
      %p171 = scmp.ne.s32.totalorder %s159, %s160
      %p172 = scmp.eq.s32.totalorder %s24, 1
      %p173 = por %p171, %p172
      %p175 = scmp.ne.s32.totalorder %s160, %s174
      %p176 = scmp.eq.s32.totalorder %s24, 0
      %p177 = por %p175, %p176
      %s178 = ssub.s32 %s18, %s25
      %p179 = scmp.eq.s32.totalorder %s178, 0
      %s181 = sadd.s32 %s180, 1
      %s182 = scalar_select %p179, %s180, %s181
      %p185 = pneg %p179
      %p186 = scmp.eq.s32.totalorder %s18, 1
      %p187 = por %p185, %p186
      %p188 = scmp.ne.s32.totalorder %s180, %s183
      %p189 = scmp.eq.s32.totalorder %s18, 0
      %p190 = por %p188, %p189
      %p191 = scmp.ne.s32.totalorder %s180, %s183
      %p192 = scmp.eq.s32.totalorder %s23, 1
      %p193 = por %p191, %p192
      %p194 = scmp.ne.s32.totalorder %s183, %s184
      %p195 = scmp.eq.s32.totalorder %s23, 0
      %p196 = por %p194, %p195
      %p197 = scmp.ne.s32.totalorder %s183, %s184
      %p198 = scmp.eq.s32.totalorder %s24, 1
      %p199 = por %p197, %p198
      %p201 = scmp.ne.s32.totalorder %s184, %s200
      %p202 = scmp.eq.s32.totalorder %s24, 0
      %p203 = por %p201, %p202
      %p204 = scmp.le.s32.totalorder 1, %s18
      %p205 = scmp.lt.s32.totalorder %s18, 3
      %p206 = pnand %p204, %p205
      %p207 = pneg %p206
      // Predicated region
      $region9: #{tpu_custom_call.1} parent=5 // pred_check
        _
      $region10: #{tpu_custom_call.1} parent=5 // pred_check_branch
        %209 = sbr.rel (%p206) target = $region12
      $region11: #{tpu_custom_call.1} parent=5 // pred_region
        %s210 = ssub.s32 %s18, 1
        // Predicated region
        $region13: #{tpu_custom_call.1} parent=11 // pred_check
          %p211 = pneg %p65
        $region14: #{tpu_custom_call.1} parent=11 // pred_check_branch
          %213 = sbr.rel (%p211) target = $region16
        $region15: #{tpu_custom_call.1} parent=11 // pred_region
          _
        $region16: #{tpu_custom_call.1} parent=11 // pred_fallthru
          _
        // Predicated region
        $region17: #{tpu_custom_call.1} parent=11 // pred_check
          %p214 = pneg %p86
        $region18: #{tpu_custom_call.1} parent=11 // pred_check_branch
          %216 = sbr.rel (%p214) target = $region20
        $region19: #{tpu_custom_call.1} parent=11 // pred_region
          _
        $region20: #{tpu_custom_call.1} parent=11 // pred_fallthru
          _
        // Predicated region
        $region21: #{tpu_custom_call.1} parent=11 // pred_check
          %p217 = pneg %p107
        $region22: #{tpu_custom_call.1} parent=11 // pred_check_branch
          %219 = sbr.rel (%p217) target = $region24
        $region23: #{tpu_custom_call.1} parent=11 // pred_region
          _
        $region24: #{tpu_custom_call.1} parent=11 // pred_fallthru
          _
        // Predicated region
        $region25: #{tpu_custom_call.1} parent=11 // pred_check
          %p220 = pneg %p128
        $region26: #{tpu_custom_call.1} parent=11 // pred_check_branch
          %222 = sbr.rel (%p220) target = $region28
        $region27: #{tpu_custom_call.1} parent=11 // pred_region
          _
        $region28: #{tpu_custom_call.1} parent=11 // pred_fallthru
          _
        // Predicated region
        $region29: #{tpu_custom_call.1} parent=11 // pred_check
          %p223 = pneg %p149
        $region30: #{tpu_custom_call.1} parent=11 // pred_check_branch
          %225 = sbr.rel (%p223) target = $region32
        $region31: #{tpu_custom_call.1} parent=11 // pred_region
          _
        $region32: #{tpu_custom_call.1} parent=11 // pred_fallthru
          _
        // Predicated region
        $region33: #{tpu_custom_call.1} parent=11 // pred_check
          %p226 = pneg %p170
        $region34: #{tpu_custom_call.1} parent=11 // pred_check_branch
          %228 = sbr.rel (%p226) target = $region36
        $region35: #{tpu_custom_call.1} parent=11 // pred_region
          _
        $region36: #{tpu_custom_call.1} parent=11 // pred_fallthru
          _
      $region12: #{tpu_custom_call.1} parent=5 // pred_fallthru
        _
      %p229 = scmp.lt.s32.totalorder %s18, 2
      // Predicated region
      $region37: #{tpu_custom_call.1} parent=5 // pred_check
        %p230 = pneg %p229
      $region38: #{tpu_custom_call.1} parent=5 // pred_check_branch
        %232 = sbr.rel (%p230) target = $region40
      $region39: #{tpu_custom_call.1} parent=5 // pred_region
        // Predicated region
        $region41: #{tpu_custom_call.1} parent=39 // pred_check
          %p233 = pneg %p38
        $region42: #{tpu_custom_call.1} parent=39 // pred_check_branch
          %235 = sbr.rel (%p233) target = $region44
        $region43: #{tpu_custom_call.1} parent=39 // pred_region
          %p236 = scmp.lt.s32.totalorder %s18, 1
          %s237 = scalar_select %p236, %s18, 1
          %s238 = smul.addr %s237, 2
          %s239 = scalar_lea.vmem %s0, %s238
        $region44: #{tpu_custom_call.1} parent=39 // pred_fallthru
          _
      $region40: #{tpu_custom_call.1} parent=5 // pred_fallthru
        _
      %p240 = scmp.le.s32.totalorder 1, %s18
      %p241 = scmp.lt.s32.totalorder %s18, 3
      %p242 = pnand %p240, %p241
      %p243 = pneg %p242
      // Predicated region
      $region45: #{tpu_custom_call.1} parent=5 // pred_check
        _
      $region46: #{tpu_custom_call.1} parent=5 // pred_check_branch
        %245 = sbr.rel (%p242) target = $region48
      $region47: #{tpu_custom_call.1} parent=5 // pred_region
        %s246 = ssub.s32 %s18, 1
        %p247 = scmp.lt.s32.totalorder %s23, 1
        %s248 = scalar_select %p247, %s23, 1
        %s249 = smul.addr %s248, 2
        %s250 = scalar_lea.vmem %s0, %s249
        %p251 = pneg %p44
        %p252 = pneg %p41
        %p253 = pneg %p65
        %p254 = pneg %p62
        %p255 = pneg %p86
        %p256 = pneg %p83
        %p257 = pneg %p107
        %p258 = pneg %p104
        %p259 = pneg %p128
        %p260 = pneg %p125
        %p261 = pneg %p149
        %p262 = pneg %p146
        %p263 = pneg %p170
        %p264 = pneg %p167
        %p265 = pneg %p196
        %p266 = pneg %p193
        %s267 = sand.u32 %s183, 1
        %s268 = scalar_lea.sflag [#allocation4], %s267
        %s269 = sand.u32 %s183, 1
        %s270 = smul.addr %s269, 2
        %s271 = scalar_lea.vmem [#allocation3], %s270
        %p272 = scmp.lt.s32.totalorder %s23, 1
        %s273 = scalar_select %p272, %s23, 1
        %s274 = smul.addr %s273, 2
        %s275 = scalar_lea.vmem %s0, %s274
        %v276 = vlaneseq
        %v277 = vand.u32 %v276, 127
        %v278 = vadd.s32 %v277, 128
        %vm279 = vcmp.lt.s32.totalorder %v277, 0
        %v280 = vsub.s32 0, %v277
        %v281 = vsel %vm279, %v280, %v277
        %v282 = vshrl.u32 %v281, 4
        %v283 = vand.u32 %v281, 15
        %v284 = vsub.s32 0, %v283
        %v285 = vsel %vm279, %v284, %v283
        %vm286 = vcmp.lt.s32.totalorder %v278, 0
        %v287 = vsub.s32 0, %v278
        %v288 = vsel %vm286, %v287, %v278
        %v289 = vshrl.u32 %v288, 4
        %v290 = vand.u32 %v288, 15
        %v291 = vsub.s32 0, %v290
        %v292 = vsel %vm286, %v291, %v290
        %vm293 = vcmp.ne.s32.totalorder %v285, 0
        %vm294 = vcmp.ne.s32.totalorder %v292, 0
        %vm295 = vcmp.lt.s32.totalorder %v285, 0
        %vm296 = vcmp.lt.s32.totalorder %v292, 0
        %vm297 = vmand %vm295, %vm293
        %vm298 = vmand %vm296, %vm294
        %v299 = vadd.s32 %v285, 16
        %v300 = vadd.s32 %v292, 16
        %v301 = vsel %vm297, %v299, %v285
        %v302 = vsel %vm298, %v300, %v292
        %vm303 = vcmp.gt.s32.totalorder %v301, 0
        %vm304 = vcmp.gt.s32.totalorder %v302, 0
        %v305 = vsel %vm303, 1, 0
        %v306 = vsel %vm304, 1, 0
        %v307 = vcvt.s32.f32 %v305
        %v308 = vcvt.s32.f32 %v306
        %vm309 = vcmp.lt.s32.totalorder %v301, 15
        %vm310 = vcmp.lt.s32.totalorder %v302, 15
        %v311 = vsel %vm309, 1, 0
        %v312 = vsel %vm310, 1, 0
        %v313 = vcvt.s32.f32 %v311
        %v314 = vcvt.s32.f32 %v312
        %v315 = vld [vmem:[%s275] sm:$0x3]
        %v316 = vld [vmem:[%s1] sm:$0xf]
        %v317 = vld [vmem:[%s2] sm:$0xf]
        %v319 = vlaneseq
        %v320 = vshrl.u32 %v319, 7
        %v321 = vsub.s32 0, %v320
        %v322 = vrot.slane %v315, %v321
        %v323 = vlaneseq
        %v324 = vshrl.u32 %v323, 7
        %v325 = vsub.s32 1, %v324
        %v326 = vrot.slane %v315, %v325
        %327 = vrot.lane.b32.xlu0 %v322, 17
        %v328 = vpop.permute.xlu0 %327
        %329 = vrot.lane.b32.xlu0 %v326, 17
        %v330 = vpop.permute.xlu0 %329
        %vm331 = vcmask 138240
        %v332 = vsel %vm331, %v328, %v330
        %v335 = vsel %vm331, 0.0, %v328
        %v336 = vmul.f32 %v335, %v307
        %v337 = vmul.f32 %v332, %v308
        %v338 = vlaneseq
        %v339 = vshrl.u32 %v338, 7
        %v340 = vsub.s32 0, %v339
        %v341 = vrot.slane %v336, %v340
        %v342 = vlaneseq
        %v343 = vshrl.u32 %v342, 7
        %v344 = vsub.s32 0, %v343
        %v345 = vrot.slane %v337, %v344
        %347 = vset.pattern.permute.xlu0 0
        %348 = vperm.xlu0 %347, %v316
        %v349 = vpop.permute.xlu0 %348
        %v351 = vmul.f32 %v341, %v349
        %v352 = vmul.f32 %v345, %v349
        %v353 = vadd.f32 %v351, 0.0
        %v354 = vadd.f32 %v352, 0.0
        %355 = vrot.lane.b32.xlu0 %v322, 16
        %v356 = vpop.permute.xlu0 %355
        %357 = vrot.lane.b32.xlu0 %v326, 16
        %v358 = vpop.permute.xlu0 %357
        %vm359 = vcmask 130048
        %v360 = vsel %vm359, %v356, %v358
        %v363 = vsel %vm359, 0.0, %v356
        %v364 = vlaneseq
        %v365 = vshrl.u32 %v364, 7
        %v366 = vsub.s32 0, %v365
        %v367 = vrot.slane %v363, %v366
        %v368 = vlaneseq
        %v369 = vshrl.u32 %v368, 7
        %v370 = vsub.s32 0, %v369
        %v371 = vrot.slane %v360, %v370
        %372 = vset.pattern.permute.xlu0 1
        %373 = vperm.xlu0 %372, %v316
        %v374 = vpop.permute.xlu0 %373
        %v376 = vmul.f32 %v367, %v374
        %v377 = vmul.f32 %v371, %v374
        %v378 = vadd.f32 %v353, %v376
        %v379 = vadd.f32 %v354, %v377
        %380 = vrot.lane.b32.xlu0 %v322, 15
        %v381 = vpop.permute.xlu0 %380
        %382 = vrot.lane.b32.xlu0 %v326, 15
        %v383 = vpop.permute.xlu0 %382
        %vm384 = vcmask 121856
        %v385 = vsel %vm384, %v381, %v383
        %v388 = vsel %vm384, 0.0, %v381
        %v389 = vmul.f32 %v388, %v313
        %v390 = vmul.f32 %v385, %v314
        %v391 = vlaneseq
        %v392 = vshrl.u32 %v391, 7
        %v393 = vsub.s32 0, %v392
        %v394 = vrot.slane %v389, %v393
        %v395 = vlaneseq
        %v396 = vshrl.u32 %v395, 7
        %v397 = vsub.s32 0, %v396
        %v398 = vrot.slane %v390, %v397
        %399 = vset.pattern.permute.xlu0 2
        %400 = vperm.xlu0 %399, %v316
        %v401 = vpop.permute.xlu0 %400
        %v403 = vmul.f32 %v394, %v401
        %v404 = vmul.f32 %v398, %v401
        %v405 = vadd.f32 %v378, %v403
        %v406 = vadd.f32 %v379, %v404
        %407 = vrot.lane.b32.xlu0 %v322, 1
        %v408 = vpop.permute.xlu0 %407
        %409 = vrot.lane.b32.xlu0 %v326, 1
        %v410 = vpop.permute.xlu0 %409
        %vm411 = vcmask 7168
        %v412 = vsel %vm411, %v408, %v410
        %v415 = vsel %vm411, 0.0, %v408
        %v416 = vmul.f32 %v415, %v307
        %v417 = vmul.f32 %v412, %v308
        %v418 = vlaneseq
        %v419 = vshrl.u32 %v418, 7
        %v420 = vsub.s32 0, %v419
        %v421 = vrot.slane %v416, %v420
        %v422 = vlaneseq
        %v423 = vshrl.u32 %v422, 7
        %v424 = vsub.s32 0, %v423
        %v425 = vrot.slane %v417, %v424
        %426 = vset.pattern.permute.xlu0 3
        %427 = vperm.xlu0 %426, %v316
        %v428 = vpop.permute.xlu0 %427
        %v430 = vmul.f32 %v421, %v428
        %v431 = vmul.f32 %v425, %v428
        %v432 = vadd.f32 %v405, %v430
        %v433 = vadd.f32 %v406, %v431
        %436 = vset.pattern.permute.xlu0 4
        %437 = vperm.xlu0 %436, %v316
        %v438 = vpop.permute.xlu0 %437
        %v440 = vmul.f32 %v322, %v438
        %v441 = vmul.f32 %v326, %v438
        %v442 = vadd.f32 %v432, %v440
        %v443 = vadd.f32 %v433, %v441
        %444 = vrot.lane.b32.xlu0 %v322, 127
        %v445 = vpop.permute.xlu0 %444
        %446 = vrot.lane.b32.xlu0 %v326, 127
        %v447 = vpop.permute.xlu0 %446
        %vm448 = vcmask 1039360
        %v449 = vsel %vm448, %v445, %v447
        %v452 = vsel %vm448, %v447, 0.0
        %v453 = vmul.f32 %v449, %v313
        %v454 = vmul.f32 %v452, %v314
        %v455 = vlaneseq
        %v456 = vshrl.u32 %v455, 7
        %v457 = vsub.s32 0, %v456
        %v458 = vrot.slane %v453, %v457
        %v459 = vlaneseq
        %v460 = vshrl.u32 %v459, 7
        %v461 = vsub.s32 0, %v460
        %v462 = vrot.slane %v454, %v461
        %463 = vset.pattern.permute.xlu0 5
        %464 = vperm.xlu0 %463, %v316
        %v465 = vpop.permute.xlu0 %464
        %v467 = vmul.f32 %v458, %v465
        %v468 = vmul.f32 %v462, %v465
        %v469 = vadd.f32 %v442, %v467
        %v470 = vadd.f32 %v443, %v468
        %471 = vrot.lane.b32.xlu0 %v322, 113
        %v472 = vpop.permute.xlu0 %471
        %473 = vrot.lane.b32.xlu0 %v326, 113
        %v474 = vpop.permute.xlu0 %473
        %vm475 = vcmask 924672
        %v476 = vsel %vm475, %v472, %v474
        %v479 = vsel %vm475, %v474, 0.0
        %v480 = vmul.f32 %v476, %v307
        %v481 = vmul.f32 %v479, %v308
        %v482 = vlaneseq
        %v483 = vshrl.u32 %v482, 7
        %v484 = vsub.s32 0, %v483
        %v485 = vrot.slane %v480, %v484
        %v486 = vlaneseq
        %v487 = vshrl.u32 %v486, 7
        %v488 = vsub.s32 0, %v487
        %v489 = vrot.slane %v481, %v488
        %490 = vset.pattern.permute.xlu0 6
        %491 = vperm.xlu0 %490, %v316
        %v492 = vpop.permute.xlu0 %491
        %v494 = vmul.f32 %v485, %v492
        %v495 = vmul.f32 %v489, %v492
        %v496 = vadd.f32 %v469, %v494
        %v497 = vadd.f32 %v470, %v495
        %498 = vrot.lane.b32.xlu0 %v322, 112
        %v499 = vpop.permute.xlu0 %498
        %500 = vrot.lane.b32.xlu0 %v326, 112
        %v501 = vpop.permute.xlu0 %500
        %vm502 = vcmask 916480
        %v503 = vsel %vm502, %v499, %v501
        %v506 = vsel %vm502, %v501, 0.0
        %v507 = vlaneseq
        %v508 = vshrl.u32 %v507, 7
        %v509 = vsub.s32 0, %v508
        %v510 = vrot.slane %v503, %v509
        %v511 = vlaneseq
        %v512 = vshrl.u32 %v511, 7
        %v513 = vsub.s32 0, %v512
        %v514 = vrot.slane %v506, %v513
        %515 = vset.pattern.permute.xlu0 7
        %516 = vperm.xlu0 %515, %v316
        %v517 = vpop.permute.xlu0 %516
        %v519 = vmul.f32 %v510, %v517
        %v520 = vmul.f32 %v514, %v517
        %v521 = vadd.f32 %v496, %v519
        %v522 = vadd.f32 %v497, %v520
        %523 = vrot.lane.b32.xlu0 %v322, 111
        %v524 = vpop.permute.xlu0 %523
        %525 = vrot.lane.b32.xlu0 %v326, 111
        %v526 = vpop.permute.xlu0 %525
        %vm527 = vcmask 908288
        %v528 = vsel %vm527, %v524, %v526
        %v531 = vsel %vm527, %v526, 0.0
        %v532 = vmul.f32 %v528, %v313
        %v533 = vmul.f32 %v531, %v314
        %v534 = vlaneseq
        %v535 = vshrl.u32 %v534, 7
        %v536 = vsub.s32 0, %v535
        %v537 = vrot.slane %v532, %v536
        %v538 = vlaneseq
        %v539 = vshrl.u32 %v538, 7
        %v540 = vsub.s32 0, %v539
        %v541 = vrot.slane %v533, %v540
        %542 = vset.pattern.permute.xlu0 8
        %543 = vperm.xlu0 %542, %v316
        %v544 = vpop.permute.xlu0 %543
        %v546 = vmul.f32 %v537, %v544
        %v547 = vmul.f32 %v541, %v544
        %v548 = vadd.f32 %v521, %v546
        %v549 = vadd.f32 %v522, %v547
        %551 = vset.pattern.permute.xlu0 0
        %552 = vperm.xlu0 %551, %v317
        %v553 = vpop.permute.xlu0 %552
        %v555 = vadd.f32 %v548, %v553
        %v556 = vadd.f32 %v549, %v553
        %v557 = vmax.f32 %v555, 0.0
        %v558 = vmax.f32 %v556, 0.0
        %v559 = vld [vmem:[%s3] sm:$0xff]
        %v560 = vld [vmem:[%s4] sm:$0xff]
        %563 = vrot.lane.b32.xlu0 %v557, 17
        %v564 = vpop.permute.xlu0 %563
        %565 = vrot.lane.b32.xlu0 %v558, 17
        %v566 = vpop.permute.xlu0 %565
        %v567 = vsel %vm331, %v564, %v566
        %v570 = vsel %vm331, 0.0, %v564
        %v571 = vmul.f32 %v570, %v307
        %v572 = vmul.f32 %v567, %v308
        %v573 = vlaneseq
        %v574 = vshrl.u32 %v573, 7
        %v575 = vsub.s32 0, %v574
        %v576 = vrot.slane %v571, %v575
        %v577 = vlaneseq
        %v578 = vshrl.u32 %v577, 7
        %v579 = vsub.s32 0, %v578
        %v580 = vrot.slane %v572, %v579
        %582 = vset.pattern.permute.xlu0 0
        %583 = vperm.xlu0 %582, %v559
        %v584 = vpop.permute.xlu0 %583
        %v586 = vmul.f32 %v576, %v584
        %v587 = vmul.f32 %v580, %v584
        %v588 = vadd.f32 %v586, 0.0
        %v589 = vadd.f32 %v587, 0.0
        %v590 = vlaneseq
        %v591 = vshrl.u32 %v590, 7
        %v592 = vsub.s32 1, %v591
        %v593 = vrot.slane %v571, %v592
        %v594 = vlaneseq
        %v595 = vshrl.u32 %v594, 7
        %v596 = vsub.s32 1, %v595
        %v597 = vrot.slane %v572, %v596
        %598 = vset.pattern.permute.xlu0 9
        %599 = vperm.xlu0 %598, %v559
        %v600 = vpop.permute.xlu0 %599
        %v602 = vmul.f32 %v593, %v600
        %v603 = vmul.f32 %v597, %v600
        %v604 = vadd.f32 %v588, %v602
        %v605 = vadd.f32 %v589, %v603
        %v606 = vlaneseq
        %v607 = vshrl.u32 %v606, 7
        %v608 = vsub.s32 2, %v607
        %v609 = vrot.slane %v571, %v608
        %v610 = vlaneseq
        %v611 = vshrl.u32 %v610, 7
        %v612 = vsub.s32 2, %v611
        %v613 = vrot.slane %v572, %v612
        %614 = vset.pattern.permute.xlu0 18
        %615 = vperm.xlu0 %614, %v559
        %v616 = vpop.permute.xlu0 %615
        %v618 = vmul.f32 %v609, %v616
        %v619 = vmul.f32 %v613, %v616
        %v620 = vadd.f32 %v604, %v618
        %v621 = vadd.f32 %v605, %v619
        %v622 = vlaneseq
        %v623 = vshrl.u32 %v622, 7
        %v624 = vsub.s32 3, %v623
        %v625 = vrot.slane %v571, %v624
        %v626 = vlaneseq
        %v627 = vshrl.u32 %v626, 7
        %v628 = vsub.s32 3, %v627
        %v629 = vrot.slane %v572, %v628
        %630 = vset.pattern.permute.xlu0 27
        %631 = vperm.xlu0 %630, %v559
        %v632 = vpop.permute.xlu0 %631
        %v634 = vmul.f32 %v625, %v632
        %v635 = vmul.f32 %v629, %v632
        %v636 = vadd.f32 %v620, %v634
        %v637 = vadd.f32 %v621, %v635
        %638 = vrot.lane.b32.xlu0 %v557, 16
        %v639 = vpop.permute.xlu0 %638
        %640 = vrot.lane.b32.xlu0 %v558, 16
        %v641 = vpop.permute.xlu0 %640
        %v642 = vsel %vm359, %v639, %v641
        %v645 = vsel %vm359, 0.0, %v639
        %v646 = vlaneseq
        %v647 = vshrl.u32 %v646, 7
        %v648 = vsub.s32 0, %v647
        %v649 = vrot.slane %v645, %v648
        %v650 = vlaneseq
        %v651 = vshrl.u32 %v650, 7
        %v652 = vsub.s32 0, %v651
        %v653 = vrot.slane %v642, %v652
        %654 = vset.pattern.permute.xlu0 1
        %655 = vperm.xlu0 %654, %v559
        %v656 = vpop.permute.xlu0 %655
        %v658 = vmul.f32 %v649, %v656
        %v659 = vmul.f32 %v653, %v656
        %v660 = vadd.f32 %v636, %v658
        %v661 = vadd.f32 %v637, %v659
        %v662 = vlaneseq
        %v663 = vshrl.u32 %v662, 7
        %v664 = vsub.s32 1, %v663
        %v665 = vrot.slane %v645, %v664
        %v666 = vlaneseq
        %v667 = vshrl.u32 %v666, 7
        %v668 = vsub.s32 1, %v667
        %v669 = vrot.slane %v642, %v668
        %670 = vset.pattern.permute.xlu0 10
        %671 = vperm.xlu0 %670, %v559
        %v672 = vpop.permute.xlu0 %671
        %v674 = vmul.f32 %v665, %v672
        %v675 = vmul.f32 %v669, %v672
        %v676 = vadd.f32 %v660, %v674
        %v677 = vadd.f32 %v661, %v675
        %v678 = vlaneseq
        %v679 = vshrl.u32 %v678, 7
        %v680 = vsub.s32 2, %v679
        %v681 = vrot.slane %v645, %v680
        %v682 = vlaneseq
        %v683 = vshrl.u32 %v682, 7
        %v684 = vsub.s32 2, %v683
        %v685 = vrot.slane %v642, %v684
        %686 = vset.pattern.permute.xlu0 19
        %687 = vperm.xlu0 %686, %v559
        %v688 = vpop.permute.xlu0 %687
        %v690 = vmul.f32 %v681, %v688
        %v691 = vmul.f32 %v685, %v688
        %v692 = vadd.f32 %v676, %v690
        %v693 = vadd.f32 %v677, %v691
        %v694 = vlaneseq
        %v695 = vshrl.u32 %v694, 7
        %v696 = vsub.s32 3, %v695
        %v697 = vrot.slane %v645, %v696
        %v698 = vlaneseq
        %v699 = vshrl.u32 %v698, 7
        %v700 = vsub.s32 3, %v699
        %v701 = vrot.slane %v642, %v700
        %702 = vset.pattern.permute.xlu0 28
        %703 = vperm.xlu0 %702, %v559
        %v704 = vpop.permute.xlu0 %703
        %v706 = vmul.f32 %v697, %v704
        %v707 = vmul.f32 %v701, %v704
        %v708 = vadd.f32 %v692, %v706
        %v709 = vadd.f32 %v693, %v707
        %710 = vrot.lane.b32.xlu0 %v557, 15
        %v711 = vpop.permute.xlu0 %710
        %712 = vrot.lane.b32.xlu0 %v558, 15
        %v713 = vpop.permute.xlu0 %712
        %v714 = vsel %vm384, %v711, %v713
        %v717 = vsel %vm384, 0.0, %v711
        %v718 = vmul.f32 %v717, %v313
        %v719 = vmul.f32 %v714, %v314
        %v720 = vlaneseq
        %v721 = vshrl.u32 %v720, 7
        %v722 = vsub.s32 0, %v721
        %v723 = vrot.slane %v718, %v722
        %v724 = vlaneseq
        %v725 = vshrl.u32 %v724, 7
        %v726 = vsub.s32 0, %v725
        %v727 = vrot.slane %v719, %v726
        %728 = vset.pattern.permute.xlu0 2
        %729 = vperm.xlu0 %728, %v559
        %v730 = vpop.permute.xlu0 %729
        %v732 = vmul.f32 %v723, %v730
        %v733 = vmul.f32 %v727, %v730
        %v734 = vadd.f32 %v708, %v732
        %v735 = vadd.f32 %v709, %v733
        %v736 = vlaneseq
        %v737 = vshrl.u32 %v736, 7
        %v738 = vsub.s32 1, %v737
        %v739 = vrot.slane %v718, %v738
        %v740 = vlaneseq
        %v741 = vshrl.u32 %v740, 7
        %v742 = vsub.s32 1, %v741
        %v743 = vrot.slane %v719, %v742
        %744 = vset.pattern.permute.xlu0 11
        %745 = vperm.xlu0 %744, %v559
        %v746 = vpop.permute.xlu0 %745
        %v748 = vmul.f32 %v739, %v746
        %v749 = vmul.f32 %v743, %v746
        %v750 = vadd.f32 %v734, %v748
        %v751 = vadd.f32 %v735, %v749
        %v752 = vlaneseq
        %v753 = vshrl.u32 %v752, 7
        %v754 = vsub.s32 2, %v753
        %v755 = vrot.slane %v718, %v754
        %v756 = vlaneseq
        %v757 = vshrl.u32 %v756, 7
        %v758 = vsub.s32 2, %v757
        %v759 = vrot.slane %v719, %v758
        %760 = vset.pattern.permute.xlu0 20
        %761 = vperm.xlu0 %760, %v559
        %v762 = vpop.permute.xlu0 %761
        %v764 = vmul.f32 %v755, %v762
        %v765 = vmul.f32 %v759, %v762
        %v766 = vadd.f32 %v750, %v764
        %v767 = vadd.f32 %v751, %v765
        %v768 = vlaneseq
        %v769 = vshrl.u32 %v768, 7
        %v770 = vsub.s32 3, %v769
        %v771 = vrot.slane %v718, %v770
        %v772 = vlaneseq
        %v773 = vshrl.u32 %v772, 7
        %v774 = vsub.s32 3, %v773
        %v775 = vrot.slane %v719, %v774
        %776 = vset.pattern.permute.xlu0 29
        %777 = vperm.xlu0 %776, %v559
        %v778 = vpop.permute.xlu0 %777
        %v780 = vmul.f32 %v771, %v778
        %v781 = vmul.f32 %v775, %v778
        %v782 = vadd.f32 %v766, %v780
        %v783 = vadd.f32 %v767, %v781
        %784 = vrot.lane.b32.xlu0 %v557, 1
        %v785 = vpop.permute.xlu0 %784
        %786 = vrot.lane.b32.xlu0 %v558, 1
        %v787 = vpop.permute.xlu0 %786
        %v788 = vsel %vm411, %v785, %v787
        %v791 = vsel %vm411, 0.0, %v785
        %v792 = vmul.f32 %v791, %v307
        %v793 = vmul.f32 %v788, %v308
        %v794 = vlaneseq
        %v795 = vshrl.u32 %v794, 7
        %v796 = vsub.s32 0, %v795
        %v797 = vrot.slane %v792, %v796
        %v798 = vlaneseq
        %v799 = vshrl.u32 %v798, 7
        %v800 = vsub.s32 0, %v799
        %v801 = vrot.slane %v793, %v800
        %802 = vset.pattern.permute.xlu0 3
        %803 = vperm.xlu0 %802, %v559
        %v804 = vpop.permute.xlu0 %803
        %v806 = vmul.f32 %v797, %v804
        %v807 = vmul.f32 %v801, %v804
        %v808 = vadd.f32 %v782, %v806
        %v809 = vadd.f32 %v783, %v807
        %v810 = vlaneseq
        %v811 = vshrl.u32 %v810, 7
        %v812 = vsub.s32 1, %v811
        %v813 = vrot.slane %v792, %v812
        %v814 = vlaneseq
        %v815 = vshrl.u32 %v814, 7
        %v816 = vsub.s32 1, %v815
        %v817 = vrot.slane %v793, %v816
        %818 = vset.pattern.permute.xlu0 12
        %819 = vperm.xlu0 %818, %v559
        %v820 = vpop.permute.xlu0 %819
        %v822 = vmul.f32 %v813, %v820
        %v823 = vmul.f32 %v817, %v820
        %v824 = vadd.f32 %v808, %v822
        %v825 = vadd.f32 %v809, %v823
        %v826 = vlaneseq
        %v827 = vshrl.u32 %v826, 7
        %v828 = vsub.s32 2, %v827
        %v829 = vrot.slane %v792, %v828
        %v830 = vlaneseq
        %v831 = vshrl.u32 %v830, 7
        %v832 = vsub.s32 2, %v831
        %v833 = vrot.slane %v793, %v832
        %834 = vset.pattern.permute.xlu0 21
        %835 = vperm.xlu0 %834, %v559
        %v836 = vpop.permute.xlu0 %835
        %v838 = vmul.f32 %v829, %v836
        %v839 = vmul.f32 %v833, %v836
        %v840 = vadd.f32 %v824, %v838
        %v841 = vadd.f32 %v825, %v839
        %v842 = vlaneseq
        %v843 = vshrl.u32 %v842, 7
        %v844 = vsub.s32 3, %v843
        %v845 = vrot.slane %v792, %v844
        %v846 = vlaneseq
        %v847 = vshrl.u32 %v846, 7
        %v848 = vsub.s32 3, %v847
        %v849 = vrot.slane %v793, %v848
        %850 = vset.pattern.permute.xlu0 30
        %851 = vperm.xlu0 %850, %v559
        %v852 = vpop.permute.xlu0 %851
        %v854 = vmul.f32 %v845, %v852
        %v855 = vmul.f32 %v849, %v852
        %v856 = vadd.f32 %v840, %v854
        %v857 = vadd.f32 %v841, %v855
        %v858 = vlaneseq
        %v859 = vshrl.u32 %v858, 7
        %v860 = vsub.s32 0, %v859
        %v861 = vrot.slane %v557, %v860
        %v862 = vlaneseq
        %v863 = vshrl.u32 %v862, 7
        %v864 = vsub.s32 0, %v863
        %v865 = vrot.slane %v558, %v864
        %866 = vset.pattern.permute.xlu0 4
        %867 = vperm.xlu0 %866, %v559
        %v868 = vpop.permute.xlu0 %867
        %v870 = vmul.f32 %v861, %v868
        %v871 = vmul.f32 %v865, %v868
        %v872 = vadd.f32 %v856, %v870
        %v873 = vadd.f32 %v857, %v871
        %v874 = vlaneseq
        %v875 = vshrl.u32 %v874, 7
        %v876 = vsub.s32 1, %v875
        %v877 = vrot.slane %v557, %v876
        %v878 = vlaneseq
        %v879 = vshrl.u32 %v878, 7
        %v880 = vsub.s32 1, %v879
        %v881 = vrot.slane %v558, %v880
        %882 = vset.pattern.permute.xlu0 13
        %883 = vperm.xlu0 %882, %v559
        %v884 = vpop.permute.xlu0 %883
        %v886 = vmul.f32 %v877, %v884
        %v887 = vmul.f32 %v881, %v884
        %v888 = vadd.f32 %v872, %v886
        %v889 = vadd.f32 %v873, %v887
        %v890 = vlaneseq
        %v891 = vshrl.u32 %v890, 7
        %v892 = vsub.s32 2, %v891
        %v893 = vrot.slane %v557, %v892
        %v894 = vlaneseq
        %v895 = vshrl.u32 %v894, 7
        %v896 = vsub.s32 2, %v895
        %v897 = vrot.slane %v558, %v896
        %898 = vset.pattern.permute.xlu0 22
        %899 = vperm.xlu0 %898, %v559
        %v900 = vpop.permute.xlu0 %899
        %v902 = vmul.f32 %v893, %v900
        %v903 = vmul.f32 %v897, %v900
        %v904 = vadd.f32 %v888, %v902
        %v905 = vadd.f32 %v889, %v903
        %v906 = vlaneseq
        %v907 = vshrl.u32 %v906, 7
        %v908 = vsub.s32 3, %v907
        %v909 = vrot.slane %v557, %v908
        %v910 = vlaneseq
        %v911 = vshrl.u32 %v910, 7
        %v912 = vsub.s32 3, %v911
        %v913 = vrot.slane %v558, %v912
        %914 = vset.pattern.permute.xlu0 31
        %915 = vperm.xlu0 %914, %v559
        %v916 = vpop.permute.xlu0 %915
        %v918 = vmul.f32 %v909, %v916
        %v919 = vmul.f32 %v913, %v916
        %v920 = vadd.f32 %v904, %v918
        %v921 = vadd.f32 %v905, %v919
        %922 = vrot.lane.b32.xlu0 %v557, 127
        %v923 = vpop.permute.xlu0 %922
        %924 = vrot.lane.b32.xlu0 %v558, 127
        %v925 = vpop.permute.xlu0 %924
        %v926 = vsel %vm448, %v923, %v925
        %v929 = vsel %vm448, %v925, 0.0
        %v930 = vmul.f32 %v926, %v313
        %v931 = vmul.f32 %v929, %v314
        %v932 = vlaneseq
        %v933 = vshrl.u32 %v932, 7
        %v934 = vsub.s32 0, %v933
        %v935 = vrot.slane %v930, %v934
        %v936 = vlaneseq
        %v937 = vshrl.u32 %v936, 7
        %v938 = vsub.s32 0, %v937
        %v939 = vrot.slane %v931, %v938
        %940 = vset.pattern.permute.xlu0 5
        %941 = vperm.xlu0 %940, %v559
        %v942 = vpop.permute.xlu0 %941
        %v944 = vmul.f32 %v935, %v942
        %v945 = vmul.f32 %v939, %v942
        %v946 = vadd.f32 %v920, %v944
        %v947 = vadd.f32 %v921, %v945
        %v948 = vlaneseq
        %v949 = vshrl.u32 %v948, 7
        %v950 = vsub.s32 1, %v949
        %v951 = vrot.slane %v930, %v950
        %v952 = vlaneseq
        %v953 = vshrl.u32 %v952, 7
        %v954 = vsub.s32 1, %v953
        %v955 = vrot.slane %v931, %v954
        %956 = vset.pattern.permute.xlu0 14
        %957 = vperm.xlu0 %956, %v559
        %v958 = vpop.permute.xlu0 %957
        %v960 = vmul.f32 %v951, %v958
        %v961 = vmul.f32 %v955, %v958
        %v962 = vadd.f32 %v946, %v960
        %v963 = vadd.f32 %v947, %v961
        %v964 = vlaneseq
        %v965 = vshrl.u32 %v964, 7
        %v966 = vsub.s32 2, %v965
        %v967 = vrot.slane %v930, %v966
        %v968 = vlaneseq
        %v969 = vshrl.u32 %v968, 7
        %v970 = vsub.s32 2, %v969
        %v971 = vrot.slane %v931, %v970
        %972 = vset.pattern.permute.xlu0 23
        %973 = vperm.xlu0 %972, %v559
        %v974 = vpop.permute.xlu0 %973
        %v976 = vmul.f32 %v967, %v974
        %v977 = vmul.f32 %v971, %v974
        %v978 = vadd.f32 %v962, %v976
        %v979 = vadd.f32 %v963, %v977
        %v980 = vlaneseq
        %v981 = vshrl.u32 %v980, 7
        %v982 = vsub.s32 3, %v981
        %v983 = vrot.slane %v930, %v982
        %v984 = vlaneseq
        %v985 = vshrl.u32 %v984, 7
        %v986 = vsub.s32 3, %v985
        %v987 = vrot.slane %v931, %v986
        %988 = vset.pattern.permute.xlu0 32
        %989 = vperm.xlu0 %988, %v559
        %v990 = vpop.permute.xlu0 %989
        %v992 = vmul.f32 %v983, %v990
        %v993 = vmul.f32 %v987, %v990
        %v994 = vadd.f32 %v978, %v992
        %v995 = vadd.f32 %v979, %v993
        %996 = vrot.lane.b32.xlu0 %v557, 113
        %v997 = vpop.permute.xlu0 %996
        %998 = vrot.lane.b32.xlu0 %v558, 113
        %v999 = vpop.permute.xlu0 %998
        %v1000 = vsel %vm475, %v997, %v999
        %v1003 = vsel %vm475, %v999, 0.0
        %v1004 = vmul.f32 %v1000, %v307
        %v1005 = vmul.f32 %v1003, %v308
        %v1006 = vlaneseq
        %v1007 = vshrl.u32 %v1006, 7
        %v1008 = vsub.s32 0, %v1007
        %v1009 = vrot.slane %v1004, %v1008
        %v1010 = vlaneseq
        %v1011 = vshrl.u32 %v1010, 7
        %v1012 = vsub.s32 0, %v1011
        %v1013 = vrot.slane %v1005, %v1012
        %1014 = vset.pattern.permute.xlu0 6
        %1015 = vperm.xlu0 %1014, %v559
        %v1016 = vpop.permute.xlu0 %1015
        %v1018 = vmul.f32 %v1009, %v1016
        %v1019 = vmul.f32 %v1013, %v1016
        %v1020 = vadd.f32 %v994, %v1018
        %v1021 = vadd.f32 %v995, %v1019
        %v1022 = vlaneseq
        %v1023 = vshrl.u32 %v1022, 7
        %v1024 = vsub.s32 1, %v1023
        %v1025 = vrot.slane %v1004, %v1024
        %v1026 = vlaneseq
        %v1027 = vshrl.u32 %v1026, 7
        %v1028 = vsub.s32 1, %v1027
        %v1029 = vrot.slane %v1005, %v1028
        %1030 = vset.pattern.permute.xlu0 15
        %1031 = vperm.xlu0 %1030, %v559
        %v1032 = vpop.permute.xlu0 %1031
        %v1034 = vmul.f32 %v1025, %v1032
        %v1035 = vmul.f32 %v1029, %v1032
        %v1036 = vadd.f32 %v1020, %v1034
        %v1037 = vadd.f32 %v1021, %v1035
        %v1038 = vlaneseq
        %v1039 = vshrl.u32 %v1038, 7
        %v1040 = vsub.s32 2, %v1039
        %v1041 = vrot.slane %v1004, %v1040
        %v1042 = vlaneseq
        %v1043 = vshrl.u32 %v1042, 7
        %v1044 = vsub.s32 2, %v1043
        %v1045 = vrot.slane %v1005, %v1044
        %1046 = vset.pattern.permute.xlu0 24
        %1047 = vperm.xlu0 %1046, %v559
        %v1048 = vpop.permute.xlu0 %1047
        %v1050 = vmul.f32 %v1041, %v1048
        %v1051 = vmul.f32 %v1045, %v1048
        %v1052 = vadd.f32 %v1036, %v1050
        %v1053 = vadd.f32 %v1037, %v1051
        %v1054 = vlaneseq
        %v1055 = vshrl.u32 %v1054, 7
        %v1056 = vsub.s32 3, %v1055
        %v1057 = vrot.slane %v1004, %v1056
        %v1058 = vlaneseq
        %v1059 = vshrl.u32 %v1058, 7
        %v1060 = vsub.s32 3, %v1059
        %v1061 = vrot.slane %v1005, %v1060
        %1062 = vset.pattern.permute.xlu0 33
        %1063 = vperm.xlu0 %1062, %v559
        %v1064 = vpop.permute.xlu0 %1063
        %v1066 = vmul.f32 %v1057, %v1064
        %v1067 = vmul.f32 %v1061, %v1064
        %v1068 = vadd.f32 %v1052, %v1066
        %v1069 = vadd.f32 %v1053, %v1067
        %1070 = vrot.lane.b32.xlu0 %v557, 112
        %v1071 = vpop.permute.xlu0 %1070
        %1072 = vrot.lane.b32.xlu0 %v558, 112
        %v1073 = vpop.permute.xlu0 %1072
        %v1074 = vsel %vm502, %v1071, %v1073
        %v1077 = vsel %vm502, %v1073, 0.0
        %v1078 = vlaneseq
        %v1079 = vshrl.u32 %v1078, 7
        %v1080 = vsub.s32 0, %v1079
        %v1081 = vrot.slane %v1074, %v1080
        %v1082 = vlaneseq
        %v1083 = vshrl.u32 %v1082, 7
        %v1084 = vsub.s32 0, %v1083
        %v1085 = vrot.slane %v1077, %v1084
        %1086 = vset.pattern.permute.xlu0 7
        %1087 = vperm.xlu0 %1086, %v559
        %v1088 = vpop.permute.xlu0 %1087
        %v1090 = vmul.f32 %v1081, %v1088
        %v1091 = vmul.f32 %v1085, %v1088
        %v1092 = vadd.f32 %v1068, %v1090
        %v1093 = vadd.f32 %v1069, %v1091
        %v1094 = vlaneseq
        %v1095 = vshrl.u32 %v1094, 7
        %v1096 = vsub.s32 1, %v1095
        %v1097 = vrot.slane %v1074, %v1096
        %v1098 = vlaneseq
        %v1099 = vshrl.u32 %v1098, 7
        %v1100 = vsub.s32 1, %v1099
        %v1101 = vrot.slane %v1077, %v1100
        %1102 = vset.pattern.permute.xlu0 16
        %1103 = vperm.xlu0 %1102, %v559
        %v1104 = vpop.permute.xlu0 %1103
        %v1106 = vmul.f32 %v1097, %v1104
        %v1107 = vmul.f32 %v1101, %v1104
        %v1108 = vadd.f32 %v1092, %v1106
        %v1109 = vadd.f32 %v1093, %v1107
        %v1110 = vlaneseq
        %v1111 = vshrl.u32 %v1110, 7
        %v1112 = vsub.s32 2, %v1111
        %v1113 = vrot.slane %v1074, %v1112
        %v1114 = vlaneseq
        %v1115 = vshrl.u32 %v1114, 7
        %v1116 = vsub.s32 2, %v1115
        %v1117 = vrot.slane %v1077, %v1116
        %1118 = vset.pattern.permute.xlu0 25
        %1119 = vperm.xlu0 %1118, %v559
        %v1120 = vpop.permute.xlu0 %1119
        %v1122 = vmul.f32 %v1113, %v1120
        %v1123 = vmul.f32 %v1117, %v1120
        %v1124 = vadd.f32 %v1108, %v1122
        %v1125 = vadd.f32 %v1109, %v1123
        %v1126 = vlaneseq
        %v1127 = vshrl.u32 %v1126, 7
        %v1128 = vsub.s32 3, %v1127
        %v1129 = vrot.slane %v1074, %v1128
        %v1130 = vlaneseq
        %v1131 = vshrl.u32 %v1130, 7
        %v1132 = vsub.s32 3, %v1131
        %v1133 = vrot.slane %v1077, %v1132
        %1134 = vset.pattern.permute.xlu0 34
        %1135 = vperm.xlu0 %1134, %v559
        %v1136 = vpop.permute.xlu0 %1135
        %v1138 = vmul.f32 %v1129, %v1136
        %v1139 = vmul.f32 %v1133, %v1136
        %v1140 = vadd.f32 %v1124, %v1138
        %v1141 = vadd.f32 %v1125, %v1139
        %1142 = vrot.lane.b32.xlu0 %v557, 111
        %v1143 = vpop.permute.xlu0 %1142
        %1144 = vrot.lane.b32.xlu0 %v558, 111
        %v1145 = vpop.permute.xlu0 %1144
        %v1146 = vsel %vm527, %v1143, %v1145
        %v1149 = vsel %vm527, %v1145, 0.0
        %v1150 = vmul.f32 %v1146, %v313
        %v1151 = vmul.f32 %v1149, %v314
        %v1152 = vlaneseq
        %v1153 = vshrl.u32 %v1152, 7
        %v1154 = vsub.s32 0, %v1153
        %v1155 = vrot.slane %v1150, %v1154
        %v1156 = vlaneseq
        %v1157 = vshrl.u32 %v1156, 7
        %v1158 = vsub.s32 0, %v1157
        %v1159 = vrot.slane %v1151, %v1158
        %1160 = vset.pattern.permute.xlu0 8
        %1161 = vperm.xlu0 %1160, %v559
        %v1162 = vpop.permute.xlu0 %1161
        %v1164 = vmul.f32 %v1155, %v1162
        %v1165 = vmul.f32 %v1159, %v1162
        %v1166 = vadd.f32 %v1140, %v1164
        %v1167 = vadd.f32 %v1141, %v1165
        %v1168 = vlaneseq
        %v1169 = vshrl.u32 %v1168, 7
        %v1170 = vsub.s32 1, %v1169
        %v1171 = vrot.slane %v1150, %v1170
        %v1172 = vlaneseq
        %v1173 = vshrl.u32 %v1172, 7
        %v1174 = vsub.s32 1, %v1173
        %v1175 = vrot.slane %v1151, %v1174
        %1176 = vset.pattern.permute.xlu0 17
        %1177 = vperm.xlu0 %1176, %v559
        %v1178 = vpop.permute.xlu0 %1177
        %v1180 = vmul.f32 %v1171, %v1178
        %v1181 = vmul.f32 %v1175, %v1178
        %v1182 = vadd.f32 %v1166, %v1180
        %v1183 = vadd.f32 %v1167, %v1181
        %v1184 = vlaneseq
        %v1185 = vshrl.u32 %v1184, 7
        %v1186 = vsub.s32 2, %v1185
        %v1187 = vrot.slane %v1150, %v1186
        %v1188 = vlaneseq
        %v1189 = vshrl.u32 %v1188, 7
        %v1190 = vsub.s32 2, %v1189
        %v1191 = vrot.slane %v1151, %v1190
        %1192 = vset.pattern.permute.xlu0 26
        %1193 = vperm.xlu0 %1192, %v559
        %v1194 = vpop.permute.xlu0 %1193
        %v1196 = vmul.f32 %v1187, %v1194
        %v1197 = vmul.f32 %v1191, %v1194
        %v1198 = vadd.f32 %v1182, %v1196
        %v1199 = vadd.f32 %v1183, %v1197
        %v1200 = vlaneseq
        %v1201 = vshrl.u32 %v1200, 7
        %v1202 = vsub.s32 3, %v1201
        %v1203 = vrot.slane %v1150, %v1202
        %v1204 = vlaneseq
        %v1205 = vshrl.u32 %v1204, 7
        %v1206 = vsub.s32 3, %v1205
        %v1207 = vrot.slane %v1151, %v1206
        %1208 = vset.pattern.permute.xlu0 35
        %1209 = vperm.xlu0 %1208, %v559
        %v1210 = vpop.permute.xlu0 %1209
        %v1212 = vmul.f32 %v1203, %v1210
        %v1213 = vmul.f32 %v1207, %v1210
        %v1214 = vadd.f32 %v1198, %v1212
        %v1215 = vadd.f32 %v1199, %v1213
        %1217 = vset.pattern.permute.xlu0 0
        %1218 = vperm.xlu0 %1217, %v560
        %v1219 = vpop.permute.xlu0 %1218
        %v1221 = vadd.f32 %v1214, %v1219
        %v1222 = vadd.f32 %v1215, %v1219
        %v1223 = vmax.f32 %v1221, 0.0
        %v1224 = vmax.f32 %v1222, 0.0
        %v1225 = vld [vmem:[%s5] sm:$0x1]
        %v1226 = vld [vmem:[#allocation2] sm:$0x1]
        %1229 = vrot.lane.b32.xlu0 %v1223, 17
        %v1230 = vpop.permute.xlu0 %1229
        %1231 = vrot.lane.b32.xlu0 %v1224, 17
        %v1232 = vpop.permute.xlu0 %1231
        %v1233 = vsel %vm331, %v1230, %v1232
        %v1236 = vsel %vm331, 0.0, %v1230
        %v1237 = vmul.f32 %v1236, %v307
        %v1238 = vmul.f32 %v1233, %v308
        %1240 = vset.pattern.permute.xlu0 0
        %1241 = vperm.xlu0 %1240, %v1225
        %v1242 = vpop.permute.xlu0 %1241
        %v1244 = vlaneseq
        %v1245 = vshrl.u32 %v1244, 7
        %v1246 = vsub.s32 0, %v1245
        %v1247 = vrot.slane %v1242, %v1246
        %v1248 = vmul.f32 %v1237, %v1247
        %v1249 = vmul.f32 %v1238, %v1247
        %v1250 = vadd.f32 %v1248, 0.0
        %v1251 = vadd.f32 %v1249, 0.0
        %1252 = vset.pattern.permute.xlu0 9
        %1253 = vperm.xlu0 %1252, %v1225
        %v1254 = vpop.permute.xlu0 %1253
        %v1256 = vlaneseq
        %v1257 = vshrl.u32 %v1256, 7
        %v1258 = vsub.s32 0, %v1257
        %v1259 = vrot.slane %v1254, %v1258
        %v1260 = vmul.f32 %v1237, %v1259
        %v1261 = vmul.f32 %v1238, %v1259
        %v1264 = vrot.slane %v1260, 1
        %v1265 = vrot.slane %v1261, 1
        %v1268 = vadd.f32 %v1250, %v1264
        %v1269 = vadd.f32 %v1251, %v1265
        %1270 = vset.pattern.permute.xlu0 18
        %1271 = vperm.xlu0 %1270, %v1225
        %v1272 = vpop.permute.xlu0 %1271
        %v1274 = vlaneseq
        %v1275 = vshrl.u32 %v1274, 7
        %v1276 = vsub.s32 0, %v1275
        %v1277 = vrot.slane %v1272, %v1276
        %v1278 = vmul.f32 %v1237, %v1277
        %v1279 = vmul.f32 %v1238, %v1277
        %v1282 = vrot.slane %v1278, 2
        %v1283 = vrot.slane %v1279, 2
        %v1286 = vadd.f32 %v1268, %v1282
        %v1287 = vadd.f32 %v1269, %v1283
        %1288 = vset.pattern.permute.xlu0 27
        %1289 = vperm.xlu0 %1288, %v1225
        %v1290 = vpop.permute.xlu0 %1289
        %v1292 = vlaneseq
        %v1293 = vshrl.u32 %v1292, 7
        %v1294 = vsub.s32 0, %v1293
        %v1295 = vrot.slane %v1290, %v1294
        %v1296 = vmul.f32 %v1237, %v1295
        %v1297 = vmul.f32 %v1238, %v1295
        %v1300 = vrot.slane %v1296, 3
        %v1301 = vrot.slane %v1297, 3
        %v1304 = vadd.f32 %v1286, %v1300
        %v1305 = vadd.f32 %v1287, %v1301
        %1306 = vset.pattern.permute.xlu0 36
        %1307 = vperm.xlu0 %1306, %v1225
        %v1308 = vpop.permute.xlu0 %1307
        %v1310 = vlaneseq
        %v1311 = vshrl.u32 %v1310, 7
        %v1312 = vsub.s32 0, %v1311
        %v1313 = vrot.slane %v1308, %v1312
        %v1314 = vmul.f32 %v1237, %v1313
        %v1315 = vmul.f32 %v1238, %v1313
        %v1318 = vrot.slane %v1314, 4
        %v1319 = vrot.slane %v1315, 4
        %v1322 = vadd.f32 %v1304, %v1318
        %v1323 = vadd.f32 %v1305, %v1319
        %1324 = vset.pattern.permute.xlu0 45
        %1325 = vperm.xlu0 %1324, %v1225
        %v1326 = vpop.permute.xlu0 %1325
        %v1328 = vlaneseq
        %v1329 = vshrl.u32 %v1328, 7
        %v1330 = vsub.s32 0, %v1329
        %v1331 = vrot.slane %v1326, %v1330
        %v1332 = vmul.f32 %v1237, %v1331
        %v1333 = vmul.f32 %v1238, %v1331
        %v1336 = vrot.slane %v1332, 5
        %v1337 = vrot.slane %v1333, 5
        %v1340 = vadd.f32 %v1322, %v1336
        %v1341 = vadd.f32 %v1323, %v1337
        %1342 = vset.pattern.permute.xlu0 54
        %1343 = vperm.xlu0 %1342, %v1225
        %v1344 = vpop.permute.xlu0 %1343
        %v1346 = vlaneseq
        %v1347 = vshrl.u32 %v1346, 7
        %v1348 = vsub.s32 0, %v1347
        %v1349 = vrot.slane %v1344, %v1348
        %v1350 = vmul.f32 %v1237, %v1349
        %v1351 = vmul.f32 %v1238, %v1349
        %v1354 = vrot.slane %v1350, 6
        %v1355 = vrot.slane %v1351, 6
        %v1358 = vadd.f32 %v1340, %v1354
        %v1359 = vadd.f32 %v1341, %v1355
        %1360 = vset.pattern.permute.xlu0 63
        %1361 = vperm.xlu0 %1360, %v1225
        %v1362 = vpop.permute.xlu0 %1361
        %v1364 = vlaneseq
        %v1365 = vshrl.u32 %v1364, 7
        %v1366 = vsub.s32 0, %v1365
        %v1367 = vrot.slane %v1362, %v1366
        %v1368 = vmul.f32 %v1237, %v1367
        %v1369 = vmul.f32 %v1238, %v1367
        %v1372 = vrot.slane %v1368, 7
        %v1373 = vrot.slane %v1369, 7
        %v1376 = vadd.f32 %v1358, %v1372
        %v1377 = vadd.f32 %v1359, %v1373
        %1378 = vrot.lane.b32.xlu0 %v1223, 16
        %v1379 = vpop.permute.xlu0 %1378
        %1380 = vrot.lane.b32.xlu0 %v1224, 16
        %v1381 = vpop.permute.xlu0 %1380
        %v1382 = vsel %vm359, %v1379, %v1381
        %v1385 = vsel %vm359, 0.0, %v1379
        %1386 = vset.pattern.permute.xlu0 1
        %1387 = vperm.xlu0 %1386, %v1225
        %v1388 = vpop.permute.xlu0 %1387
        %v1390 = vlaneseq
        %v1391 = vshrl.u32 %v1390, 7
        %v1392 = vsub.s32 0, %v1391
        %v1393 = vrot.slane %v1388, %v1392
        %v1394 = vmul.f32 %v1385, %v1393
        %v1395 = vmul.f32 %v1382, %v1393
        %v1396 = vadd.f32 %v1376, %v1394
        %v1397 = vadd.f32 %v1377, %v1395
        %1398 = vset.pattern.permute.xlu0 10
        %1399 = vperm.xlu0 %1398, %v1225
        %v1400 = vpop.permute.xlu0 %1399
        %v1402 = vlaneseq
        %v1403 = vshrl.u32 %v1402, 7
        %v1404 = vsub.s32 0, %v1403
        %v1405 = vrot.slane %v1400, %v1404
        %v1406 = vmul.f32 %v1385, %v1405
        %v1407 = vmul.f32 %v1382, %v1405
        %v1410 = vrot.slane %v1406, 1
        %v1411 = vrot.slane %v1407, 1
        %v1414 = vadd.f32 %v1396, %v1410
        %v1415 = vadd.f32 %v1397, %v1411
        %1416 = vset.pattern.permute.xlu0 19
        %1417 = vperm.xlu0 %1416, %v1225
        %v1418 = vpop.permute.xlu0 %1417
        %v1420 = vlaneseq
        %v1421 = vshrl.u32 %v1420, 7
        %v1422 = vsub.s32 0, %v1421
        %v1423 = vrot.slane %v1418, %v1422
        %v1424 = vmul.f32 %v1385, %v1423
        %v1425 = vmul.f32 %v1382, %v1423
        %v1428 = vrot.slane %v1424, 2
        %v1429 = vrot.slane %v1425, 2
        %v1432 = vadd.f32 %v1414, %v1428
        %v1433 = vadd.f32 %v1415, %v1429
        %1434 = vset.pattern.permute.xlu0 28
        %1435 = vperm.xlu0 %1434, %v1225
        %v1436 = vpop.permute.xlu0 %1435
        %v1438 = vlaneseq
        %v1439 = vshrl.u32 %v1438, 7
        %v1440 = vsub.s32 0, %v1439
        %v1441 = vrot.slane %v1436, %v1440
        %v1442 = vmul.f32 %v1385, %v1441
        %v1443 = vmul.f32 %v1382, %v1441
        %v1446 = vrot.slane %v1442, 3
        %v1447 = vrot.slane %v1443, 3
        %v1450 = vadd.f32 %v1432, %v1446
        %v1451 = vadd.f32 %v1433, %v1447
        %1452 = vset.pattern.permute.xlu0 37
        %1453 = vperm.xlu0 %1452, %v1225
        %v1454 = vpop.permute.xlu0 %1453
        %v1456 = vlaneseq
        %v1457 = vshrl.u32 %v1456, 7
        %v1458 = vsub.s32 0, %v1457
        %v1459 = vrot.slane %v1454, %v1458
        %v1460 = vmul.f32 %v1385, %v1459
        %v1461 = vmul.f32 %v1382, %v1459
        %v1464 = vrot.slane %v1460, 4
        %v1465 = vrot.slane %v1461, 4
        %v1468 = vadd.f32 %v1450, %v1464
        %v1469 = vadd.f32 %v1451, %v1465
        %1470 = vset.pattern.permute.xlu0 46
        %1471 = vperm.xlu0 %1470, %v1225
        %v1472 = vpop.permute.xlu0 %1471
        %v1474 = vlaneseq
        %v1475 = vshrl.u32 %v1474, 7
        %v1476 = vsub.s32 0, %v1475
        %v1477 = vrot.slane %v1472, %v1476
        %v1478 = vmul.f32 %v1385, %v1477
        %v1479 = vmul.f32 %v1382, %v1477
        %v1482 = vrot.slane %v1478, 5
        %v1483 = vrot.slane %v1479, 5
        %v1486 = vadd.f32 %v1468, %v1482
        %v1487 = vadd.f32 %v1469, %v1483
        %1488 = vset.pattern.permute.xlu0 55
        %1489 = vperm.xlu0 %1488, %v1225
        %v1490 = vpop.permute.xlu0 %1489
        %v1492 = vlaneseq
        %v1493 = vshrl.u32 %v1492, 7
        %v1494 = vsub.s32 0, %v1493
        %v1495 = vrot.slane %v1490, %v1494
        %v1496 = vmul.f32 %v1385, %v1495
        %v1497 = vmul.f32 %v1382, %v1495
        %v1500 = vrot.slane %v1496, 6
        %v1501 = vrot.slane %v1497, 6
        %v1504 = vadd.f32 %v1486, %v1500
        %v1505 = vadd.f32 %v1487, %v1501
        %1506 = vset.pattern.permute.xlu0 64
        %1507 = vperm.xlu0 %1506, %v1225
        %v1508 = vpop.permute.xlu0 %1507
        %v1510 = vlaneseq
        %v1511 = vshrl.u32 %v1510, 7
        %v1512 = vsub.s32 0, %v1511
        %v1513 = vrot.slane %v1508, %v1512
        %v1514 = vmul.f32 %v1385, %v1513
        %v1515 = vmul.f32 %v1382, %v1513
        %v1518 = vrot.slane %v1514, 7
        %v1519 = vrot.slane %v1515, 7
        %v1522 = vadd.f32 %v1504, %v1518
        %v1523 = vadd.f32 %v1505, %v1519
        %1524 = vrot.lane.b32.xlu0 %v1223, 15
        %v1525 = vpop.permute.xlu0 %1524
        %1526 = vrot.lane.b32.xlu0 %v1224, 15
        %v1527 = vpop.permute.xlu0 %1526
        %v1528 = vsel %vm384, %v1525, %v1527
        %v1531 = vsel %vm384, 0.0, %v1525
        %v1532 = vmul.f32 %v1531, %v313
        %v1533 = vmul.f32 %v1528, %v314
        %1534 = vset.pattern.permute.xlu0 2
        %1535 = vperm.xlu0 %1534, %v1225
        %v1536 = vpop.permute.xlu0 %1535
        %v1538 = vlaneseq
        %v1539 = vshrl.u32 %v1538, 7
        %v1540 = vsub.s32 0, %v1539
        %v1541 = vrot.slane %v1536, %v1540
        %v1542 = vmul.f32 %v1532, %v1541
        %v1543 = vmul.f32 %v1533, %v1541
        %v1544 = vadd.f32 %v1522, %v1542
        %v1545 = vadd.f32 %v1523, %v1543
        %1546 = vset.pattern.permute.xlu0 11
        %1547 = vperm.xlu0 %1546, %v1225
        %v1548 = vpop.permute.xlu0 %1547
        %v1550 = vlaneseq
        %v1551 = vshrl.u32 %v1550, 7
        %v1552 = vsub.s32 0, %v1551
        %v1553 = vrot.slane %v1548, %v1552
        %v1554 = vmul.f32 %v1532, %v1553
        %v1555 = vmul.f32 %v1533, %v1553
        %v1558 = vrot.slane %v1554, 1
        %v1559 = vrot.slane %v1555, 1
        %v1562 = vadd.f32 %v1544, %v1558
        %v1563 = vadd.f32 %v1545, %v1559
        %1564 = vset.pattern.permute.xlu0 20
        %1565 = vperm.xlu0 %1564, %v1225
        %v1566 = vpop.permute.xlu0 %1565
        %v1568 = vlaneseq
        %v1569 = vshrl.u32 %v1568, 7
        %v1570 = vsub.s32 0, %v1569
        %v1571 = vrot.slane %v1566, %v1570
        %v1572 = vmul.f32 %v1532, %v1571
        %v1573 = vmul.f32 %v1533, %v1571
        %v1576 = vrot.slane %v1572, 2
        %v1577 = vrot.slane %v1573, 2
        %v1580 = vadd.f32 %v1562, %v1576
        %v1581 = vadd.f32 %v1563, %v1577
        %1582 = vset.pattern.permute.xlu0 29
        %1583 = vperm.xlu0 %1582, %v1225
        %v1584 = vpop.permute.xlu0 %1583
        %v1586 = vlaneseq
        %v1587 = vshrl.u32 %v1586, 7
        %v1588 = vsub.s32 0, %v1587
        %v1589 = vrot.slane %v1584, %v1588
        %v1590 = vmul.f32 %v1532, %v1589
        %v1591 = vmul.f32 %v1533, %v1589
        %v1594 = vrot.slane %v1590, 3
        %v1595 = vrot.slane %v1591, 3
        %v1598 = vadd.f32 %v1580, %v1594
        %v1599 = vadd.f32 %v1581, %v1595
        %1600 = vset.pattern.permute.xlu0 38
        %1601 = vperm.xlu0 %1600, %v1225
        %v1602 = vpop.permute.xlu0 %1601
        %v1604 = vlaneseq
        %v1605 = vshrl.u32 %v1604, 7
        %v1606 = vsub.s32 0, %v1605
        %v1607 = vrot.slane %v1602, %v1606
        %v1608 = vmul.f32 %v1532, %v1607
        %v1609 = vmul.f32 %v1533, %v1607
        %v1612 = vrot.slane %v1608, 4
        %v1613 = vrot.slane %v1609, 4
        %v1616 = vadd.f32 %v1598, %v1612
        %v1617 = vadd.f32 %v1599, %v1613
        %1618 = vset.pattern.permute.xlu0 47
        %1619 = vperm.xlu0 %1618, %v1225
        %v1620 = vpop.permute.xlu0 %1619
        %v1622 = vlaneseq
        %v1623 = vshrl.u32 %v1622, 7
        %v1624 = vsub.s32 0, %v1623
        %v1625 = vrot.slane %v1620, %v1624
        %v1626 = vmul.f32 %v1532, %v1625
        %v1627 = vmul.f32 %v1533, %v1625
        %v1630 = vrot.slane %v1626, 5
        %v1631 = vrot.slane %v1627, 5
        %v1634 = vadd.f32 %v1616, %v1630
        %v1635 = vadd.f32 %v1617, %v1631
        %1636 = vset.pattern.permute.xlu0 56
        %1637 = vperm.xlu0 %1636, %v1225
        %v1638 = vpop.permute.xlu0 %1637
        %v1640 = vlaneseq
        %v1641 = vshrl.u32 %v1640, 7
        %v1642 = vsub.s32 0, %v1641
        %v1643 = vrot.slane %v1638, %v1642
        %v1644 = vmul.f32 %v1532, %v1643
        %v1645 = vmul.f32 %v1533, %v1643
        %v1648 = vrot.slane %v1644, 6
        %v1649 = vrot.slane %v1645, 6
        %v1652 = vadd.f32 %v1634, %v1648
        %v1653 = vadd.f32 %v1635, %v1649
        %1654 = vset.pattern.permute.xlu0 65
        %1655 = vperm.xlu0 %1654, %v1225
        %v1656 = vpop.permute.xlu0 %1655
        %v1658 = vlaneseq
        %v1659 = vshrl.u32 %v1658, 7
        %v1660 = vsub.s32 0, %v1659
        %v1661 = vrot.slane %v1656, %v1660
        %v1662 = vmul.f32 %v1532, %v1661
        %v1663 = vmul.f32 %v1533, %v1661
        %v1666 = vrot.slane %v1662, 7
        %v1667 = vrot.slane %v1663, 7
        %v1670 = vadd.f32 %v1652, %v1666
        %v1671 = vadd.f32 %v1653, %v1667
        %1672 = vrot.lane.b32.xlu0 %v1223, 1
        %v1673 = vpop.permute.xlu0 %1672
        %1674 = vrot.lane.b32.xlu0 %v1224, 1
        %v1675 = vpop.permute.xlu0 %1674
        %v1676 = vsel %vm411, %v1673, %v1675
        %v1679 = vsel %vm411, 0.0, %v1673
        %v1680 = vmul.f32 %v1679, %v307
        %v1681 = vmul.f32 %v1676, %v308
        %1682 = vset.pattern.permute.xlu0 3
        %1683 = vperm.xlu0 %1682, %v1225
        %v1684 = vpop.permute.xlu0 %1683
        %v1686 = vlaneseq
        %v1687 = vshrl.u32 %v1686, 7
        %v1688 = vsub.s32 0, %v1687
        %v1689 = vrot.slane %v1684, %v1688
        %v1690 = vmul.f32 %v1680, %v1689
        %v1691 = vmul.f32 %v1681, %v1689
        %v1692 = vadd.f32 %v1670, %v1690
        %v1693 = vadd.f32 %v1671, %v1691
        %1694 = vset.pattern.permute.xlu0 12
        %1695 = vperm.xlu0 %1694, %v1225
        %v1696 = vpop.permute.xlu0 %1695
        %v1698 = vlaneseq
        %v1699 = vshrl.u32 %v1698, 7
        %v1700 = vsub.s32 0, %v1699
        %v1701 = vrot.slane %v1696, %v1700
        %v1702 = vmul.f32 %v1680, %v1701
        %v1703 = vmul.f32 %v1681, %v1701
        %v1706 = vrot.slane %v1702, 1
        %v1707 = vrot.slane %v1703, 1
        %v1710 = vadd.f32 %v1692, %v1706
        %v1711 = vadd.f32 %v1693, %v1707
        %1712 = vset.pattern.permute.xlu0 21
        %1713 = vperm.xlu0 %1712, %v1225
        %v1714 = vpop.permute.xlu0 %1713
        %v1716 = vlaneseq
        %v1717 = vshrl.u32 %v1716, 7
        %v1718 = vsub.s32 0, %v1717
        %v1719 = vrot.slane %v1714, %v1718
        %v1720 = vmul.f32 %v1680, %v1719
        %v1721 = vmul.f32 %v1681, %v1719
        %v1724 = vrot.slane %v1720, 2
        %v1725 = vrot.slane %v1721, 2
        %v1728 = vadd.f32 %v1710, %v1724
        %v1729 = vadd.f32 %v1711, %v1725
        %1730 = vset.pattern.permute.xlu0 30
        %1731 = vperm.xlu0 %1730, %v1225
        %v1732 = vpop.permute.xlu0 %1731
        %v1734 = vlaneseq
        %v1735 = vshrl.u32 %v1734, 7
        %v1736 = vsub.s32 0, %v1735
        %v1737 = vrot.slane %v1732, %v1736
        %v1738 = vmul.f32 %v1680, %v1737
        %v1739 = vmul.f32 %v1681, %v1737
        %v1742 = vrot.slane %v1738, 3
        %v1743 = vrot.slane %v1739, 3
        %v1746 = vadd.f32 %v1728, %v1742
        %v1747 = vadd.f32 %v1729, %v1743
        %1748 = vset.pattern.permute.xlu0 39
        %1749 = vperm.xlu0 %1748, %v1225
        %v1750 = vpop.permute.xlu0 %1749
        %v1752 = vlaneseq
        %v1753 = vshrl.u32 %v1752, 7
        %v1754 = vsub.s32 0, %v1753
        %v1755 = vrot.slane %v1750, %v1754
        %v1756 = vmul.f32 %v1680, %v1755
        %v1757 = vmul.f32 %v1681, %v1755
        %v1760 = vrot.slane %v1756, 4
        %v1761 = vrot.slane %v1757, 4
        %v1764 = vadd.f32 %v1746, %v1760
        %v1765 = vadd.f32 %v1747, %v1761
        %1766 = vset.pattern.permute.xlu0 48
        %1767 = vperm.xlu0 %1766, %v1225
        %v1768 = vpop.permute.xlu0 %1767
        %v1770 = vlaneseq
        %v1771 = vshrl.u32 %v1770, 7
        %v1772 = vsub.s32 0, %v1771
        %v1773 = vrot.slane %v1768, %v1772
        %v1774 = vmul.f32 %v1680, %v1773
        %v1775 = vmul.f32 %v1681, %v1773
        %v1778 = vrot.slane %v1774, 5
        %v1779 = vrot.slane %v1775, 5
        %v1782 = vadd.f32 %v1764, %v1778
        %v1783 = vadd.f32 %v1765, %v1779
        %1784 = vset.pattern.permute.xlu0 57
        %1785 = vperm.xlu0 %1784, %v1225
        %v1786 = vpop.permute.xlu0 %1785
        %v1788 = vlaneseq
        %v1789 = vshrl.u32 %v1788, 7
        %v1790 = vsub.s32 0, %v1789
        %v1791 = vrot.slane %v1786, %v1790
        %v1792 = vmul.f32 %v1680, %v1791
        %v1793 = vmul.f32 %v1681, %v1791
        %v1796 = vrot.slane %v1792, 6
        %v1797 = vrot.slane %v1793, 6
        %v1800 = vadd.f32 %v1782, %v1796
        %v1801 = vadd.f32 %v1783, %v1797
        %1802 = vset.pattern.permute.xlu0 66
        %1803 = vperm.xlu0 %1802, %v1225
        %v1804 = vpop.permute.xlu0 %1803
        %v1806 = vlaneseq
        %v1807 = vshrl.u32 %v1806, 7
        %v1808 = vsub.s32 0, %v1807
        %v1809 = vrot.slane %v1804, %v1808
        %v1810 = vmul.f32 %v1680, %v1809
        %v1811 = vmul.f32 %v1681, %v1809
        %v1814 = vrot.slane %v1810, 7
        %v1815 = vrot.slane %v1811, 7
        %v1818 = vadd.f32 %v1800, %v1814
        %v1819 = vadd.f32 %v1801, %v1815
        %1820 = vset.pattern.permute.xlu0 4
        %1821 = vperm.xlu0 %1820, %v1225
        %v1822 = vpop.permute.xlu0 %1821
        %v1824 = vlaneseq
        %v1825 = vshrl.u32 %v1824, 7
        %v1826 = vsub.s32 0, %v1825
        %v1827 = vrot.slane %v1822, %v1826
        %v1828 = vmul.f32 %v1223, %v1827
        %v1829 = vmul.f32 %v1224, %v1827
        %v1830 = vadd.f32 %v1818, %v1828
        %v1831 = vadd.f32 %v1819, %v1829
        %1832 = vset.pattern.permute.xlu0 13
        %1833 = vperm.xlu0 %1832, %v1225
        %v1834 = vpop.permute.xlu0 %1833
        %v1836 = vlaneseq
        %v1837 = vshrl.u32 %v1836, 7
        %v1838 = vsub.s32 0, %v1837
        %v1839 = vrot.slane %v1834, %v1838
        %v1840 = vmul.f32 %v1223, %v1839
        %v1841 = vmul.f32 %v1224, %v1839
        %v1844 = vrot.slane %v1840, 1
        %v1845 = vrot.slane %v1841, 1
        %v1848 = vadd.f32 %v1830, %v1844
        %v1849 = vadd.f32 %v1831, %v1845
        %1850 = vset.pattern.permute.xlu0 22
        %1851 = vperm.xlu0 %1850, %v1225
        %v1852 = vpop.permute.xlu0 %1851
        %v1854 = vlaneseq
        %v1855 = vshrl.u32 %v1854, 7
        %v1856 = vsub.s32 0, %v1855
        %v1857 = vrot.slane %v1852, %v1856
        %v1858 = vmul.f32 %v1223, %v1857
        %v1859 = vmul.f32 %v1224, %v1857
        %v1862 = vrot.slane %v1858, 2
        %v1863 = vrot.slane %v1859, 2
        %v1866 = vadd.f32 %v1848, %v1862
        %v1867 = vadd.f32 %v1849, %v1863
        %1868 = vset.pattern.permute.xlu0 31
        %1869 = vperm.xlu0 %1868, %v1225
        %v1870 = vpop.permute.xlu0 %1869
        %v1872 = vlaneseq
        %v1873 = vshrl.u32 %v1872, 7
        %v1874 = vsub.s32 0, %v1873
        %v1875 = vrot.slane %v1870, %v1874
        %v1876 = vmul.f32 %v1223, %v1875
        %v1877 = vmul.f32 %v1224, %v1875
        %v1880 = vrot.slane %v1876, 3
        %v1881 = vrot.slane %v1877, 3
        %v1884 = vadd.f32 %v1866, %v1880
        %v1885 = vadd.f32 %v1867, %v1881
        %1886 = vset.pattern.permute.xlu0 40
        %1887 = vperm.xlu0 %1886, %v1225
        %v1888 = vpop.permute.xlu0 %1887
        %v1890 = vlaneseq
        %v1891 = vshrl.u32 %v1890, 7
        %v1892 = vsub.s32 0, %v1891
        %v1893 = vrot.slane %v1888, %v1892
        %v1894 = vmul.f32 %v1223, %v1893
        %v1895 = vmul.f32 %v1224, %v1893
        %v1898 = vrot.slane %v1894, 4
        %v1899 = vrot.slane %v1895, 4
        %v1902 = vadd.f32 %v1884, %v1898
        %v1903 = vadd.f32 %v1885, %v1899
        %1904 = vset.pattern.permute.xlu0 49
        %1905 = vperm.xlu0 %1904, %v1225
        %v1906 = vpop.permute.xlu0 %1905
        %v1908 = vlaneseq
        %v1909 = vshrl.u32 %v1908, 7
        %v1910 = vsub.s32 0, %v1909
        %v1911 = vrot.slane %v1906, %v1910
        %v1912 = vmul.f32 %v1223, %v1911
        %v1913 = vmul.f32 %v1224, %v1911
        %v1916 = vrot.slane %v1912, 5
        %v1917 = vrot.slane %v1913, 5
        %v1920 = vadd.f32 %v1902, %v1916
        %v1921 = vadd.f32 %v1903, %v1917
        %1922 = vset.pattern.permute.xlu0 58
        %1923 = vperm.xlu0 %1922, %v1225
        %v1924 = vpop.permute.xlu0 %1923
        %v1926 = vlaneseq
        %v1927 = vshrl.u32 %v1926, 7
        %v1928 = vsub.s32 0, %v1927
        %v1929 = vrot.slane %v1924, %v1928
        %v1930 = vmul.f32 %v1223, %v1929
        %v1931 = vmul.f32 %v1224, %v1929
        %v1934 = vrot.slane %v1930, 6
        %v1935 = vrot.slane %v1931, 6
        %v1938 = vadd.f32 %v1920, %v1934
        %v1939 = vadd.f32 %v1921, %v1935
        %1940 = vset.pattern.permute.xlu0 67
        %1941 = vperm.xlu0 %1940, %v1225
        %v1942 = vpop.permute.xlu0 %1941
        %v1944 = vlaneseq
        %v1945 = vshrl.u32 %v1944, 7
        %v1946 = vsub.s32 0, %v1945
        %v1947 = vrot.slane %v1942, %v1946
        %v1948 = vmul.f32 %v1223, %v1947
        %v1949 = vmul.f32 %v1224, %v1947
        %v1952 = vrot.slane %v1948, 7
        %v1953 = vrot.slane %v1949, 7
        %v1956 = vadd.f32 %v1938, %v1952
        %v1957 = vadd.f32 %v1939, %v1953
        %1958 = vrot.lane.b32.xlu0 %v1223, 127
        %v1959 = vpop.permute.xlu0 %1958
        %1960 = vrot.lane.b32.xlu0 %v1224, 127
        %v1961 = vpop.permute.xlu0 %1960
        %v1962 = vsel %vm448, %v1959, %v1961
        %v1965 = vsel %vm448, %v1961, 0.0
        %v1966 = vmul.f32 %v1962, %v313
        %v1967 = vmul.f32 %v1965, %v314
        %1968 = vset.pattern.permute.xlu0 5
        %1969 = vperm.xlu0 %1968, %v1225
        %v1970 = vpop.permute.xlu0 %1969
        %v1972 = vlaneseq
        %v1973 = vshrl.u32 %v1972, 7
        %v1974 = vsub.s32 0, %v1973
        %v1975 = vrot.slane %v1970, %v1974
        %v1976 = vmul.f32 %v1966, %v1975
        %v1977 = vmul.f32 %v1967, %v1975
        %v1978 = vadd.f32 %v1956, %v1976
        %v1979 = vadd.f32 %v1957, %v1977
        %1980 = vset.pattern.permute.xlu0 14
        %1981 = vperm.xlu0 %1980, %v1225
        %v1982 = vpop.permute.xlu0 %1981
        %v1984 = vlaneseq
        %v1985 = vshrl.u32 %v1984, 7
        %v1986 = vsub.s32 0, %v1985
        %v1987 = vrot.slane %v1982, %v1986
        %v1988 = vmul.f32 %v1966, %v1987
        %v1989 = vmul.f32 %v1967, %v1987
        %v1992 = vrot.slane %v1988, 1
        %v1993 = vrot.slane %v1989, 1
        %v1996 = vadd.f32 %v1978, %v1992
        %v1997 = vadd.f32 %v1979, %v1993
        %1998 = vset.pattern.permute.xlu0 23
        %1999 = vperm.xlu0 %1998, %v1225
        %v2000 = vpop.permute.xlu0 %1999
        %v2002 = vlaneseq
        %v2003 = vshrl.u32 %v2002, 7
        %v2004 = vsub.s32 0, %v2003
        %v2005 = vrot.slane %v2000, %v2004
        %v2006 = vmul.f32 %v1966, %v2005
        %v2007 = vmul.f32 %v1967, %v2005
        %v2010 = vrot.slane %v2006, 2
        %v2011 = vrot.slane %v2007, 2
        %v2014 = vadd.f32 %v1996, %v2010
        %v2015 = vadd.f32 %v1997, %v2011
        %2016 = vset.pattern.permute.xlu0 32
        %2017 = vperm.xlu0 %2016, %v1225
        %v2018 = vpop.permute.xlu0 %2017
        %v2020 = vlaneseq
        %v2021 = vshrl.u32 %v2020, 7
        %v2022 = vsub.s32 0, %v2021
        %v2023 = vrot.slane %v2018, %v2022
        %v2024 = vmul.f32 %v1966, %v2023
        %v2025 = vmul.f32 %v1967, %v2023
        %v2028 = vrot.slane %v2024, 3
        %v2029 = vrot.slane %v2025, 3
        %v2032 = vadd.f32 %v2014, %v2028
        %v2033 = vadd.f32 %v2015, %v2029
        %2034 = vset.pattern.permute.xlu0 41
        %2035 = vperm.xlu0 %2034, %v1225
        %v2036 = vpop.permute.xlu0 %2035
        %v2038 = vlaneseq
        %v2039 = vshrl.u32 %v2038, 7
        %v2040 = vsub.s32 0, %v2039
        %v2041 = vrot.slane %v2036, %v2040
        %v2042 = vmul.f32 %v1966, %v2041
        %v2043 = vmul.f32 %v1967, %v2041
        %v2046 = vrot.slane %v2042, 4
        %v2047 = vrot.slane %v2043, 4
        %v2050 = vadd.f32 %v2032, %v2046
        %v2051 = vadd.f32 %v2033, %v2047
        %2052 = vset.pattern.permute.xlu0 50
        %2053 = vperm.xlu0 %2052, %v1225
        %v2054 = vpop.permute.xlu0 %2053
        %v2056 = vlaneseq
        %v2057 = vshrl.u32 %v2056, 7
        %v2058 = vsub.s32 0, %v2057
        %v2059 = vrot.slane %v2054, %v2058
        %v2060 = vmul.f32 %v1966, %v2059
        %v2061 = vmul.f32 %v1967, %v2059
        %v2064 = vrot.slane %v2060, 5
        %v2065 = vrot.slane %v2061, 5
        %v2068 = vadd.f32 %v2050, %v2064
        %v2069 = vadd.f32 %v2051, %v2065
        %2070 = vset.pattern.permute.xlu0 59
        %2071 = vperm.xlu0 %2070, %v1225
        %v2072 = vpop.permute.xlu0 %2071
        %v2074 = vlaneseq
        %v2075 = vshrl.u32 %v2074, 7
        %v2076 = vsub.s32 0, %v2075
        %v2077 = vrot.slane %v2072, %v2076
        %v2078 = vmul.f32 %v1966, %v2077
        %v2079 = vmul.f32 %v1967, %v2077
        %v2082 = vrot.slane %v2078, 6
        %v2083 = vrot.slane %v2079, 6
        %v2086 = vadd.f32 %v2068, %v2082
        %v2087 = vadd.f32 %v2069, %v2083
        %2088 = vset.pattern.permute.xlu0 68
        %2089 = vperm.xlu0 %2088, %v1225
        %v2090 = vpop.permute.xlu0 %2089
        %v2092 = vlaneseq
        %v2093 = vshrl.u32 %v2092, 7
        %v2094 = vsub.s32 0, %v2093
        %v2095 = vrot.slane %v2090, %v2094
        %v2096 = vmul.f32 %v1966, %v2095
        %v2097 = vmul.f32 %v1967, %v2095
        %v2100 = vrot.slane %v2096, 7
        %v2101 = vrot.slane %v2097, 7
        %v2104 = vadd.f32 %v2086, %v2100
        %v2105 = vadd.f32 %v2087, %v2101
        %2106 = vrot.lane.b32.xlu0 %v1223, 113
        %v2107 = vpop.permute.xlu0 %2106
        %2108 = vrot.lane.b32.xlu0 %v1224, 113
        %v2109 = vpop.permute.xlu0 %2108
        %v2110 = vsel %vm475, %v2107, %v2109
        %v2113 = vsel %vm475, %v2109, 0.0
        %v2114 = vmul.f32 %v2110, %v307
        %v2115 = vmul.f32 %v2113, %v308
        %2116 = vset.pattern.permute.xlu0 6
        %2117 = vperm.xlu0 %2116, %v1225
        %v2118 = vpop.permute.xlu0 %2117
        %v2120 = vlaneseq
        %v2121 = vshrl.u32 %v2120, 7
        %v2122 = vsub.s32 0, %v2121
        %v2123 = vrot.slane %v2118, %v2122
        %v2124 = vmul.f32 %v2114, %v2123
        %v2125 = vmul.f32 %v2115, %v2123
        %v2126 = vadd.f32 %v2104, %v2124
        %v2127 = vadd.f32 %v2105, %v2125
        %2128 = vset.pattern.permute.xlu0 15
        %2129 = vperm.xlu0 %2128, %v1225
        %v2130 = vpop.permute.xlu0 %2129
        %v2132 = vlaneseq
        %v2133 = vshrl.u32 %v2132, 7
        %v2134 = vsub.s32 0, %v2133
        %v2135 = vrot.slane %v2130, %v2134
        %v2136 = vmul.f32 %v2114, %v2135
        %v2137 = vmul.f32 %v2115, %v2135
        %v2140 = vrot.slane %v2136, 1
        %v2141 = vrot.slane %v2137, 1
        %v2144 = vadd.f32 %v2126, %v2140
        %v2145 = vadd.f32 %v2127, %v2141
        %2146 = vset.pattern.permute.xlu0 24
        %2147 = vperm.xlu0 %2146, %v1225
        %v2148 = vpop.permute.xlu0 %2147
        %v2150 = vlaneseq
        %v2151 = vshrl.u32 %v2150, 7
        %v2152 = vsub.s32 0, %v2151
        %v2153 = vrot.slane %v2148, %v2152
        %v2154 = vmul.f32 %v2114, %v2153
        %v2155 = vmul.f32 %v2115, %v2153
        %v2158 = vrot.slane %v2154, 2
        %v2159 = vrot.slane %v2155, 2
        %v2162 = vadd.f32 %v2144, %v2158
        %v2163 = vadd.f32 %v2145, %v2159
        %2164 = vset.pattern.permute.xlu0 33
        %2165 = vperm.xlu0 %2164, %v1225
        %v2166 = vpop.permute.xlu0 %2165
        %v2168 = vlaneseq
        %v2169 = vshrl.u32 %v2168, 7
        %v2170 = vsub.s32 0, %v2169
        %v2171 = vrot.slane %v2166, %v2170
        %v2172 = vmul.f32 %v2114, %v2171
        %v2173 = vmul.f32 %v2115, %v2171
        %v2176 = vrot.slane %v2172, 3
        %v2177 = vrot.slane %v2173, 3
        %v2180 = vadd.f32 %v2162, %v2176
        %v2181 = vadd.f32 %v2163, %v2177
        %2182 = vset.pattern.permute.xlu0 42
        %2183 = vperm.xlu0 %2182, %v1225
        %v2184 = vpop.permute.xlu0 %2183
        %v2186 = vlaneseq
        %v2187 = vshrl.u32 %v2186, 7
        %v2188 = vsub.s32 0, %v2187
        %v2189 = vrot.slane %v2184, %v2188
        %v2190 = vmul.f32 %v2114, %v2189
        %v2191 = vmul.f32 %v2115, %v2189
        %v2194 = vrot.slane %v2190, 4
        %v2195 = vrot.slane %v2191, 4
        %v2198 = vadd.f32 %v2180, %v2194
        %v2199 = vadd.f32 %v2181, %v2195
        %2200 = vset.pattern.permute.xlu0 51
        %2201 = vperm.xlu0 %2200, %v1225
        %v2202 = vpop.permute.xlu0 %2201
        %v2204 = vlaneseq
        %v2205 = vshrl.u32 %v2204, 7
        %v2206 = vsub.s32 0, %v2205
        %v2207 = vrot.slane %v2202, %v2206
        %v2208 = vmul.f32 %v2114, %v2207
        %v2209 = vmul.f32 %v2115, %v2207
        %v2212 = vrot.slane %v2208, 5
        %v2213 = vrot.slane %v2209, 5
        %v2216 = vadd.f32 %v2198, %v2212
        %v2217 = vadd.f32 %v2199, %v2213
        %2218 = vset.pattern.permute.xlu0 60
        %2219 = vperm.xlu0 %2218, %v1225
        %v2220 = vpop.permute.xlu0 %2219
        %v2222 = vlaneseq
        %v2223 = vshrl.u32 %v2222, 7
        %v2224 = vsub.s32 0, %v2223
        %v2225 = vrot.slane %v2220, %v2224
        %v2226 = vmul.f32 %v2114, %v2225
        %v2227 = vmul.f32 %v2115, %v2225
        %v2230 = vrot.slane %v2226, 6
        %v2231 = vrot.slane %v2227, 6
        %v2234 = vadd.f32 %v2216, %v2230
        %v2235 = vadd.f32 %v2217, %v2231
        %2236 = vset.pattern.permute.xlu0 69
        %2237 = vperm.xlu0 %2236, %v1225
        %v2238 = vpop.permute.xlu0 %2237
        %v2240 = vlaneseq
        %v2241 = vshrl.u32 %v2240, 7
        %v2242 = vsub.s32 0, %v2241
        %v2243 = vrot.slane %v2238, %v2242
        %v2244 = vmul.f32 %v2114, %v2243
        %v2245 = vmul.f32 %v2115, %v2243
        %v2248 = vrot.slane %v2244, 7
        %v2249 = vrot.slane %v2245, 7
        %v2252 = vadd.f32 %v2234, %v2248
        %v2253 = vadd.f32 %v2235, %v2249
        %2254 = vrot.lane.b32.xlu0 %v1223, 112
        %v2255 = vpop.permute.xlu0 %2254
        %2256 = vrot.lane.b32.xlu0 %v1224, 112
        %v2257 = vpop.permute.xlu0 %2256
        %v2258 = vsel %vm502, %v2255, %v2257
        %v2261 = vsel %vm502, %v2257, 0.0
        %2262 = vset.pattern.permute.xlu0 7
        %2263 = vperm.xlu0 %2262, %v1225
        %v2264 = vpop.permute.xlu0 %2263
        %v2266 = vlaneseq
        %v2267 = vshrl.u32 %v2266, 7
        %v2268 = vsub.s32 0, %v2267
        %v2269 = vrot.slane %v2264, %v2268
        %v2270 = vmul.f32 %v2258, %v2269
        %v2271 = vmul.f32 %v2261, %v2269
        %v2272 = vadd.f32 %v2252, %v2270
        %v2273 = vadd.f32 %v2253, %v2271
        %2274 = vset.pattern.permute.xlu0 16
        %2275 = vperm.xlu0 %2274, %v1225
        %v2276 = vpop.permute.xlu0 %2275
        %v2278 = vlaneseq
        %v2279 = vshrl.u32 %v2278, 7
        %v2280 = vsub.s32 0, %v2279
        %v2281 = vrot.slane %v2276, %v2280
        %v2282 = vmul.f32 %v2258, %v2281
        %v2283 = vmul.f32 %v2261, %v2281
        %v2286 = vrot.slane %v2282, 1
        %v2287 = vrot.slane %v2283, 1
        %v2290 = vadd.f32 %v2272, %v2286
        %v2291 = vadd.f32 %v2273, %v2287
        %2292 = vset.pattern.permute.xlu0 25
        %2293 = vperm.xlu0 %2292, %v1225
        %v2294 = vpop.permute.xlu0 %2293
        %v2296 = vlaneseq
        %v2297 = vshrl.u32 %v2296, 7
        %v2298 = vsub.s32 0, %v2297
        %v2299 = vrot.slane %v2294, %v2298
        %v2300 = vmul.f32 %v2258, %v2299
        %v2301 = vmul.f32 %v2261, %v2299
        %v2304 = vrot.slane %v2300, 2
        %v2305 = vrot.slane %v2301, 2
        %v2308 = vadd.f32 %v2290, %v2304
        %v2309 = vadd.f32 %v2291, %v2305
        %2310 = vset.pattern.permute.xlu0 34
        %2311 = vperm.xlu0 %2310, %v1225
        %v2312 = vpop.permute.xlu0 %2311
        %v2314 = vlaneseq
        %v2315 = vshrl.u32 %v2314, 7
        %v2316 = vsub.s32 0, %v2315
        %v2317 = vrot.slane %v2312, %v2316
        %v2318 = vmul.f32 %v2258, %v2317
        %v2319 = vmul.f32 %v2261, %v2317
        %v2322 = vrot.slane %v2318, 3
        %v2323 = vrot.slane %v2319, 3
        %v2326 = vadd.f32 %v2308, %v2322
        %v2327 = vadd.f32 %v2309, %v2323
        %2328 = vset.pattern.permute.xlu0 43
        %2329 = vperm.xlu0 %2328, %v1225
        %v2330 = vpop.permute.xlu0 %2329
        %v2332 = vlaneseq
        %v2333 = vshrl.u32 %v2332, 7
        %v2334 = vsub.s32 0, %v2333
        %v2335 = vrot.slane %v2330, %v2334
        %v2336 = vmul.f32 %v2258, %v2335
        %v2337 = vmul.f32 %v2261, %v2335
        %v2340 = vrot.slane %v2336, 4
        %v2341 = vrot.slane %v2337, 4
        %v2344 = vadd.f32 %v2326, %v2340
        %v2345 = vadd.f32 %v2327, %v2341
        %2346 = vset.pattern.permute.xlu0 52
        %2347 = vperm.xlu0 %2346, %v1225
        %v2348 = vpop.permute.xlu0 %2347
        %v2350 = vlaneseq
        %v2351 = vshrl.u32 %v2350, 7
        %v2352 = vsub.s32 0, %v2351
        %v2353 = vrot.slane %v2348, %v2352
        %v2354 = vmul.f32 %v2258, %v2353
        %v2355 = vmul.f32 %v2261, %v2353
        %v2358 = vrot.slane %v2354, 5
        %v2359 = vrot.slane %v2355, 5
        %v2362 = vadd.f32 %v2344, %v2358
        %v2363 = vadd.f32 %v2345, %v2359
        %2364 = vset.pattern.permute.xlu0 61
        %2365 = vperm.xlu0 %2364, %v1225
        %v2366 = vpop.permute.xlu0 %2365
        %v2368 = vlaneseq
        %v2369 = vshrl.u32 %v2368, 7
        %v2370 = vsub.s32 0, %v2369
        %v2371 = vrot.slane %v2366, %v2370
        %v2372 = vmul.f32 %v2258, %v2371
        %v2373 = vmul.f32 %v2261, %v2371
        %v2376 = vrot.slane %v2372, 6
        %v2377 = vrot.slane %v2373, 6
        %v2380 = vadd.f32 %v2362, %v2376
        %v2381 = vadd.f32 %v2363, %v2377
        %2382 = vset.pattern.permute.xlu0 70
        %2383 = vperm.xlu0 %2382, %v1225
        %v2384 = vpop.permute.xlu0 %2383
        %v2386 = vlaneseq
        %v2387 = vshrl.u32 %v2386, 7
        %v2388 = vsub.s32 0, %v2387
        %v2389 = vrot.slane %v2384, %v2388
        %v2390 = vmul.f32 %v2258, %v2389
        %v2391 = vmul.f32 %v2261, %v2389
        %v2394 = vrot.slane %v2390, 7
        %v2395 = vrot.slane %v2391, 7
        %v2398 = vadd.f32 %v2380, %v2394
        %v2399 = vadd.f32 %v2381, %v2395
        %2400 = vrot.lane.b32.xlu0 %v1223, 111
        %v2401 = vpop.permute.xlu0 %2400
        %2402 = vrot.lane.b32.xlu0 %v1224, 111
        %v2403 = vpop.permute.xlu0 %2402
        %v2404 = vsel %vm527, %v2401, %v2403
        %v2407 = vsel %vm527, %v2403, 0.0
        %v2408 = vmul.f32 %v2404, %v313
        %v2409 = vmul.f32 %v2407, %v314
        %2410 = vset.pattern.permute.xlu0 8
        %2411 = vperm.xlu0 %2410, %v1225
        %v2412 = vpop.permute.xlu0 %2411
        %v2414 = vlaneseq
        %v2415 = vshrl.u32 %v2414, 7
        %v2416 = vsub.s32 0, %v2415
        %v2417 = vrot.slane %v2412, %v2416
        %v2418 = vmul.f32 %v2408, %v2417
        %v2419 = vmul.f32 %v2409, %v2417
        %v2420 = vadd.f32 %v2398, %v2418
        %v2421 = vadd.f32 %v2399, %v2419
        %2422 = vset.pattern.permute.xlu0 17
        %2423 = vperm.xlu0 %2422, %v1225
        %v2424 = vpop.permute.xlu0 %2423
        %v2426 = vlaneseq
        %v2427 = vshrl.u32 %v2426, 7
        %v2428 = vsub.s32 0, %v2427
        %v2429 = vrot.slane %v2424, %v2428
        %v2430 = vmul.f32 %v2408, %v2429
        %v2431 = vmul.f32 %v2409, %v2429
        %v2434 = vrot.slane %v2430, 1
        %v2435 = vrot.slane %v2431, 1
        %v2438 = vadd.f32 %v2420, %v2434
        %v2439 = vadd.f32 %v2421, %v2435
        %2440 = vset.pattern.permute.xlu0 26
        %2441 = vperm.xlu0 %2440, %v1225
        %v2442 = vpop.permute.xlu0 %2441
        %v2444 = vlaneseq
        %v2445 = vshrl.u32 %v2444, 7
        %v2446 = vsub.s32 0, %v2445
        %v2447 = vrot.slane %v2442, %v2446
        %v2448 = vmul.f32 %v2408, %v2447
        %v2449 = vmul.f32 %v2409, %v2447
        %v2452 = vrot.slane %v2448, 2
        %v2453 = vrot.slane %v2449, 2
        %v2456 = vadd.f32 %v2438, %v2452
        %v2457 = vadd.f32 %v2439, %v2453
        %2458 = vset.pattern.permute.xlu0 35
        %2459 = vperm.xlu0 %2458, %v1225
        %v2460 = vpop.permute.xlu0 %2459
        %v2462 = vlaneseq
        %v2463 = vshrl.u32 %v2462, 7
        %v2464 = vsub.s32 0, %v2463
        %v2465 = vrot.slane %v2460, %v2464
        %v2466 = vmul.f32 %v2408, %v2465
        %v2467 = vmul.f32 %v2409, %v2465
        %v2470 = vrot.slane %v2466, 3
        %v2471 = vrot.slane %v2467, 3
        %v2474 = vadd.f32 %v2456, %v2470
        %v2475 = vadd.f32 %v2457, %v2471
        %2476 = vset.pattern.permute.xlu0 44
        %2477 = vperm.xlu0 %2476, %v1225
        %v2478 = vpop.permute.xlu0 %2477
        %v2480 = vlaneseq
        %v2481 = vshrl.u32 %v2480, 7
        %v2482 = vsub.s32 0, %v2481
        %v2483 = vrot.slane %v2478, %v2482
        %v2484 = vmul.f32 %v2408, %v2483
        %v2485 = vmul.f32 %v2409, %v2483
        %v2488 = vrot.slane %v2484, 4
        %v2489 = vrot.slane %v2485, 4
        %v2492 = vadd.f32 %v2474, %v2488
        %v2493 = vadd.f32 %v2475, %v2489
        %2494 = vset.pattern.permute.xlu0 53
        %2495 = vperm.xlu0 %2494, %v1225
        %v2496 = vpop.permute.xlu0 %2495
        %v2498 = vlaneseq
        %v2499 = vshrl.u32 %v2498, 7
        %v2500 = vsub.s32 0, %v2499
        %v2501 = vrot.slane %v2496, %v2500
        %v2502 = vmul.f32 %v2408, %v2501
        %v2503 = vmul.f32 %v2409, %v2501
        %v2506 = vrot.slane %v2502, 5
        %v2507 = vrot.slane %v2503, 5
        %v2510 = vadd.f32 %v2492, %v2506
        %v2511 = vadd.f32 %v2493, %v2507
        %2512 = vset.pattern.permute.xlu0 62
        %2513 = vperm.xlu0 %2512, %v1225
        %v2514 = vpop.permute.xlu0 %2513
        %v2516 = vlaneseq
        %v2517 = vshrl.u32 %v2516, 7
        %v2518 = vsub.s32 0, %v2517
        %v2519 = vrot.slane %v2514, %v2518
        %v2520 = vmul.f32 %v2408, %v2519
        %v2521 = vmul.f32 %v2409, %v2519
        %v2524 = vrot.slane %v2520, 6
        %v2525 = vrot.slane %v2521, 6
        %v2528 = vadd.f32 %v2510, %v2524
        %v2529 = vadd.f32 %v2511, %v2525
        %2530 = vset.pattern.permute.xlu0 71
        %2531 = vperm.xlu0 %2530, %v1225
        %v2532 = vpop.permute.xlu0 %2531
        %v2534 = vlaneseq
        %v2535 = vshrl.u32 %v2534, 7
        %v2536 = vsub.s32 0, %v2535
        %v2537 = vrot.slane %v2532, %v2536
        %v2538 = vmul.f32 %v2408, %v2537
        %v2539 = vmul.f32 %v2409, %v2537
        %v2542 = vrot.slane %v2538, 7
        %v2543 = vrot.slane %v2539, 7
        %v2546 = vadd.f32 %v2528, %v2542
        %v2547 = vadd.f32 %v2529, %v2543
        %2549 = vset.pattern.permute.xlu0 0
        %2550 = vperm.xlu0 %2549, %v1226
        %v2551 = vpop.permute.xlu0 %2550
        %v2553 = vlaneseq
        %v2554 = vshrl.u32 %v2553, 7
        %v2555 = vsub.s32 0, %v2554
        %v2556 = vrot.slane %v2551, %v2555
        %v2557 = vadd.f32 %v2546, %v2556
        %v2558 = vadd.f32 %v2547, %v2556
        %v2559 = vmax.f32 %v2557, 0.0
        %v2560 = vmax.f32 %v2558, 0.0
        %v2563 = vcombine.low %v2559, %v2560
        %v2565 = vunpack.c.l.s4 1966171168
        %v2566 = vunpack.c.0.s8 %v2565
        %v2567 = vlaneseq
        %v2568 = vshrl.u32 %v2567, 7
        %v2569 = vsub.s32 %v2566, %v2568
        %v2570 = vrot.slane %v2563, %v2569
        %v2572 = vunpack.c.l.s4 1966171168
        %v2573 = vunpack.c.0.s8 %v2572
        %v2574 = vlaneseq
        %v2575 = vshrl.u32 %v2574, 7
        %v2576 = vsub.s32 %v2573, %v2575
        %v2577 = vrot.slane %v2570, %v2576
        %v2579 = vlaneseq
        %vm2580 = vcmp.ge.s32.totalorder %v2579, 0
        %vm2581 = vcmp.lt.s32.totalorder %v2579, 256
        %vm2582 = vmand %vm2580, %vm2581
        %2583 = vst.msk [vmem:[%s271] sm:$0x3] %vm2582, %v2577
        %s2584 = sand.u32 %s183, 1
        %s2585 = scalar_lea.sflag [#allocation4], %s2584
        %s2586 = sand.u32 %s183, 1
        %s2587 = smul.addr %s2586, 2
        %s2588 = scalar_lea.vmem [#allocation3], %s2587
        // Predicated region
        $region49: #{tpu_custom_call.1} parent=47 // pred_check
          %p2589 = pneg %p193
        $region50: #{tpu_custom_call.1} parent=47 // pred_check_branch
          %2591 = sbr.rel (%p2589) target = $region52
        $region51: #{tpu_custom_call.1} parent=47 // pred_region
          %s2593 = ssub.s32 32, 32
          %2594 = vsyncadd %s2585, %s2593
          %s2595 = smul.addr %s23, 2
          %s2596 = smul.addr %s2595, 16
          %s2597 = scalar_lea.hbm %s7, %s2596
          %s2599 = sshll.u32 %s2588, 4
          %s2600 = int_to_ptr.vmem [resolvable:$true] %s2599
          %2602 = dma.vmem_to_hbm [thread:$0]  %s2600, 32, %s2597, %s2585
        $region52: #{tpu_custom_call.1} parent=47 // pred_fallthru
          _
      $region48: #{tpu_custom_call.1} parent=5 // pred_fallthru
        _
      %p2603 = scmp.le.s32.totalorder 2, %s18
      // Predicated region
      $region53: #{tpu_custom_call.1} parent=5 // pred_check
        %p2604 = pneg %p2603
      $region54: #{tpu_custom_call.1} parent=5 // pred_check_branch
        %2606 = sbr.rel (%p2604) target = $region56
      $region55: #{tpu_custom_call.1} parent=5 // pred_region
        %s2607 = ssub.s32 %s18, 2
        // Predicated region
        $region57: #{tpu_custom_call.1} parent=55 // pred_check
          %p2608 = pneg %p199
        $region58: #{tpu_custom_call.1} parent=55 // pred_check_branch
          %2610 = sbr.rel (%p2608) target = $region60
        $region59: #{tpu_custom_call.1} parent=55 // pred_region
          %s2611 = sand.u32 %s184, 1
          %s2612 = scalar_lea.sflag [#allocation4], %s2611
          %s2613 = sand.u32 %s184, 1
          %s2614 = smul.addr %s2613, 2
          %s2615 = scalar_lea.vmem [#allocation3], %s2614
          %2616 = dma.done %s2612, 32
        $region60: #{tpu_custom_call.1} parent=55 // pred_fallthru
          _
      $region56: #{tpu_custom_call.1} parent=5 // pred_fallthru
        _
    $region6: #{tpu_custom_call.1} parent=1 // loop_footer
      %s22 = sadd.s32 1, %s18
    $region7: #{tpu_custom_call.1} parent=1 // loop_footer_branch
      %17 = sbr.rel target = $region3
    $region8: #{tpu_custom_call.1} parent=1 // loop_exit
      _
    %2617 = vsyncpa [#allocation4], 1
    %s2618 = scalar_lea.sflag [#allocation4], 1
    %2619 = vsyncpa %s2618, 1

</llo_original>
